<compile_context>
chip_gen: v6e
topology: v6e:2x2x1
jax: 0.10.0
libtpu: 0.0.40
codegen_flags: <defaults>
</compile_context>

<pallas_src>
import functools

import jax
import jax.numpy as jnp
from jax import lax
from jax.experimental import pallas as pl
from jax.experimental.pallas import tpu as pltpu

# ---- small, deterministic config (consistent with the module's shape roles) ----
VOCAB_SIZE = 64
MAXLEN = 8
BATCH = 4
THOUGHT_SIZE = 32   # Encoder.thought_size (1200 in the original, scaled down)
WORD_SIZE = 16      # Encoder.word_size   (620 in the original, scaled down)
LSTM_IN = THOUGHT_SIZE + WORD_SIZE


def _round_up(n, m):
    return (n + m - 1) // m * m


# --------------------------- fused Pallas kernel ------------------------------

def _duo_decoder_kernel(xp_ref, xn_ref,
                        wih_p_ref, whh_p_ref, b_p_ref,
                        wih_n_ref, whh_n_ref, b_n_ref,
                        ww_ref, wb_ref,
                        out_ref,
                        pg_p, pg_n, hs_p, hs_n,
                        *, T, Bp, H, V):
    """Fused prev-LSTM + next-LSTM + shared worder Linear.

    xp_ref/xn_ref: (T*Bp, Din) time-major flattened decoder inputs (row = t*Bp + b).
    out_ref:       (T*Bp, 2V)  [prev logits | next logits] per row (128-lane dense).
    Gate order follows PyTorch: i, f, g, o.
    """
    # ---- Phase 1: hoisted input->hidden matmuls for ALL time steps at once ----
    pg_p[...] = (jnp.dot(xp_ref[...], wih_p_ref[...],
                         preferred_element_type=jnp.float32) + b_p_ref[...])
    pg_n[...] = (jnp.dot(xn_ref[...], wih_n_ref[...],
                         preferred_element_type=jnp.float32) + b_n_ref[...])

    whh_p = whh_p_ref[...]
    whh_n = whh_n_ref[...]

    def lstm_step(pre_gates, h, c, whh):
        gates = pre_gates + jnp.dot(h, whh, preferred_element_type=jnp.float32)
        i = jax.nn.sigmoid(gates[:, 0 * H:1 * H])
        f = jax.nn.sigmoid(gates[:, 1 * H:2 * H])
        g = jnp.tanh(gates[:, 2 * H:3 * H])
        o = jax.nn.sigmoid(gates[:, 3 * H:4 * H])
        c_new = f * c + i * g
        h_new = o * jnp.tanh(c_new)
        return h_new, c_new

    # ---- Phase 2: the serial recurrence, fully unrolled inside the kernel ----
    def body(t, carry):
        h_p, c_p, h_n, c_n = carry
        rows = pl.ds(pl.multiple_of(t * Bp, Bp), Bp)
        h_p, c_p = lstm_step(pg_p[rows, :], h_p, c_p, whh_p)
        h_n, c_n = lstm_step(pg_n[rows, :], h_n, c_n, whh_n)
        hs_p[rows, :] = h_p
        hs_n[rows, :] = h_n
        return (h_p, c_p, h_n, c_n)

    zeros = jnp.zeros((Bp, H), jnp.float32)
    lax.fori_loop(0, T, body, (zeros, zeros, zeros, zeros), unroll=True)

    # ---- Phase 3: fused worder projection, 128-lane-dense output store ----
    ww = ww_ref[...]
    wb = wb_ref[...]
    out_ref[:, 0:V] = jnp.dot(hs_p[...], ww,
                              preferred_element_type=jnp.float32) + wb
    out_ref[:, V:2 * V] = jnp.dot(hs_n[...], ww,
                                  preferred_element_type=jnp.float32) + wb


def duo_decoder_pallas(prev_in, next_in, params):
    """prev_in/next_in: (T, Bm, Din) float32 decoder inputs (Bm = B - 1).

    Returns (prev_pred, next_pred), each (Bm, T, VOCAB_SIZE)."""
    T, Bm, Din = prev_in.shape
    H = WORD_SIZE
    V = VOCAB_SIZE
    Bp = _round_up(Bm, 8)   # sublane-align the decoder batch

    def prep_lstm(w_ih, w_hh, b_ih, b_hh):
        return (jnp.asarray(w_ih, jnp.float32).T,            # (Din, 4H)
                jnp.asarray(w_hh, jnp.float32).T,            # (H, 4H)
                (b_ih + b_hh).astype(jnp.float32)[None, :])  # (1, 4H)

    wih_p, whh_p, b_p = prep_lstm(*params["prev_lstm"])
    wih_n, whh_n, b_n = prep_lstm(*params["next_lstm"])
    w_w, w_b = params["worder"]
    ww = jnp.asarray(w_w, jnp.float32).T          # (H, V)
    wb = jnp.asarray(w_b, jnp.float32)[None, :]   # (1, V)

    def pad_flat(x):
        x = jnp.pad(x.astype(jnp.float32), ((0, 0), (0, Bp - Bm), (0, 0)))
        return x.reshape(T * Bp, Din)             # row = t*Bp + b

    xp = pad_flat(prev_in)
    xn = pad_flat(next_in)

    kernel = functools.partial(_duo_decoder_kernel, T=T, Bp=Bp, H=H, V=V)

    def full(shape):
        return pl.BlockSpec(shape, lambda i: (0,) * len(shape))

    out = pl.pallas_call(
        kernel,
        out_shape=jax.ShapeDtypeStruct((T * Bp, 2 * V), jnp.float32),
        grid_spec=pltpu.PrefetchScalarGridSpec(
            num_scalar_prefetch=0,
            grid=(1,),
            in_specs=[
                full((T * Bp, Din)), full((T * Bp, Din)),
                full((Din, 4 * H)), full((H, 4 * H)), full((1, 4 * H)),
                full((Din, 4 * H)), full((H, 4 * H)), full((1, 4 * H)),
                full((H, V)), full((1, V)),
            ],
            out_specs=full((T * Bp, 2 * V)),
            scratch_shapes=[
                pltpu.VMEM((T * Bp, 4 * H), jnp.float32),   # prev pre-gates
                pltpu.VMEM((T * Bp, 4 * H), jnp.float32),   # next pre-gates
                pltpu.VMEM((T * Bp, H), jnp.float32),       # prev hidden slab
                pltpu.VMEM((T * Bp, H), jnp.float32),       # next hidden slab
            ],
        ),
        compiler_params=pltpu.CompilerParams(
            dimension_semantics=("arbitrary",)),
    )(xp, xn, wih_p, whh_p, b_p, wih_n, whh_n, b_n, ww, wb)

    out = out.reshape(T, Bp, 2 * V)[:, :Bm, :]    # strip batch padding
    out = jnp.transpose(out, (1, 0, 2))           # (Bm, T, 2V)
    return out[..., :V], out[..., V:]


# --------------------------- DuoDecoder forward ------------------------------

def duo_decoder_forward(thoughts, word_embeddings, params):
    """thoughts: (B, THOUGHT); word_embeddings: (MAXLEN, B, WORD).

    Returns (prev_pred, next_pred), each (B-1, MAXLEN, VOCAB_SIZE)."""
    T = word_embeddings.shape[0]
    B = thoughts.shape[0]

    # thoughts.repeat(MAXLEN, 1, 1) -> (T, B, THOUGHT)
    th = jnp.broadcast_to(thoughts[None, :, :], (T, B, thoughts.shape[1]))
    prev_thoughts = th[:, :-1, :]
    next_thoughts = th[:, 1:, :]
    prev_we = word_embeddings[:, :-1, :]
    next_we = word_embeddings[:, 1:, :]

    # delay by one time step along dim 0 (zero-padded at t=0)
    delayed_prev = jnp.concatenate(
        [jnp.zeros_like(prev_we[-1:, :, :]), prev_we[:-1, :, :]], axis=0)
    delayed_next = jnp.concatenate(
        [jnp.zeros_like(next_we[-1:, :, :]), next_we[:-1, :, :]], axis=0)

    prev_in = jnp.concatenate([next_thoughts, delayed_prev], axis=2)  # (T, B-1, 48)
    next_in = jnp.concatenate([prev_thoughts, delayed_next], axis=2)

    return duo_decoder_pallas(prev_in, next_in, params)


# --------------------------- pure-JAX reference ------------------------------

def _lstm_ref(x, w_ih, w_hh, b_ih, b_hh):
    T, B, _ = x.shape
    H = w_hh.shape[1]

    def step(carry, xt):
        h, c = carry
        gates = xt @ w_ih.T + h @ w_hh.T + b_ih + b_hh
        i, f, g, o = jnp.split(gates, 4, axis=-1)
        i, f, o = jax.nn.sigmoid(i), jax.nn.sigmoid(f), jax.nn.sigmoid(o)
        g = jnp.tanh(g)
        c = f * c + i * g
        h = o * jnp.tanh(c)
        return (h, c), h

    init = (jnp.zeros((B, H), jnp.float32), jnp.zeros((B, H), jnp.float32))
    _, hs = jax.lax.scan(step, init, x)
    return hs


def duo_decoder_ref(thoughts, word_embeddings, params):
    T, B = MAXLEN, thoughts.shape[0]
    th = jnp.broadcast_to(thoughts[None, :, :], (T, B, THOUGHT_SIZE))
    prev_in = jnp.concatenate(
        [th[:, 1:, :],
         jnp.concatenate([jnp.zeros_like(word_embeddings[-1:, :-1, :]),
                          word_embeddings[:-1, :-1, :]], axis=0)], axis=2)
    next_in = jnp.concatenate(
        [th[:, :-1, :],
         jnp.concatenate([jnp.zeros_like(word_embeddings[-1:, 1:, :]),
                          word_embeddings[:-1, 1:, :]], axis=0)], axis=2)
    prev_h = _lstm_ref(prev_in, *params["prev_lstm"])
    next_h = _lstm_ref(next_in, *params["next_lstm"])
    w_w, w_b = params["worder"]
    prev_pred = prev_h @ w_w.T + w_b
    next_pred = next_h @ w_w.T + w_b
    return (jnp.transpose(prev_pred, (1, 0, 2)),
            jnp.transpose(next_pred, (1, 0, 2)))


# ------------------------------- main ----------------------------------------

def _init_params(key):
    ks = jax.random.split(key, 10)
    scale = 0.1
    H, Din, V = WORD_SIZE, LSTM_IN, VOCAB_SIZE

    def lstm_params(k0, k1, k2, k3):
        return (scale * jax.random.normal(k0, (4 * H, Din), jnp.float32),
                scale * jax.random.normal(k1, (4 * H, H), jnp.float32),
                scale * jax.random.normal(k2, (4 * H,), jnp.float32),
                scale * jax.random.normal(k3, (4 * H,), jnp.float32))

    return {
        "prev_lstm": lstm_params(ks[0], ks[1], ks[2], ks[3]),
        "next_lstm": lstm_params(ks[4], ks[5], ks[6], ks[7]),
        "worder": (scale * jax.random.normal(ks[8], (V, H), jnp.float32),
                   scale * jax.random.normal(ks[9], (V,), jnp.float32)),
    }


if __name__ == "__main__":
    key = jax.random.PRNGKey(0)
    k_th, k_we, k_p = jax.random.split(key, 3)

    # Encoder outputs: thoughts (B, THOUGHT), word_embeddings (MAXLEN, B, WORD)
    thoughts = jax.random.normal(k_th, (BATCH, THOUGHT_SIZE), jnp.float32)
    word_embeddings = jnp.tanh(
        jax.random.normal(k_we, (MAXLEN, BATCH, WORD_SIZE), jnp.float32))
    params = _init_params(k_p)

    fwd = jax.jit(duo_decoder_forward)
    prev_pred, next_pred = jax.block_until_ready(
        fwd(thoughts, word_embeddings, params))

    # correctness check against a pure-JAX reference
    prev_ref, next_ref = duo_decoder_ref(thoughts, word_embeddings, params)
    assert prev_pred.shape == (BATCH - 1, MAXLEN, VOCAB_SIZE)
    assert next_pred.shape == (BATCH - 1, MAXLEN, VOCAB_SIZE)
    assert jnp.allclose(prev_pred, prev_ref, atol=1e-4, rtol=1e-4)
    assert jnp.allclose(next_pred, next_ref, atol=1e-4, rtol=1e-4)

    print("KERNEL_OK")
</pallas_src>

<mosaic_0001>
module attributes {stable_mosaic.version = 11 : i64} {
  func.func @_duo_decoder_kernel(%arg0: i32, %arg1: memref<64x48xf32, #tpu.memory_space<vmem>>, %arg2: memref<64x48xf32, #tpu.memory_space<vmem>>, %arg3: memref<48x64xf32, #tpu.memory_space<vmem>>, %arg4: memref<16x64xf32, #tpu.memory_space<vmem>>, %arg5: memref<1x64xf32, #tpu.memory_space<vmem>>, %arg6: memref<48x64xf32, #tpu.memory_space<vmem>>, %arg7: memref<16x64xf32, #tpu.memory_space<vmem>>, %arg8: memref<1x64xf32, #tpu.memory_space<vmem>>, %arg9: memref<16x64xf32, #tpu.memory_space<vmem>>, %arg10: memref<1x64xf32, #tpu.memory_space<vmem>>, %arg11: memref<64x128xf32, #tpu.memory_space<vmem>>, %arg12: memref<64x64xf32, #tpu.memory_space<vmem>>, %arg13: memref<64x64xf32, #tpu.memory_space<vmem>>, %arg14: memref<64x16xf32, #tpu.memory_space<vmem>>, %arg15: memref<64x16xf32, #tpu.memory_space<vmem>>) attributes {dimension_semantics = [#tpu.dimension_semantics<arbitrary>], iteration_bounds = array<i64: 1>, scalar_prefetch = 0 : i64, scratch_operands = 4 : i64, tpu.core_type = #tpu.core_type<tc>, window_params = [{pipeline_mode = #tpu.pipeline_mode<synchronous>, transform_indices = @transform_0, window_bounds = array<i64: 64, 48>}, {pipeline_mode = #tpu.pipeline_mode<synchronous>, transform_indices = @transform_1, window_bounds = array<i64: 64, 48>}, {pipeline_mode = #tpu.pipeline_mode<synchronous>, transform_indices = @transform_2, window_bounds = array<i64: 48, 64>}, {pipeline_mode = #tpu.pipeline_mode<synchronous>, transform_indices = @transform_3, window_bounds = array<i64: 16, 64>}, {pipeline_mode = #tpu.pipeline_mode<synchronous>, transform_indices = @transform_4, window_bounds = array<i64: 1, 64>}, {pipeline_mode = #tpu.pipeline_mode<synchronous>, transform_indices = @transform_5, window_bounds = array<i64: 48, 64>}, {pipeline_mode = #tpu.pipeline_mode<synchronous>, transform_indices = @transform_6, window_bounds = array<i64: 16, 64>}, {pipeline_mode = #tpu.pipeline_mode<synchronous>, transform_indices = @transform_7, window_bounds = array<i64: 1, 64>}, {pipeline_mode = #tpu.pipeline_mode<synchronous>, transform_indices = @transform_8, window_bounds = array<i64: 16, 64>}, {pipeline_mode = #tpu.pipeline_mode<synchronous>, transform_indices = @transform_9, window_bounds = array<i64: 1, 64>}, {pipeline_mode = #tpu.pipeline_mode<synchronous>, transform_indices = @transform_10, window_bounds = array<i64: 64, 128>}]} {
    %c0 = arith.constant 0 : index
    %c0_0 = arith.constant 0 : index
    %0 = vector.load %arg1[%c0, %c0_0] : memref<64x48xf32, #tpu.memory_space<vmem>>, vector<64x48xf32>
    %c0_1 = arith.constant 0 : index
    %c0_2 = arith.constant 0 : index
    %1 = vector.load %arg3[%c0_1, %c0_2] : memref<48x64xf32, #tpu.memory_space<vmem>>, vector<48x64xf32>
    %cst = arith.constant dense<0.000000e+00> : vector<64x64xf32>
    %2 = tpu.matmul %0, %1, %cst {dimension_numbers = #tpu.dot_dimension_numbers<[1], [0], [0], [1], [0, 0, 1, 1], [], []>} : vector<64x48xf32>, vector<48x64xf32>, vector<64x64xf32> -> vector<64x64xf32>
    %c0_3 = arith.constant 0 : index
    %c0_4 = arith.constant 0 : index
    %3 = vector.load %arg5[%c0_3, %c0_4] : memref<1x64xf32, #tpu.memory_space<vmem>>, vector<1x64xf32>
    %4 = vector.broadcast %3 : vector<1x64xf32> to vector<64x64xf32>
    %5 = arith.addf %2, %4 : vector<64x64xf32>
    %c0_5 = arith.constant 0 : index
    %c0_6 = arith.constant 0 : index
    %6 = vector.load %arg12[%c0_5, %c0_6] : memref<64x64xf32, #tpu.memory_space<vmem>>, vector<64x64xf32>
    tpu.vector_store %arg12[%c0_5, %c0_6], %5 {strides = array<i32>} : memref<64x64xf32, #tpu.memory_space<vmem>>, vector<64x64xf32>,
    %c0_7 = arith.constant 0 : index
    %c0_8 = arith.constant 0 : index
    %7 = vector.load %arg2[%c0_7, %c0_8] : memref<64x48xf32, #tpu.memory_space<vmem>>, vector<64x48xf32>
    %c0_9 = arith.constant 0 : index
    %c0_10 = arith.constant 0 : index
    %8 = vector.load %arg6[%c0_9, %c0_10] : memref<48x64xf32, #tpu.memory_space<vmem>>, vector<48x64xf32>
    %cst_11 = arith.constant dense<0.000000e+00> : vector<64x64xf32>
    %9 = tpu.matmul %7, %8, %cst_11 {dimension_numbers = #tpu.dot_dimension_numbers<[1], [0], [0], [1], [0, 0, 1, 1], [], []>} : vector<64x48xf32>, vector<48x64xf32>, vector<64x64xf32> -> vector<64x64xf32>
    %c0_12 = arith.constant 0 : index
    %c0_13 = arith.constant 0 : index
    %10 = vector.load %arg8[%c0_12, %c0_13] : memref<1x64xf32, #tpu.memory_space<vmem>>, vector<1x64xf32>
    %11 = vector.broadcast %10 : vector<1x64xf32> to vector<64x64xf32>
    %12 = arith.addf %9, %11 : vector<64x64xf32>
    %c0_14 = arith.constant 0 : index
    %c0_15 = arith.constant 0 : index
    %13 = vector.load %arg13[%c0_14, %c0_15] : memref<64x64xf32, #tpu.memory_space<vmem>>, vector<64x64xf32>
    tpu.vector_store %arg13[%c0_14, %c0_15], %12 {strides = array<i32>} : memref<64x64xf32, #tpu.memory_space<vmem>>, vector<64x64xf32>,
    %c0_16 = arith.constant 0 : index
    %c0_17 = arith.constant 0 : index
    %14 = vector.load %arg4[%c0_16, %c0_17] : memref<16x64xf32, #tpu.memory_space<vmem>>, vector<16x64xf32>
    %c0_18 = arith.constant 0 : index
    %c0_19 = arith.constant 0 : index
    %15 = vector.load %arg7[%c0_18, %c0_19] : memref<16x64xf32, #tpu.memory_space<vmem>>, vector<16x64xf32>
    %cst_20 = arith.constant 0.000000e+00 : f32
    %16 = vector.broadcast %cst_20 : f32 to vector<8x16xf32>
    %c0_i32 = arith.constant 0 : i32
    %c8_i32 = arith.constant 8 : i32
    %17 = arith.muli %c0_i32, %c8_i32 : i32
    %18 = tpu.assume_multiple %17, 8 : i32
    %19 = arith.index_cast %18 : i32 to index
    %c0_21 = arith.constant 0 : index
    %20 = vector.load %arg12[%19, %c0_21] : memref<64x64xf32, #tpu.memory_space<vmem>>, vector<8x64xf32>
    %cst_22 = arith.constant dense<0.000000e+00> : vector<8x64xf32>
    %21 = tpu.matmul %16, %14, %cst_22 {dimension_numbers = #tpu.dot_dimension_numbers<[1], [0], [0], [1], [0, 0, 1, 1], [], []>} : vector<8x16xf32>, vector<16x64xf32>, vector<8x64xf32> -> vector<8x64xf32>
    %22 = arith.addf %20, %21 : vector<8x64xf32>
    %23 = vector.extract_strided_slice %22 {offsets = [0, 0], sizes = [8, 16], strides = [1, 1]} : vector<8x64xf32> to vector<8x16xf32>
    %24 = arith.negf %23 : vector<8x16xf32>
    %25 = math.exp %24 : vector<8x16xf32>
    %cst_23 = arith.constant 1.000000e+00 : f32
    %26 = vector.broadcast %cst_23 : f32 to vector<8x16xf32>
    %27 = arith.addf %26, %25 : vector<8x16xf32>
    %28 = arith.divf %26, %27 : vector<8x16xf32>
    %29 = vector.extract_strided_slice %22 {offsets = [0, 16], sizes = [8, 16], strides = [1, 1]} : vector<8x64xf32> to vector<8x16xf32>
    %30 = arith.negf %29 : vector<8x16xf32>
    %31 = math.exp %30 : vector<8x16xf32>
    %cst_24 = arith.constant 1.000000e+00 : f32
    %32 = vector.broadcast %cst_24 : f32 to vector<8x16xf32>
    %33 = arith.addf %32, %31 : vector<8x16xf32>
    %34 = arith.divf %32, %33 : vector<8x16xf32>
    %35 = vector.extract_strided_slice %22 {offsets = [0, 32], sizes = [8, 16], strides = [1, 1]} : vector<8x64xf32> to vector<8x16xf32>
    %36 = math.tanh %35 : vector<8x16xf32>
    %37 = vector.extract_strided_slice %22 {offsets = [0, 48], sizes = [8, 16], strides = [1, 1]} : vector<8x64xf32> to vector<8x16xf32>
    %38 = arith.negf %37 : vector<8x16xf32>
    %39 = math.exp %38 : vector<8x16xf32>
    %cst_25 = arith.constant 1.000000e+00 : f32
    %40 = vector.broadcast %cst_25 : f32 to vector<8x16xf32>
    %41 = arith.addf %40, %39 : vector<8x16xf32>
    %42 = arith.divf %40, %41 : vector<8x16xf32>
    %43 = arith.mulf %34, %16 : vector<8x16xf32>
    %44 = arith.mulf %28, %36 : vector<8x16xf32>
    %45 = arith.addf %43, %44 : vector<8x16xf32>
    %46 = math.tanh %45 : vector<8x16xf32>
    %47 = arith.mulf %42, %46 : vector<8x16xf32>
    %48 = arith.index_cast %18 : i32 to index
    %c0_26 = arith.constant 0 : index
    %49 = vector.load %arg13[%48, %c0_26] : memref<64x64xf32, #tpu.memory_space<vmem>>, vector<8x64xf32>
    %cst_27 = arith.constant dense<0.000000e+00> : vector<8x64xf32>
    %50 = tpu.matmul %16, %15, %cst_27 {dimension_numbers = #tpu.dot_dimension_numbers<[1], [0], [0], [1], [0, 0, 1, 1], [], []>} : vector<8x16xf32>, vector<16x64xf32>, vector<8x64xf32> -> vector<8x64xf32>
    %51 = arith.addf %49, %50 : vector<8x64xf32>
    %52 = vector.extract_strided_slice %51 {offsets = [0, 0], sizes = [8, 16], strides = [1, 1]} : vector<8x64xf32> to vector<8x16xf32>
    %53 = arith.negf %52 : vector<8x16xf32>
    %54 = math.exp %53 : vector<8x16xf32>
    %cst_28 = arith.constant 1.000000e+00 : f32
    %55 = vector.broadcast %cst_28 : f32 to vector<8x16xf32>
    %56 = arith.addf %55, %54 : vector<8x16xf32>
    %57 = arith.divf %55, %56 : vector<8x16xf32>
    %58 = vector.extract_strided_slice %51 {offsets = [0, 16], sizes = [8, 16], strides = [1, 1]} : vector<8x64xf32> to vector<8x16xf32>
    %59 = arith.negf %58 : vector<8x16xf32>
    %60 = math.exp %59 : vector<8x16xf32>
    %cst_29 = arith.constant 1.000000e+00 : f32
    %61 = vector.broadcast %cst_29 : f32 to vector<8x16xf32>
    %62 = arith.addf %61, %60 : vector<8x16xf32>
    %63 = arith.divf %61, %62 : vector<8x16xf32>
    %64 = vector.extract_strided_slice %51 {offsets = [0, 32], sizes = [8, 16], strides = [1, 1]} : vector<8x64xf32> to vector<8x16xf32>
    %65 = math.tanh %64 : vector<8x16xf32>
    %66 = vector.extract_strided_slice %51 {offsets = [0, 48], sizes = [8, 16], strides = [1, 1]} : vector<8x64xf32> to vector<8x16xf32>
    %67 = arith.negf %66 : vector<8x16xf32>
    %68 = math.exp %67 : vector<8x16xf32>
    %cst_30 = arith.constant 1.000000e+00 : f32
    %69 = vector.broadcast %cst_30 : f32 to vector<8x16xf32>
    %70 = arith.addf %69, %68 : vector<8x16xf32>
    %71 = arith.divf %69, %70 : vector<8x16xf32>
    %72 = arith.mulf %63, %16 : vector<8x16xf32>
    %73 = arith.mulf %57, %65 : vector<8x16xf32>
    %74 = arith.addf %72, %73 : vector<8x16xf32>
    %75 = math.tanh %74 : vector<8x16xf32>
    %76 = arith.mulf %71, %75 : vector<8x16xf32>
    %77 = arith.index_cast %18 : i32 to index
    %c0_31 = arith.constant 0 : index
    %78 = vector.load %arg14[%77, %c0_31] : memref<64x16xf32, #tpu.memory_space<vmem>>, vector<8x16xf32>
    tpu.vector_store %arg14[%77, %c0_31], %47 {strides = array<i32>} : memref<64x16xf32, #tpu.memory_space<vmem>>, vector<8x16xf32>,
    %79 = arith.index_cast %18 : i32 to index
    %c0_32 = arith.constant 0 : index
    %80 = vector.load %arg15[%79, %c0_32] : memref<64x16xf32, #tpu.memory_space<vmem>>, vector<8x16xf32>
    tpu.vector_store %arg15[%79, %c0_32], %76 {strides = array<i32>} : memref<64x16xf32, #tpu.memory_space<vmem>>, vector<8x16xf32>,
    %c1_i32 = arith.constant 1 : i32
    %c8_i32_33 = arith.constant 8 : i32
    %81 = arith.muli %c1_i32, %c8_i32_33 : i32
    %82 = tpu.assume_multiple %81, 8 : i32
    %83 = arith.index_cast %82 : i32 to index
    %c0_34 = arith.constant 0 : index
    %84 = vector.load %arg12[%83, %c0_34] : memref<64x64xf32, #tpu.memory_space<vmem>>, vector<8x64xf32>
    %cst_35 = arith.constant dense<0.000000e+00> : vector<8x64xf32>
    %85 = tpu.matmul %47, %14, %cst_35 {dimension_numbers = #tpu.dot_dimension_numbers<[1], [0], [0], [1], [0, 0, 1, 1], [], []>} : vector<8x16xf32>, vector<16x64xf32>, vector<8x64xf32> -> vector<8x64xf32>
    %86 = arith.addf %84, %85 : vector<8x64xf32>
    %87 = vector.extract_strided_slice %86 {offsets = [0, 0], sizes = [8, 16], strides = [1, 1]} : vector<8x64xf32> to vector<8x16xf32>
    %88 = arith.negf %87 : vector<8x16xf32>
    %89 = math.exp %88 : vector<8x16xf32>
    %cst_36 = arith.constant 1.000000e+00 : f32
    %90 = vector.broadcast %cst_36 : f32 to vector<8x16xf32>
    %91 = arith.addf %90, %89 : vector<8x16xf32>
    %92 = arith.divf %90, %91 : vector<8x16xf32>
    %93 = vector.extract_strided_slice %86 {offsets = [0, 16], sizes = [8, 16], strides = [1, 1]} : vector<8x64xf32> to vector<8x16xf32>
    %94 = arith.negf %93 : vector<8x16xf32>
    %95 = math.exp %94 : vector<8x16xf32>
    %cst_37 = arith.constant 1.000000e+00 : f32
    %96 = vector.broadcast %cst_37 : f32 to vector<8x16xf32>
    %97 = arith.addf %96, %95 : vector<8x16xf32>
    %98 = arith.divf %96, %97 : vector<8x16xf32>
    %99 = vector.extract_strided_slice %86 {offsets = [0, 32], sizes = [8, 16], strides = [1, 1]} : vector<8x64xf32> to vector<8x16xf32>
    %100 = math.tanh %99 : vector<8x16xf32>
    %101 = vector.extract_strided_slice %86 {offsets = [0, 48], sizes = [8, 16], strides = [1, 1]} : vector<8x64xf32> to vector<8x16xf32>
    %102 = arith.negf %101 : vector<8x16xf32>
    %103 = math.exp %102 : vector<8x16xf32>
    %cst_38 = arith.constant 1.000000e+00 : f32
    %104 = vector.broadcast %cst_38 : f32 to vector<8x16xf32>
    %105 = arith.addf %104, %103 : vector<8x16xf32>
    %106 = arith.divf %104, %105 : vector<8x16xf32>
    %107 = arith.mulf %98, %45 : vector<8x16xf32>
    %108 = arith.mulf %92, %100 : vector<8x16xf32>
    %109 = arith.addf %107, %108 : vector<8x16xf32>
    %110 = math.tanh %109 : vector<8x16xf32>
    %111 = arith.mulf %106, %110 : vector<8x16xf32>
    %112 = arith.index_cast %82 : i32 to index
    %c0_39 = arith.constant 0 : index
    %113 = vector.load %arg13[%112, %c0_39] : memref<64x64xf32, #tpu.memory_space<vmem>>, vector<8x64xf32>
    %cst_40 = arith.constant dense<0.000000e+00> : vector<8x64xf32>
    %114 = tpu.matmul %76, %15, %cst_40 {dimension_numbers = #tpu.dot_dimension_numbers<[1], [0], [0], [1], [0, 0, 1, 1], [], []>} : vector<8x16xf32>, vector<16x64xf32>, vector<8x64xf32> -> vector<8x64xf32>
    %115 = arith.addf %113, %114 : vector<8x64xf32>
    %116 = vector.extract_strided_slice %115 {offsets = [0, 0], sizes = [8, 16], strides = [1, 1]} : vector<8x64xf32> to vector<8x16xf32>
    %117 = arith.negf %116 : vector<8x16xf32>
    %118 = math.exp %117 : vector<8x16xf32>
    %cst_41 = arith.constant 1.000000e+00 : f32
    %119 = vector.broadcast %cst_41 : f32 to vector<8x16xf32>
    %120 = arith.addf %119, %118 : vector<8x16xf32>
    %121 = arith.divf %119, %120 : vector<8x16xf32>
    %122 = vector.extract_strided_slice %115 {offsets = [0, 16], sizes = [8, 16], strides = [1, 1]} : vector<8x64xf32> to vector<8x16xf32>
    %123 = arith.negf %122 : vector<8x16xf32>
    %124 = math.exp %123 : vector<8x16xf32>
    %cst_42 = arith.constant 1.000000e+00 : f32
    %125 = vector.broadcast %cst_42 : f32 to vector<8x16xf32>
    %126 = arith.addf %125, %124 : vector<8x16xf32>
    %127 = arith.divf %125, %126 : vector<8x16xf32>
    %128 = vector.extract_strided_slice %115 {offsets = [0, 32], sizes = [8, 16], strides = [1, 1]} : vector<8x64xf32> to vector<8x16xf32>
    %129 = math.tanh %128 : vector<8x16xf32>
    %130 = vector.extract_strided_slice %115 {offsets = [0, 48], sizes = [8, 16], strides = [1, 1]} : vector<8x64xf32> to vector<8x16xf32>
    %131 = arith.negf %130 : vector<8x16xf32>
    %132 = math.exp %131 : vector<8x16xf32>
    %cst_43 = arith.constant 1.000000e+00 : f32
    %133 = vector.broadcast %cst_43 : f32 to vector<8x16xf32>
    %134 = arith.addf %133, %132 : vector<8x16xf32>
    %135 = arith.divf %133, %134 : vector<8x16xf32>
    %136 = arith.mulf %127, %74 : vector<8x16xf32>
    %137 = arith.mulf %121, %129 : vector<8x16xf32>
    %138 = arith.addf %136, %137 : vector<8x16xf32>
    %139 = math.tanh %138 : vector<8x16xf32>
    %140 = arith.mulf %135, %139 : vector<8x16xf32>
    %141 = arith.index_cast %82 : i32 to index
    %c0_44 = arith.constant 0 : index
    %142 = vector.load %arg14[%141, %c0_44] : memref<64x16xf32, #tpu.memory_space<vmem>>, vector<8x16xf32>
    tpu.vector_store %arg14[%141, %c0_44], %111 {strides = array<i32>} : memref<64x16xf32, #tpu.memory_space<vmem>>, vector<8x16xf32>,
    %143 = arith.index_cast %82 : i32 to index
    %c0_45 = arith.constant 0 : index
    %144 = vector.load %arg15[%143, %c0_45] : memref<64x16xf32, #tpu.memory_space<vmem>>, vector<8x16xf32>
    tpu.vector_store %arg15[%143, %c0_45], %140 {strides = array<i32>} : memref<64x16xf32, #tpu.memory_space<vmem>>, vector<8x16xf32>,
    %c2_i32 = arith.constant 2 : i32
    %c8_i32_46 = arith.constant 8 : i32
    %145 = arith.muli %c2_i32, %c8_i32_46 : i32
    %146 = tpu.assume_multiple %145, 8 : i32
    %147 = arith.index_cast %146 : i32 to index
    %c0_47 = arith.constant 0 : index
    %148 = vector.load %arg12[%147, %c0_47] : memref<64x64xf32, #tpu.memory_space<vmem>>, vector<8x64xf32>
    %cst_48 = arith.constant dense<0.000000e+00> : vector<8x64xf32>
    %149 = tpu.matmul %111, %14, %cst_48 {dimension_numbers = #tpu.dot_dimension_numbers<[1], [0], [0], [1], [0, 0, 1, 1], [], []>} : vector<8x16xf32>, vector<16x64xf32>, vector<8x64xf32> -> vector<8x64xf32>
    %150 = arith.addf %148, %149 : vector<8x64xf32>
    %151 = vector.extract_strided_slice %150 {offsets = [0, 0], sizes = [8, 16], strides = [1, 1]} : vector<8x64xf32> to vector<8x16xf32>
    %152 = arith.negf %151 : vector<8x16xf32>
    %153 = math.exp %152 : vector<8x16xf32>
    %cst_49 = arith.constant 1.000000e+00 : f32
    %154 = vector.broadcast %cst_49 : f32 to vector<8x16xf32>
    %155 = arith.addf %154, %153 : vector<8x16xf32>
    %156 = arith.divf %154, %155 : vector<8x16xf32>
    %157 = vector.extract_strided_slice %150 {offsets = [0, 16], sizes = [8, 16], strides = [1, 1]} : vector<8x64xf32> to vector<8x16xf32>
    %158 = arith.negf %157 : vector<8x16xf32>
    %159 = math.exp %158 : vector<8x16xf32>
    %cst_50 = arith.constant 1.000000e+00 : f32
    %160 = vector.broadcast %cst_50 : f32 to vector<8x16xf32>
    %161 = arith.addf %160, %159 : vector<8x16xf32>
    %162 = arith.divf %160, %161 : vector<8x16xf32>
    %163 = vector.extract_strided_slice %150 {offsets = [0, 32], sizes = [8, 16], strides = [1, 1]} : vector<8x64xf32> to vector<8x16xf32>
    %164 = math.tanh %163 : vector<8x16xf32>
    %165 = vector.extract_strided_slice %150 {offsets = [0, 48], sizes = [8, 16], strides = [1, 1]} : vector<8x64xf32> to vector<8x16xf32>
    %166 = arith.negf %165 : vector<8x16xf32>
    %167 = math.exp %166 : vector<8x16xf32>
    %cst_51 = arith.constant 1.000000e+00 : f32
    %168 = vector.broadcast %cst_51 : f32 to vector<8x16xf32>
    %169 = arith.addf %168, %167 : vector<8x16xf32>
    %170 = arith.divf %168, %169 : vector<8x16xf32>
    %171 = arith.mulf %162, %109 : vector<8x16xf32>
    %172 = arith.mulf %156, %164 : vector<8x16xf32>
    %173 = arith.addf %171, %172 : vector<8x16xf32>
    %174 = math.tanh %173 : vector<8x16xf32>
    %175 = arith.mulf %170, %174 : vector<8x16xf32>
    %176 = arith.index_cast %146 : i32 to index
    %c0_52 = arith.constant 0 : index
    %177 = vector.load %arg13[%176, %c0_52] : memref<64x64xf32, #tpu.memory_space<vmem>>, vector<8x64xf32>
    %cst_53 = arith.constant dense<0.000000e+00> : vector<8x64xf32>
    %178 = tpu.matmul %140, %15, %cst_53 {dimension_numbers = #tpu.dot_dimension_numbers<[1], [0], [0], [1], [0, 0, 1, 1], [], []>} : vector<8x16xf32>, vector<16x64xf32>, vector<8x64xf32> -> vector<8x64xf32>
    %179 = arith.addf %177, %178 : vector<8x64xf32>
    %180 = vector.extract_strided_slice %179 {offsets = [0, 0], sizes = [8, 16], strides = [1, 1]} : vector<8x64xf32> to vector<8x16xf32>
    %181 = arith.negf %180 : vector<8x16xf32>
    %182 = math.exp %181 : vector<8x16xf32>
    %cst_54 = arith.constant 1.000000e+00 : f32
    %183 = vector.broadcast %cst_54 : f32 to vector<8x16xf32>
    %184 = arith.addf %183, %182 : vector<8x16xf32>
    %185 = arith.divf %183, %184 : vector<8x16xf32>
    %186 = vector.extract_strided_slice %179 {offsets = [0, 16], sizes = [8, 16], strides = [1, 1]} : vector<8x64xf32> to vector<8x16xf32>
    %187 = arith.negf %186 : vector<8x16xf32>
    %188 = math.exp %187 : vector<8x16xf32>
    %cst_55 = arith.constant 1.000000e+00 : f32
    %189 = vector.broadcast %cst_55 : f32 to vector<8x16xf32>
    %190 = arith.addf %189, %188 : vector<8x16xf32>
    %191 = arith.divf %189, %190 : vector<8x16xf32>
    %192 = vector.extract_strided_slice %179 {offsets = [0, 32], sizes = [8, 16], strides = [1, 1]} : vector<8x64xf32> to vector<8x16xf32>
    %193 = math.tanh %192 : vector<8x16xf32>
    %194 = vector.extract_strided_slice %179 {offsets = [0, 48], sizes = [8, 16], strides = [1, 1]} : vector<8x64xf32> to vector<8x16xf32>
    %195 = arith.negf %194 : vector<8x16xf32>
    %196 = math.exp %195 : vector<8x16xf32>
    %cst_56 = arith.constant 1.000000e+00 : f32
    %197 = vector.broadcast %cst_56 : f32 to vector<8x16xf32>
    %198 = arith.addf %197, %196 : vector<8x16xf32>
    %199 = arith.divf %197, %198 : vector<8x16xf32>
    %200 = arith.mulf %191, %138 : vector<8x16xf32>
    %201 = arith.mulf %185, %193 : vector<8x16xf32>
    %202 = arith.addf %200, %201 : vector<8x16xf32>
    %203 = math.tanh %202 : vector<8x16xf32>
    %204 = arith.mulf %199, %203 : vector<8x16xf32>
    %205 = arith.index_cast %146 : i32 to index
    %c0_57 = arith.constant 0 : index
    %206 = vector.load %arg14[%205, %c0_57] : memref<64x16xf32, #tpu.memory_space<vmem>>, vector<8x16xf32>
    tpu.vector_store %arg14[%205, %c0_57], %175 {strides = array<i32>} : memref<64x16xf32, #tpu.memory_space<vmem>>, vector<8x16xf32>,
    %207 = arith.index_cast %146 : i32 to index
    %c0_58 = arith.constant 0 : index
    %208 = vector.load %arg15[%207, %c0_58] : memref<64x16xf32, #tpu.memory_space<vmem>>, vector<8x16xf32>
    tpu.vector_store %arg15[%207, %c0_58], %204 {strides = array<i32>} : memref<64x16xf32, #tpu.memory_space<vmem>>, vector<8x16xf32>,
    %c3_i32 = arith.constant 3 : i32
    %c8_i32_59 = arith.constant 8 : i32
    %209 = arith.muli %c3_i32, %c8_i32_59 : i32
    %210 = tpu.assume_multiple %209, 8 : i32
    %211 = arith.index_cast %210 : i32 to index
    %c0_60 = arith.constant 0 : index
    %212 = vector.load %arg12[%211, %c0_60] : memref<64x64xf32, #tpu.memory_space<vmem>>, vector<8x64xf32>
    %cst_61 = arith.constant dense<0.000000e+00> : vector<8x64xf32>
    %213 = tpu.matmul %175, %14, %cst_61 {dimension_numbers = #tpu.dot_dimension_numbers<[1], [0], [0], [1], [0, 0, 1, 1], [], []>} : vector<8x16xf32>, vector<16x64xf32>, vector<8x64xf32> -> vector<8x64xf32>
    %214 = arith.addf %212, %213 : vector<8x64xf32>
    %215 = vector.extract_strided_slice %214 {offsets = [0, 0], sizes = [8, 16], strides = [1, 1]} : vector<8x64xf32> to vector<8x16xf32>
    %216 = arith.negf %215 : vector<8x16xf32>
    %217 = math.exp %216 : vector<8x16xf32>
    %cst_62 = arith.constant 1.000000e+00 : f32
    %218 = vector.broadcast %cst_62 : f32 to vector<8x16xf32>
    %219 = arith.addf %218, %217 : vector<8x16xf32>
    %220 = arith.divf %218, %219 : vector<8x16xf32>
    %221 = vector.extract_strided_slice %214 {offsets = [0, 16], sizes = [8, 16], strides = [1, 1]} : vector<8x64xf32> to vector<8x16xf32>
    %222 = arith.negf %221 : vector<8x16xf32>
    %223 = math.exp %222 : vector<8x16xf32>
    %cst_63 = arith.constant 1.000000e+00 : f32
    %224 = vector.broadcast %cst_63 : f32 to vector<8x16xf32>
    %225 = arith.addf %224, %223 : vector<8x16xf32>
    %226 = arith.divf %224, %225 : vector<8x16xf32>
    %227 = vector.extract_strided_slice %214 {offsets = [0, 32], sizes = [8, 16], strides = [1, 1]} : vector<8x64xf32> to vector<8x16xf32>
    %228 = math.tanh %227 : vector<8x16xf32>
    %229 = vector.extract_strided_slice %214 {offsets = [0, 48], sizes = [8, 16], strides = [1, 1]} : vector<8x64xf32> to vector<8x16xf32>
    %230 = arith.negf %229 : vector<8x16xf32>
    %231 = math.exp %230 : vector<8x16xf32>
    %cst_64 = arith.constant 1.000000e+00 : f32
    %232 = vector.broadcast %cst_64 : f32 to vector<8x16xf32>
    %233 = arith.addf %232, %231 : vector<8x16xf32>
    %234 = arith.divf %232, %233 : vector<8x16xf32>
    %235 = arith.mulf %226, %173 : vector<8x16xf32>
    %236 = arith.mulf %220, %228 : vector<8x16xf32>
    %237 = arith.addf %235, %236 : vector<8x16xf32>
    %238 = math.tanh %237 : vector<8x16xf32>
    %239 = arith.mulf %234, %238 : vector<8x16xf32>
    %240 = arith.index_cast %210 : i32 to index
    %c0_65 = arith.constant 0 : index
    %241 = vector.load %arg13[%240, %c0_65] : memref<64x64xf32, #tpu.memory_space<vmem>>, vector<8x64xf32>
    %cst_66 = arith.constant dense<0.000000e+00> : vector<8x64xf32>
    %242 = tpu.matmul %204, %15, %cst_66 {dimension_numbers = #tpu.dot_dimension_numbers<[1], [0], [0], [1], [0, 0, 1, 1], [], []>} : vector<8x16xf32>, vector<16x64xf32>, vector<8x64xf32> -> vector<8x64xf32>
    %243 = arith.addf %241, %242 : vector<8x64xf32>
    %244 = vector.extract_strided_slice %243 {offsets = [0, 0], sizes = [8, 16], strides = [1, 1]} : vector<8x64xf32> to vector<8x16xf32>
    %245 = arith.negf %244 : vector<8x16xf32>
    %246 = math.exp %245 : vector<8x16xf32>
    %cst_67 = arith.constant 1.000000e+00 : f32
    %247 = vector.broadcast %cst_67 : f32 to vector<8x16xf32>
    %248 = arith.addf %247, %246 : vector<8x16xf32>
    %249 = arith.divf %247, %248 : vector<8x16xf32>
    %250 = vector.extract_strided_slice %243 {offsets = [0, 16], sizes = [8, 16], strides = [1, 1]} : vector<8x64xf32> to vector<8x16xf32>
    %251 = arith.negf %250 : vector<8x16xf32>
    %252 = math.exp %251 : vector<8x16xf32>
    %cst_68 = arith.constant 1.000000e+00 : f32
    %253 = vector.broadcast %cst_68 : f32 to vector<8x16xf32>
    %254 = arith.addf %253, %252 : vector<8x16xf32>
    %255 = arith.divf %253, %254 : vector<8x16xf32>
    %256 = vector.extract_strided_slice %243 {offsets = [0, 32], sizes = [8, 16], strides = [1, 1]} : vector<8x64xf32> to vector<8x16xf32>
    %257 = math.tanh %256 : vector<8x16xf32>
    %258 = vector.extract_strided_slice %243 {offsets = [0, 48], sizes = [8, 16], strides = [1, 1]} : vector<8x64xf32> to vector<8x16xf32>
    %259 = arith.negf %258 : vector<8x16xf32>
    %260 = math.exp %259 : vector<8x16xf32>
    %cst_69 = arith.constant 1.000000e+00 : f32
    %261 = vector.broadcast %cst_69 : f32 to vector<8x16xf32>
    %262 = arith.addf %261, %260 : vector<8x16xf32>
    %263 = arith.divf %261, %262 : vector<8x16xf32>
    %264 = arith.mulf %255, %202 : vector<8x16xf32>
    %265 = arith.mulf %249, %257 : vector<8x16xf32>
    %266 = arith.addf %264, %265 : vector<8x16xf32>
    %267 = math.tanh %266 : vector<8x16xf32>
    %268 = arith.mulf %263, %267 : vector<8x16xf32>
    %269 = arith.index_cast %210 : i32 to index
    %c0_70 = arith.constant 0 : index
    %270 = vector.load %arg14[%269, %c0_70] : memref<64x16xf32, #tpu.memory_space<vmem>>, vector<8x16xf32>
    tpu.vector_store %arg14[%269, %c0_70], %239 {strides = array<i32>} : memref<64x16xf32, #tpu.memory_space<vmem>>, vector<8x16xf32>,
    %271 = arith.index_cast %210 : i32 to index
    %c0_71 = arith.constant 0 : index
    %272 = vector.load %arg15[%271, %c0_71] : memref<64x16xf32, #tpu.memory_space<vmem>>, vector<8x16xf32>
    tpu.vector_store %arg15[%271, %c0_71], %268 {strides = array<i32>} : memref<64x16xf32, #tpu.memory_space<vmem>>, vector<8x16xf32>,
    %c4_i32 = arith.constant 4 : i32
    %c8_i32_72 = arith.constant 8 : i32
    %273 = arith.muli %c4_i32, %c8_i32_72 : i32
    %274 = tpu.assume_multiple %273, 8 : i32
    %275 = arith.index_cast %274 : i32 to index
    %c0_73 = arith.constant 0 : index
    %276 = vector.load %arg12[%275, %c0_73] : memref<64x64xf32, #tpu.memory_space<vmem>>, vector<8x64xf32>
    %cst_74 = arith.constant dense<0.000000e+00> : vector<8x64xf32>
    %277 = tpu.matmul %239, %14, %cst_74 {dimension_numbers = #tpu.dot_dimension_numbers<[1], [0], [0], [1], [0, 0, 1, 1], [], []>} : vector<8x16xf32>, vector<16x64xf32>, vector<8x64xf32> -> vector<8x64xf32>
    %278 = arith.addf %276, %277 : vector<8x64xf32>
    %279 = vector.extract_strided_slice %278 {offsets = [0, 0], sizes = [8, 16], strides = [1, 1]} : vector<8x64xf32> to vector<8x16xf32>
    %280 = arith.negf %279 : vector<8x16xf32>
    %281 = math.exp %280 : vector<8x16xf32>
    %cst_75 = arith.constant 1.000000e+00 : f32
    %282 = vector.broadcast %cst_75 : f32 to vector<8x16xf32>
    %283 = arith.addf %282, %281 : vector<8x16xf32>
    %284 = arith.divf %282, %283 : vector<8x16xf32>
    %285 = vector.extract_strided_slice %278 {offsets = [0, 16], sizes = [8, 16], strides = [1, 1]} : vector<8x64xf32> to vector<8x16xf32>
    %286 = arith.negf %285 : vector<8x16xf32>
    %287 = math.exp %286 : vector<8x16xf32>
    %cst_76 = arith.constant 1.000000e+00 : f32
    %288 = vector.broadcast %cst_76 : f32 to vector<8x16xf32>
    %289 = arith.addf %288, %287 : vector<8x16xf32>
    %290 = arith.divf %288, %289 : vector<8x16xf32>
    %291 = vector.extract_strided_slice %278 {offsets = [0, 32], sizes = [8, 16], strides = [1, 1]} : vector<8x64xf32> to vector<8x16xf32>
    %292 = math.tanh %291 : vector<8x16xf32>
    %293 = vector.extract_strided_slice %278 {offsets = [0, 48], sizes = [8, 16], strides = [1, 1]} : vector<8x64xf32> to vector<8x16xf32>
    %294 = arith.negf %293 : vector<8x16xf32>
    %295 = math.exp %294 : vector<8x16xf32>
    %cst_77 = arith.constant 1.000000e+00 : f32
    %296 = vector.broadcast %cst_77 : f32 to vector<8x16xf32>
    %297 = arith.addf %296, %295 : vector<8x16xf32>
    %298 = arith.divf %296, %297 : vector<8x16xf32>
    %299 = arith.mulf %290, %237 : vector<8x16xf32>
    %300 = arith.mulf %284, %292 : vector<8x16xf32>
    %301 = arith.addf %299, %300 : vector<8x16xf32>
    %302 = math.tanh %301 : vector<8x16xf32>
    %303 = arith.mulf %298, %302 : vector<8x16xf32>
    %304 = arith.index_cast %274 : i32 to index
    %c0_78 = arith.constant 0 : index
    %305 = vector.load %arg13[%304, %c0_78] : memref<64x64xf32, #tpu.memory_space<vmem>>, vector<8x64xf32>
    %cst_79 = arith.constant dense<0.000000e+00> : vector<8x64xf32>
    %306 = tpu.matmul %268, %15, %cst_79 {dimension_numbers = #tpu.dot_dimension_numbers<[1], [0], [0], [1], [0, 0, 1, 1], [], []>} : vector<8x16xf32>, vector<16x64xf32>, vector<8x64xf32> -> vector<8x64xf32>
    %307 = arith.addf %305, %306 : vector<8x64xf32>
    %308 = vector.extract_strided_slice %307 {offsets = [0, 0], sizes = [8, 16], strides = [1, 1]} : vector<8x64xf32> to vector<8x16xf32>
    %309 = arith.negf %308 : vector<8x16xf32>
    %310 = math.exp %309 : vector<8x16xf32>
    %cst_80 = arith.constant 1.000000e+00 : f32
    %311 = vector.broadcast %cst_80 : f32 to vector<8x16xf32>
    %312 = arith.addf %311, %310 : vector<8x16xf32>
    %313 = arith.divf %311, %312 : vector<8x16xf32>
    %314 = vector.extract_strided_slice %307 {offsets = [0, 16], sizes = [8, 16], strides = [1, 1]} : vector<8x64xf32> to vector<8x16xf32>
    %315 = arith.negf %314 : vector<8x16xf32>
    %316 = math.exp %315 : vector<8x16xf32>
    %cst_81 = arith.constant 1.000000e+00 : f32
    %317 = vector.broadcast %cst_81 : f32 to vector<8x16xf32>
    %318 = arith.addf %317, %316 : vector<8x16xf32>
    %319 = arith.divf %317, %318 : vector<8x16xf32>
    %320 = vector.extract_strided_slice %307 {offsets = [0, 32], sizes = [8, 16], strides = [1, 1]} : vector<8x64xf32> to vector<8x16xf32>
    %321 = math.tanh %320 : vector<8x16xf32>
    %322 = vector.extract_strided_slice %307 {offsets = [0, 48], sizes = [8, 16], strides = [1, 1]} : vector<8x64xf32> to vector<8x16xf32>
    %323 = arith.negf %322 : vector<8x16xf32>
    %324 = math.exp %323 : vector<8x16xf32>
    %cst_82 = arith.constant 1.000000e+00 : f32
    %325 = vector.broadcast %cst_82 : f32 to vector<8x16xf32>
    %326 = arith.addf %325, %324 : vector<8x16xf32>
    %327 = arith.divf %325, %326 : vector<8x16xf32>
    %328 = arith.mulf %319, %266 : vector<8x16xf32>
    %329 = arith.mulf %313, %321 : vector<8x16xf32>
    %330 = arith.addf %328, %329 : vector<8x16xf32>
    %331 = math.tanh %330 : vector<8x16xf32>
    %332 = arith.mulf %327, %331 : vector<8x16xf32>
    %333 = arith.index_cast %274 : i32 to index
    %c0_83 = arith.constant 0 : index
    %334 = vector.load %arg14[%333, %c0_83] : memref<64x16xf32, #tpu.memory_space<vmem>>, vector<8x16xf32>
    tpu.vector_store %arg14[%333, %c0_83], %303 {strides = array<i32>} : memref<64x16xf32, #tpu.memory_space<vmem>>, vector<8x16xf32>,
    %335 = arith.index_cast %274 : i32 to index
    %c0_84 = arith.constant 0 : index
    %336 = vector.load %arg15[%335, %c0_84] : memref<64x16xf32, #tpu.memory_space<vmem>>, vector<8x16xf32>
    tpu.vector_store %arg15[%335, %c0_84], %332 {strides = array<i32>} : memref<64x16xf32, #tpu.memory_space<vmem>>, vector<8x16xf32>,
    %c5_i32 = arith.constant 5 : i32
    %c8_i32_85 = arith.constant 8 : i32
    %337 = arith.muli %c5_i32, %c8_i32_85 : i32
    %338 = tpu.assume_multiple %337, 8 : i32
    %339 = arith.index_cast %338 : i32 to index
    %c0_86 = arith.constant 0 : index
    %340 = vector.load %arg12[%339, %c0_86] : memref<64x64xf32, #tpu.memory_space<vmem>>, vector<8x64xf32>
    %cst_87 = arith.constant dense<0.000000e+00> : vector<8x64xf32>
    %341 = tpu.matmul %303, %14, %cst_87 {dimension_numbers = #tpu.dot_dimension_numbers<[1], [0], [0], [1], [0, 0, 1, 1], [], []>} : vector<8x16xf32>, vector<16x64xf32>, vector<8x64xf32> -> vector<8x64xf32>
    %342 = arith.addf %340, %341 : vector<8x64xf32>
    %343 = vector.extract_strided_slice %342 {offsets = [0, 0], sizes = [8, 16], strides = [1, 1]} : vector<8x64xf32> to vector<8x16xf32>
    %344 = arith.negf %343 : vector<8x16xf32>
    %345 = math.exp %344 : vector<8x16xf32>
    %cst_88 = arith.constant 1.000000e+00 : f32
    %346 = vector.broadcast %cst_88 : f32 to vector<8x16xf32>
    %347 = arith.addf %346, %345 : vector<8x16xf32>
    %348 = arith.divf %346, %347 : vector<8x16xf32>
    %349 = vector.extract_strided_slice %342 {offsets = [0, 16], sizes = [8, 16], strides = [1, 1]} : vector<8x64xf32> to vector<8x16xf32>
    %350 = arith.negf %349 : vector<8x16xf32>
    %351 = math.exp %350 : vector<8x16xf32>
    %cst_89 = arith.constant 1.000000e+00 : f32
    %352 = vector.broadcast %cst_89 : f32 to vector<8x16xf32>
    %353 = arith.addf %352, %351 : vector<8x16xf32>
    %354 = arith.divf %352, %353 : vector<8x16xf32>
    %355 = vector.extract_strided_slice %342 {offsets = [0, 32], sizes = [8, 16], strides = [1, 1]} : vector<8x64xf32> to vector<8x16xf32>
    %356 = math.tanh %355 : vector<8x16xf32>
    %357 = vector.extract_strided_slice %342 {offsets = [0, 48], sizes = [8, 16], strides = [1, 1]} : vector<8x64xf32> to vector<8x16xf32>
    %358 = arith.negf %357 : vector<8x16xf32>
    %359 = math.exp %358 : vector<8x16xf32>
    %cst_90 = arith.constant 1.000000e+00 : f32
    %360 = vector.broadcast %cst_90 : f32 to vector<8x16xf32>
    %361 = arith.addf %360, %359 : vector<8x16xf32>
    %362 = arith.divf %360, %361 : vector<8x16xf32>
    %363 = arith.mulf %354, %301 : vector<8x16xf32>
    %364 = arith.mulf %348, %356 : vector<8x16xf32>
    %365 = arith.addf %363, %364 : vector<8x16xf32>
    %366 = math.tanh %365 : vector<8x16xf32>
    %367 = arith.mulf %362, %366 : vector<8x16xf32>
    %368 = arith.index_cast %338 : i32 to index
    %c0_91 = arith.constant 0 : index
    %369 = vector.load %arg13[%368, %c0_91] : memref<64x64xf32, #tpu.memory_space<vmem>>, vector<8x64xf32>
    %cst_92 = arith.constant dense<0.000000e+00> : vector<8x64xf32>
    %370 = tpu.matmul %332, %15, %cst_92 {dimension_numbers = #tpu.dot_dimension_numbers<[1], [0], [0], [1], [0, 0, 1, 1], [], []>} : vector<8x16xf32>, vector<16x64xf32>, vector<8x64xf32> -> vector<8x64xf32>
    %371 = arith.addf %369, %370 : vector<8x64xf32>
    %372 = vector.extract_strided_slice %371 {offsets = [0, 0], sizes = [8, 16], strides = [1, 1]} : vector<8x64xf32> to vector<8x16xf32>
    %373 = arith.negf %372 : vector<8x16xf32>
    %374 = math.exp %373 : vector<8x16xf32>
    %cst_93 = arith.constant 1.000000e+00 : f32
    %375 = vector.broadcast %cst_93 : f32 to vector<8x16xf32>
    %376 = arith.addf %375, %374 : vector<8x16xf32>
    %377 = arith.divf %375, %376 : vector<8x16xf32>
    %378 = vector.extract_strided_slice %371 {offsets = [0, 16], sizes = [8, 16], strides = [1, 1]} : vector<8x64xf32> to vector<8x16xf32>
    %379 = arith.negf %378 : vector<8x16xf32>
    %380 = math.exp %379 : vector<8x16xf32>
    %cst_94 = arith.constant 1.000000e+00 : f32
    %381 = vector.broadcast %cst_94 : f32 to vector<8x16xf32>
    %382 = arith.addf %381, %380 : vector<8x16xf32>
    %383 = arith.divf %381, %382 : vector<8x16xf32>
    %384 = vector.extract_strided_slice %371 {offsets = [0, 32], sizes = [8, 16], strides = [1, 1]} : vector<8x64xf32> to vector<8x16xf32>
    %385 = math.tanh %384 : vector<8x16xf32>
    %386 = vector.extract_strided_slice %371 {offsets = [0, 48], sizes = [8, 16], strides = [1, 1]} : vector<8x64xf32> to vector<8x16xf32>
    %387 = arith.negf %386 : vector<8x16xf32>
    %388 = math.exp %387 : vector<8x16xf32>
    %cst_95 = arith.constant 1.000000e+00 : f32
    %389 = vector.broadcast %cst_95 : f32 to vector<8x16xf32>
    %390 = arith.addf %389, %388 : vector<8x16xf32>
    %391 = arith.divf %389, %390 : vector<8x16xf32>
    %392 = arith.mulf %383, %330 : vector<8x16xf32>
    %393 = arith.mulf %377, %385 : vector<8x16xf32>
    %394 = arith.addf %392, %393 : vector<8x16xf32>
    %395 = math.tanh %394 : vector<8x16xf32>
    %396 = arith.mulf %391, %395 : vector<8x16xf32>
    %397 = arith.index_cast %338 : i32 to index
    %c0_96 = arith.constant 0 : index
    %398 = vector.load %arg14[%397, %c0_96] : memref<64x16xf32, #tpu.memory_space<vmem>>, vector<8x16xf32>
    tpu.vector_store %arg14[%397, %c0_96], %367 {strides = array<i32>} : memref<64x16xf32, #tpu.memory_space<vmem>>, vector<8x16xf32>,
    %399 = arith.index_cast %338 : i32 to index
    %c0_97 = arith.constant 0 : index
    %400 = vector.load %arg15[%399, %c0_97] : memref<64x16xf32, #tpu.memory_space<vmem>>, vector<8x16xf32>
    tpu.vector_store %arg15[%399, %c0_97], %396 {strides = array<i32>} : memref<64x16xf32, #tpu.memory_space<vmem>>, vector<8x16xf32>,
    %c6_i32 = arith.constant 6 : i32
    %c8_i32_98 = arith.constant 8 : i32
    %401 = arith.muli %c6_i32, %c8_i32_98 : i32
    %402 = tpu.assume_multiple %401, 8 : i32
    %403 = arith.index_cast %402 : i32 to index
    %c0_99 = arith.constant 0 : index
    %404 = vector.load %arg12[%403, %c0_99] : memref<64x64xf32, #tpu.memory_space<vmem>>, vector<8x64xf32>
    %cst_100 = arith.constant dense<0.000000e+00> : vector<8x64xf32>
    %405 = tpu.matmul %367, %14, %cst_100 {dimension_numbers = #tpu.dot_dimension_numbers<[1], [0], [0], [1], [0, 0, 1, 1], [], []>} : vector<8x16xf32>, vector<16x64xf32>, vector<8x64xf32> -> vector<8x64xf32>
    %406 = arith.addf %404, %405 : vector<8x64xf32>
    %407 = vector.extract_strided_slice %406 {offsets = [0, 0], sizes = [8, 16], strides = [1, 1]} : vector<8x64xf32> to vector<8x16xf32>
    %408 = arith.negf %407 : vector<8x16xf32>
    %409 = math.exp %408 : vector<8x16xf32>
    %cst_101 = arith.constant 1.000000e+00 : f32
    %410 = vector.broadcast %cst_101 : f32 to vector<8x16xf32>
    %411 = arith.addf %410, %409 : vector<8x16xf32>
    %412 = arith.divf %410, %411 : vector<8x16xf32>
    %413 = vector.extract_strided_slice %406 {offsets = [0, 16], sizes = [8, 16], strides = [1, 1]} : vector<8x64xf32> to vector<8x16xf32>
    %414 = arith.negf %413 : vector<8x16xf32>
    %415 = math.exp %414 : vector<8x16xf32>
    %cst_102 = arith.constant 1.000000e+00 : f32
    %416 = vector.broadcast %cst_102 : f32 to vector<8x16xf32>
    %417 = arith.addf %416, %415 : vector<8x16xf32>
    %418 = arith.divf %416, %417 : vector<8x16xf32>
    %419 = vector.extract_strided_slice %406 {offsets = [0, 32], sizes = [8, 16], strides = [1, 1]} : vector<8x64xf32> to vector<8x16xf32>
    %420 = math.tanh %419 : vector<8x16xf32>
    %421 = vector.extract_strided_slice %406 {offsets = [0, 48], sizes = [8, 16], strides = [1, 1]} : vector<8x64xf32> to vector<8x16xf32>
    %422 = arith.negf %421 : vector<8x16xf32>
    %423 = math.exp %422 : vector<8x16xf32>
    %cst_103 = arith.constant 1.000000e+00 : f32
    %424 = vector.broadcast %cst_103 : f32 to vector<8x16xf32>
    %425 = arith.addf %424, %423 : vector<8x16xf32>
    %426 = arith.divf %424, %425 : vector<8x16xf32>
    %427 = arith.mulf %418, %365 : vector<8x16xf32>
    %428 = arith.mulf %412, %420 : vector<8x16xf32>
    %429 = arith.addf %427, %428 : vector<8x16xf32>
    %430 = math.tanh %429 : vector<8x16xf32>
    %431 = arith.mulf %426, %430 : vector<8x16xf32>
    %432 = arith.index_cast %402 : i32 to index
    %c0_104 = arith.constant 0 : index
    %433 = vector.load %arg13[%432, %c0_104] : memref<64x64xf32, #tpu.memory_space<vmem>>, vector<8x64xf32>
    %cst_105 = arith.constant dense<0.000000e+00> : vector<8x64xf32>
    %434 = tpu.matmul %396, %15, %cst_105 {dimension_numbers = #tpu.dot_dimension_numbers<[1], [0], [0], [1], [0, 0, 1, 1], [], []>} : vector<8x16xf32>, vector<16x64xf32>, vector<8x64xf32> -> vector<8x64xf32>
    %435 = arith.addf %433, %434 : vector<8x64xf32>
    %436 = vector.extract_strided_slice %435 {offsets = [0, 0], sizes = [8, 16], strides = [1, 1]} : vector<8x64xf32> to vector<8x16xf32>
    %437 = arith.negf %436 : vector<8x16xf32>
    %438 = math.exp %437 : vector<8x16xf32>
    %cst_106 = arith.constant 1.000000e+00 : f32
    %439 = vector.broadcast %cst_106 : f32 to vector<8x16xf32>
    %440 = arith.addf %439, %438 : vector<8x16xf32>
    %441 = arith.divf %439, %440 : vector<8x16xf32>
    %442 = vector.extract_strided_slice %435 {offsets = [0, 16], sizes = [8, 16], strides = [1, 1]} : vector<8x64xf32> to vector<8x16xf32>
    %443 = arith.negf %442 : vector<8x16xf32>
    %444 = math.exp %443 : vector<8x16xf32>
    %cst_107 = arith.constant 1.000000e+00 : f32
    %445 = vector.broadcast %cst_107 : f32 to vector<8x16xf32>
    %446 = arith.addf %445, %444 : vector<8x16xf32>
    %447 = arith.divf %445, %446 : vector<8x16xf32>
    %448 = vector.extract_strided_slice %435 {offsets = [0, 32], sizes = [8, 16], strides = [1, 1]} : vector<8x64xf32> to vector<8x16xf32>
    %449 = math.tanh %448 : vector<8x16xf32>
    %450 = vector.extract_strided_slice %435 {offsets = [0, 48], sizes = [8, 16], strides = [1, 1]} : vector<8x64xf32> to vector<8x16xf32>
    %451 = arith.negf %450 : vector<8x16xf32>
    %452 = math.exp %451 : vector<8x16xf32>
    %cst_108 = arith.constant 1.000000e+00 : f32
    %453 = vector.broadcast %cst_108 : f32 to vector<8x16xf32>
    %454 = arith.addf %453, %452 : vector<8x16xf32>
    %455 = arith.divf %453, %454 : vector<8x16xf32>
    %456 = arith.mulf %447, %394 : vector<8x16xf32>
    %457 = arith.mulf %441, %449 : vector<8x16xf32>
    %458 = arith.addf %456, %457 : vector<8x16xf32>
    %459 = math.tanh %458 : vector<8x16xf32>
    %460 = arith.mulf %455, %459 : vector<8x16xf32>
    %461 = arith.index_cast %402 : i32 to index
    %c0_109 = arith.constant 0 : index
    %462 = vector.load %arg14[%461, %c0_109] : memref<64x16xf32, #tpu.memory_space<vmem>>, vector<8x16xf32>
    tpu.vector_store %arg14[%461, %c0_109], %431 {strides = array<i32>} : memref<64x16xf32, #tpu.memory_space<vmem>>, vector<8x16xf32>,
    %463 = arith.index_cast %402 : i32 to index
    %c0_110 = arith.constant 0 : index
    %464 = vector.load %arg15[%463, %c0_110] : memref<64x16xf32, #tpu.memory_space<vmem>>, vector<8x16xf32>
    tpu.vector_store %arg15[%463, %c0_110], %460 {strides = array<i32>} : memref<64x16xf32, #tpu.memory_space<vmem>>, vector<8x16xf32>,
    %c7_i32 = arith.constant 7 : i32
    %c8_i32_111 = arith.constant 8 : i32
    %465 = arith.muli %c7_i32, %c8_i32_111 : i32
    %466 = tpu.assume_multiple %465, 8 : i32
    %467 = arith.index_cast %466 : i32 to index
    %c0_112 = arith.constant 0 : index
    %468 = vector.load %arg12[%467, %c0_112] : memref<64x64xf32, #tpu.memory_space<vmem>>, vector<8x64xf32>
    %cst_113 = arith.constant dense<0.000000e+00> : vector<8x64xf32>
    %469 = tpu.matmul %431, %14, %cst_113 {dimension_numbers = #tpu.dot_dimension_numbers<[1], [0], [0], [1], [0, 0, 1, 1], [], []>} : vector<8x16xf32>, vector<16x64xf32>, vector<8x64xf32> -> vector<8x64xf32>
    %470 = arith.addf %468, %469 : vector<8x64xf32>
    %471 = vector.extract_strided_slice %470 {offsets = [0, 0], sizes = [8, 16], strides = [1, 1]} : vector<8x64xf32> to vector<8x16xf32>
    %472 = arith.negf %471 : vector<8x16xf32>
    %473 = math.exp %472 : vector<8x16xf32>
    %cst_114 = arith.constant 1.000000e+00 : f32
    %474 = vector.broadcast %cst_114 : f32 to vector<8x16xf32>
    %475 = arith.addf %474, %473 : vector<8x16xf32>
    %476 = arith.divf %474, %475 : vector<8x16xf32>
    %477 = vector.extract_strided_slice %470 {offsets = [0, 16], sizes = [8, 16], strides = [1, 1]} : vector<8x64xf32> to vector<8x16xf32>
    %478 = arith.negf %477 : vector<8x16xf32>
    %479 = math.exp %478 : vector<8x16xf32>
    %cst_115 = arith.constant 1.000000e+00 : f32
    %480 = vector.broadcast %cst_115 : f32 to vector<8x16xf32>
    %481 = arith.addf %480, %479 : vector<8x16xf32>
    %482 = arith.divf %480, %481 : vector<8x16xf32>
    %483 = vector.extract_strided_slice %470 {offsets = [0, 32], sizes = [8, 16], strides = [1, 1]} : vector<8x64xf32> to vector<8x16xf32>
    %484 = math.tanh %483 : vector<8x16xf32>
    %485 = vector.extract_strided_slice %470 {offsets = [0, 48], sizes = [8, 16], strides = [1, 1]} : vector<8x64xf32> to vector<8x16xf32>
    %486 = arith.negf %485 : vector<8x16xf32>
    %487 = math.exp %486 : vector<8x16xf32>
    %cst_116 = arith.constant 1.000000e+00 : f32
    %488 = vector.broadcast %cst_116 : f32 to vector<8x16xf32>
    %489 = arith.addf %488, %487 : vector<8x16xf32>
    %490 = arith.divf %488, %489 : vector<8x16xf32>
    %491 = arith.mulf %482, %429 : vector<8x16xf32>
    %492 = arith.mulf %476, %484 : vector<8x16xf32>
    %493 = arith.addf %491, %492 : vector<8x16xf32>
    %494 = math.tanh %493 : vector<8x16xf32>
    %495 = arith.mulf %490, %494 : vector<8x16xf32>
    %496 = arith.index_cast %466 : i32 to index
    %c0_117 = arith.constant 0 : index
    %497 = vector.load %arg13[%496, %c0_117] : memref<64x64xf32, #tpu.memory_space<vmem>>, vector<8x64xf32>
    %cst_118 = arith.constant dense<0.000000e+00> : vector<8x64xf32>
    %498 = tpu.matmul %460, %15, %cst_118 {dimension_numbers = #tpu.dot_dimension_numbers<[1], [0], [0], [1], [0, 0, 1, 1], [], []>} : vector<8x16xf32>, vector<16x64xf32>, vector<8x64xf32> -> vector<8x64xf32>
    %499 = arith.addf %497, %498 : vector<8x64xf32>
    %500 = vector.extract_strided_slice %499 {offsets = [0, 0], sizes = [8, 16], strides = [1, 1]} : vector<8x64xf32> to vector<8x16xf32>
    %501 = arith.negf %500 : vector<8x16xf32>
    %502 = math.exp %501 : vector<8x16xf32>
    %cst_119 = arith.constant 1.000000e+00 : f32
    %503 = vector.broadcast %cst_119 : f32 to vector<8x16xf32>
    %504 = arith.addf %503, %502 : vector<8x16xf32>
    %505 = arith.divf %503, %504 : vector<8x16xf32>
    %506 = vector.extract_strided_slice %499 {offsets = [0, 16], sizes = [8, 16], strides = [1, 1]} : vector<8x64xf32> to vector<8x16xf32>
    %507 = arith.negf %506 : vector<8x16xf32>
    %508 = math.exp %507 : vector<8x16xf32>
    %cst_120 = arith.constant 1.000000e+00 : f32
    %509 = vector.broadcast %cst_120 : f32 to vector<8x16xf32>
    %510 = arith.addf %509, %508 : vector<8x16xf32>
    %511 = arith.divf %509, %510 : vector<8x16xf32>
    %512 = vector.extract_strided_slice %499 {offsets = [0, 32], sizes = [8, 16], strides = [1, 1]} : vector<8x64xf32> to vector<8x16xf32>
    %513 = math.tanh %512 : vector<8x16xf32>
    %514 = vector.extract_strided_slice %499 {offsets = [0, 48], sizes = [8, 16], strides = [1, 1]} : vector<8x64xf32> to vector<8x16xf32>
    %515 = arith.negf %514 : vector<8x16xf32>
    %516 = math.exp %515 : vector<8x16xf32>
    %cst_121 = arith.constant 1.000000e+00 : f32
    %517 = vector.broadcast %cst_121 : f32 to vector<8x16xf32>
    %518 = arith.addf %517, %516 : vector<8x16xf32>
    %519 = arith.divf %517, %518 : vector<8x16xf32>
    %520 = arith.mulf %511, %458 : vector<8x16xf32>
    %521 = arith.mulf %505, %513 : vector<8x16xf32>
    %522 = arith.addf %520, %521 : vector<8x16xf32>
    %523 = math.tanh %522 : vector<8x16xf32>
    %524 = arith.mulf %519, %523 : vector<8x16xf32>
    %525 = arith.index_cast %466 : i32 to index
    %c0_122 = arith.constant 0 : index
    %526 = vector.load %arg14[%525, %c0_122] : memref<64x16xf32, #tpu.memory_space<vmem>>, vector<8x16xf32>
    tpu.vector_store %arg14[%525, %c0_122], %495 {strides = array<i32>} : memref<64x16xf32, #tpu.memory_space<vmem>>, vector<8x16xf32>,
    %527 = arith.index_cast %466 : i32 to index
    %c0_123 = arith.constant 0 : index
    %528 = vector.load %arg15[%527, %c0_123] : memref<64x16xf32, #tpu.memory_space<vmem>>, vector<8x16xf32>
    tpu.vector_store %arg15[%527, %c0_123], %524 {strides = array<i32>} : memref<64x16xf32, #tpu.memory_space<vmem>>, vector<8x16xf32>,
    %c8_i32_124 = arith.constant 8 : i32
    %c0_125 = arith.constant 0 : index
    %c0_126 = arith.constant 0 : index
    %529 = vector.load %arg9[%c0_125, %c0_126] : memref<16x64xf32, #tpu.memory_space<vmem>>, vector<16x64xf32>
    %c0_127 = arith.constant 0 : index
    %c0_128 = arith.constant 0 : index
    %530 = vector.load %arg10[%c0_127, %c0_128] : memref<1x64xf32, #tpu.memory_space<vmem>>, vector<1x64xf32>
    %c0_129 = arith.constant 0 : index
    %c0_130 = arith.constant 0 : index
    %531 = vector.load %arg14[%c0_129, %c0_130] : memref<64x16xf32, #tpu.memory_space<vmem>>, vector<64x16xf32>
    %cst_131 = arith.constant dense<0.000000e+00> : vector<64x64xf32>
    %532 = tpu.matmul %531, %529, %cst_131 {dimension_numbers = #tpu.dot_dimension_numbers<[1], [0], [0], [1], [0, 0, 1, 1], [], []>} : vector<64x16xf32>, vector<16x64xf32>, vector<64x64xf32> -> vector<64x64xf32>
    %533 = vector.broadcast %530 : vector<1x64xf32> to vector<64x64xf32>
    %534 = arith.addf %532, %533 : vector<64x64xf32>
    %c0_132 = arith.constant 0 : index
    %c0_133 = arith.constant 0 : index
    %535 = vector.load %arg11[%c0_132, %c0_133] : memref<64x128xf32, #tpu.memory_space<vmem>>, vector<64x64xf32>
    tpu.vector_store %arg11[%c0_132, %c0_133], %534 {strides = array<i32>} : memref<64x128xf32, #tpu.memory_space<vmem>>, vector<64x64xf32>,
    %c0_134 = arith.constant 0 : index
    %c0_135 = arith.constant 0 : index
    %536 = vector.load %arg15[%c0_134, %c0_135] : memref<64x16xf32, #tpu.memory_space<vmem>>, vector<64x16xf32>
    %cst_136 = arith.constant dense<0.000000e+00> : vector<64x64xf32>
    %537 = tpu.matmul %536, %529, %cst_136 {dimension_numbers = #tpu.dot_dimension_numbers<[1], [0], [0], [1], [0, 0, 1, 1], [], []>} : vector<64x16xf32>, vector<16x64xf32>, vector<64x64xf32> -> vector<64x64xf32>
    %538 = vector.broadcast %530 : vector<1x64xf32> to vector<64x64xf32>
    %539 = arith.addf %537, %538 : vector<64x64xf32>
    %c0_137 = arith.constant 0 : index
    %c64 = arith.constant 64 : index
    %540 = vector.load %arg11[%c0_137, %c64] : memref<64x128xf32, #tpu.memory_space<vmem>>, vector<64x64xf32>
    tpu.vector_store %arg11[%c0_137, %c64], %539 {strides = array<i32>} : memref<64x128xf32, #tpu.memory_space<vmem>>, vector<64x64xf32>,
    return
  }
  func.func @transform_0(%arg0: i32) -> (i32, i32) {
    %c0_i32 = arith.constant 0 : i32
    %c0_i32_0 = arith.constant 0 : i32
    %c0_i32_1 = arith.constant 0 : i32
    return %c0_i32, %c0_i32_0 : i32, i32
  }
  func.func @transform_1(%arg0: i32) -> (i32, i32) {
    %c0_i32 = arith.constant 0 : i32
    %c0_i32_0 = arith.constant 0 : i32
    %c0_i32_1 = arith.constant 0 : i32
    return %c0_i32, %c0_i32_0 : i32, i32
  }
  func.func @transform_2(%arg0: i32) -> (i32, i32) {
    %c0_i32 = arith.constant 0 : i32
    %c0_i32_0 = arith.constant 0 : i32
    %c0_i32_1 = arith.constant 0 : i32
    return %c0_i32, %c0_i32_0 : i32, i32
  }
  func.func @transform_3(%arg0: i32) -> (i32, i32) {
    %c0_i32 = arith.constant 0 : i32
    %c0_i32_0 = arith.constant 0 : i32
    %c0_i32_1 = arith.constant 0 : i32
    return %c0_i32, %c0_i32_0 : i32, i32
  }
  func.func @transform_4(%arg0: i32) -> (i32, i32) {
    %c0_i32 = arith.constant 0 : i32
    %c0_i32_0 = arith.constant 0 : i32
    %c0_i32_1 = arith.constant 0 : i32
    return %c0_i32, %c0_i32_0 : i32, i32
  }
  func.func @transform_5(%arg0: i32) -> (i32, i32) {
    %c0_i32 = arith.constant 0 : i32
    %c0_i32_0 = arith.constant 0 : i32
    %c0_i32_1 = arith.constant 0 : i32
    return %c0_i32, %c0_i32_0 : i32, i32
  }
  func.func @transform_6(%arg0: i32) -> (i32, i32) {
    %c0_i32 = arith.constant 0 : i32
    %c0_i32_0 = arith.constant 0 : i32
    %c0_i32_1 = arith.constant 0 : i32
    return %c0_i32, %c0_i32_0 : i32, i32
  }
  func.func @transform_7(%arg0: i32) -> (i32, i32) {
    %c0_i32 = arith.constant 0 : i32
    %c0_i32_0 = arith.constant 0 : i32
    %c0_i32_1 = arith.constant 0 : i32
    return %c0_i32, %c0_i32_0 : i32, i32
  }
  func.func @transform_8(%arg0: i32) -> (i32, i32) {
    %c0_i32 = arith.constant 0 : i32
    %c0_i32_0 = arith.constant 0 : i32
    %c0_i32_1 = arith.constant 0 : i32
    return %c0_i32, %c0_i32_0 : i32, i32
  }
  func.func @transform_9(%arg0: i32) -> (i32, i32) {
    %c0_i32 = arith.constant 0 : i32
    %c0_i32_0 = arith.constant 0 : i32
    %c0_i32_1 = arith.constant 0 : i32
    return %c0_i32, %c0_i32_0 : i32, i32
  }
  func.func @transform_10(%arg0: i32) -> (i32, i32) {
    %c0_i32 = arith.constant 0 : i32
    %c0_i32_0 = arith.constant 0 : i32
    %c0_i32_1 = arith.constant 0 : i32
    return %c0_i32, %c0_i32_0 : i32, i32
  }
}

</mosaic_0001>

<llo_original>
// kernel: duo_decoder_forward.1
$region0: #{duo_decoder_forward.1}
  #allocation0 [shape = 'u32[]', space=smem, size = 0x4, offset = 0x4, fixed_abs, tag = 'smem constant byte address 0x4 - core index']
  #allocation1 [shape = 'u32[144,128]{1,0:T(1,128)}', space=vmem, size = 0x12000, scoped, tag = 'internal scratch']
  #allocation2 [shape = 'f32[64,64]{1,0:T(8,128)}', space=vmem, size = 0x8000, scoped, tag = 'scratch operand']
  #allocation3 [shape = 'f32[64,64]{1,0:T(8,128)}', space=vmem, size = 0x8000, scoped, tag = 'scratch operand']
  #allocation4 [shape = 'f32[64,16]{1,0:T(8,128)}', space=vmem, size = 0x8000, scoped, tag = 'scratch operand']
  #allocation5 [shape = 'f32[64,16]{1,0:T(8,128)}', space=vmem, size = 0x8000, scoped, tag = 'scratch operand']
  %s0 = inlined_call_operand.vmem [shape: f32[64,48], index: 0, kind: input, shape index: {}]
  %s1 = inlined_call_operand.vmem [shape: f32[64,48], index: 1, kind: input, shape index: {}]
  %s2 = inlined_call_operand.vmem [shape: f32[48,64], index: 2, kind: input, shape index: {}]
  %s3 = inlined_call_operand.vmem [shape: f32[16,64], index: 3, kind: input, shape index: {}]
  %s4 = inlined_call_operand.vmem [shape: f32[1,64], index: 4, kind: input, shape index: {}]
  %s5 = inlined_call_operand.vmem [shape: f32[48,64], index: 5, kind: input, shape index: {}]
  %s6 = inlined_call_operand.vmem [shape: f32[16,64], index: 6, kind: input, shape index: {}]
  %s7 = inlined_call_operand.vmem [shape: f32[1,64], index: 7, kind: input, shape index: {}]
  %s8 = inlined_call_operand.vmem [shape: f32[16,64], index: 8, kind: input, shape index: {}]
  %s9 = inlined_call_operand.vmem [shape: f32[1,64], index: 9, kind: input, shape index: {}]
  %s10 = inlined_call_operand.vmem [shape: f32[64,128], index: 10, kind: output, shape index: {}]
  %s11 = sld [smem:[#allocation0]]
  $region50: #{duo_decoder_forward.1} parent=0
    _
  %s13 = ssub.s32 1, %s11
  %s14 = scalar_select 0, %s13, %s11
  // Predicated region
  $region2: #{duo_decoder_forward.1} parent=0 // pred_check
    _
  $region3: #{duo_decoder_forward.1} parent=0 // pred_check_branch
    %16 = sbr.rel (0) target = $region5
  $region4: #{duo_decoder_forward.1} parent=0 // pred_region
    _
  $region5: #{duo_decoder_forward.1} parent=0 // pred_fallthru
    _
  // Predicated region
  $region6: #{duo_decoder_forward.1} parent=0 // pred_check
    _
  $region7: #{duo_decoder_forward.1} parent=0 // pred_check_branch
    %18 = sbr.rel (0) target = $region9
  $region8: #{duo_decoder_forward.1} parent=0 // pred_region
    _
  $region9: #{duo_decoder_forward.1} parent=0 // pred_fallthru
    _
  // Predicated region
  $region10: #{duo_decoder_forward.1} parent=0 // pred_check
    _
  $region11: #{duo_decoder_forward.1} parent=0 // pred_check_branch
    %20 = sbr.rel (0) target = $region13
  $region12: #{duo_decoder_forward.1} parent=0 // pred_region
    _
  $region13: #{duo_decoder_forward.1} parent=0 // pred_fallthru
    _
  // Predicated region
  $region14: #{duo_decoder_forward.1} parent=0 // pred_check
    _
  $region15: #{duo_decoder_forward.1} parent=0 // pred_check_branch
    %22 = sbr.rel (0) target = $region17
  $region16: #{duo_decoder_forward.1} parent=0 // pred_region
    _
  $region17: #{duo_decoder_forward.1} parent=0 // pred_fallthru
    _
  // Predicated region
  $region18: #{duo_decoder_forward.1} parent=0 // pred_check
    _
  $region19: #{duo_decoder_forward.1} parent=0 // pred_check_branch
    %24 = sbr.rel (0) target = $region21
  $region20: #{duo_decoder_forward.1} parent=0 // pred_region
    _
  $region21: #{duo_decoder_forward.1} parent=0 // pred_fallthru
    _
  // Predicated region
  $region22: #{duo_decoder_forward.1} parent=0 // pred_check
    _
  $region23: #{duo_decoder_forward.1} parent=0 // pred_check_branch
    %26 = sbr.rel (0) target = $region25
  $region24: #{duo_decoder_forward.1} parent=0 // pred_region
    _
  $region25: #{duo_decoder_forward.1} parent=0 // pred_fallthru
    _
  // Predicated region
  $region26: #{duo_decoder_forward.1} parent=0 // pred_check
    _
  $region27: #{duo_decoder_forward.1} parent=0 // pred_check_branch
    %28 = sbr.rel (0) target = $region29
  $region28: #{duo_decoder_forward.1} parent=0 // pred_region
    _
  $region29: #{duo_decoder_forward.1} parent=0 // pred_fallthru
    _
  // Predicated region
  $region30: #{duo_decoder_forward.1} parent=0 // pred_check
    _
  $region31: #{duo_decoder_forward.1} parent=0 // pred_check_branch
    %30 = sbr.rel (0) target = $region33
  $region32: #{duo_decoder_forward.1} parent=0 // pred_region
    _
  $region33: #{duo_decoder_forward.1} parent=0 // pred_fallthru
    _
  // Predicated region
  $region34: #{duo_decoder_forward.1} parent=0 // pred_check
    _
  $region35: #{duo_decoder_forward.1} parent=0 // pred_check_branch
    %32 = sbr.rel (0) target = $region37
  $region36: #{duo_decoder_forward.1} parent=0 // pred_region
    _
  $region37: #{duo_decoder_forward.1} parent=0 // pred_fallthru
    _
  // Predicated region
  $region38: #{duo_decoder_forward.1} parent=0 // pred_check
    _
  $region39: #{duo_decoder_forward.1} parent=0 // pred_check_branch
    %34 = sbr.rel (0) target = $region41
  $region40: #{duo_decoder_forward.1} parent=0 // pred_region
    _
  $region41: #{duo_decoder_forward.1} parent=0 // pred_fallthru
    _
  %v35 = vld [vmem:[%s0] sm:$0xff]
  %v36 = vld [vmem:[%s0 + $0x8] sm:$0xff]
  %v37 = vld [vmem:[%s0 + $0x10] sm:$0xff]
  %v38 = vld [vmem:[%s0 + $0x18] sm:$0xff]
  %v39 = vld [vmem:[%s0 + $0x20] sm:$0xff]
  %v40 = vld [vmem:[%s0 + $0x28] sm:$0xff]
  %v41 = vld [vmem:[%s0 + $0x30] sm:$0xff]
  %v42 = vld [vmem:[%s0 + $0x38] sm:$0xff]
  %v43 = vld [vmem:[%s2] sm:$0xff]
  %v44 = vld [vmem:[%s2 + $0x8] sm:$0xff]
  %v45 = vld [vmem:[%s2 + $0x10] sm:$0xff]
  %v46 = vld [vmem:[%s2 + $0x18] sm:$0xff]
  %v47 = vld [vmem:[%s2 + $0x20] sm:$0xff]
  %v48 = vld [vmem:[%s2 + $0x28] sm:$0xff]
  %v49 = vld [vmem:[%s4] sm:$0x1]
  %v51 = vlaneseq
  %v52 = vshrl.u32 %v51, 7
  %v53 = vsub.s32 0, %v52
  %v54 = vrot.slane %v49, %v53
  %vm56 = vcmask 392192
  %v58 = vsel %vm56, %v35, 0
  %v61 = vsel %vm56, %v36, 0
  %v64 = vsel %vm56, %v37, 0
  %v67 = vsel %vm56, %v38, 0
  %v70 = vsel %vm56, %v39, 0
  %v73 = vsel %vm56, %v40, 0
  %v76 = vsel %vm56, %v41, 0
  %v79 = vsel %vm56, %v42, 0
  %81 = vmatprep.subr.mxu0 0.0
  %82 = vmatpush1.msra.mxu0 0.0
  %83 = vmatprep.subr.mxu0 0.0
  %84 = vmatpush1.msra.mxu0 0.0
  %85 = vmatprep.subr.mxu0 0.0
  %86 = vmatpush1.msra.mxu0 0.0
  %87 = vmatprep.subr.mxu0 0.0
  %88 = vmatpush1.msra.mxu0 0.0
  %89 = vmatprep.subr.mxu0 0.0
  %90 = vmatpush1.msra.mxu0 0.0
  %91 = vmatprep.subr.mxu0 0.0
  %92 = vmatpush1.msra.mxu0 0.0
  %93 = vmatprep.subr.mxu0 0.0
  %94 = vmatpush1.msra.mxu0 0.0
  %95 = vmatprep.subr.mxu0 0.0
  %96 = vmatpush1.msra.mxu0 0.0
  %97 = vmatprep.subr.mxu0 0.0
  %98 = vmatpush1.msra.mxu0 0.0
  %99 = vmatprep.subr.mxu0 0.0
  %100 = vmatpush1.msra.mxu0 0.0
  %101 = vmatprep.subr.mxu0 0.0
  %102 = vmatpush1.msra.mxu0 %v48
  %103 = vmatprep.subr.mxu0 0.0
  %104 = vmatpush1.msra.mxu0 %v47
  %105 = vmatprep.subr.mxu0 0.0
  %106 = vmatpush1.msra.mxu0 %v46
  %107 = vmatprep.subr.mxu0 0.0
  %108 = vmatpush1.msra.mxu0 %v45
  %109 = vmatprep.subr.mxu0 0.0
  %110 = vmatpush1.msra.mxu0 %v44
  %111 = vmatprep.subr.mxu0 0.0
  %112 = vmatpush1.msra.mxu0 %v43
  %113 = vmatprep.subr.mxu0 0.0
  %114 = vmatpush2.msra.mxu0 0.0
  %115 = vmatprep.subr.mxu0 0.0
  %116 = vmatpush2.msra.mxu0 0.0
  %117 = vmatprep.subr.mxu0 0.0
  %118 = vmatpush2.msra.mxu0 0.0
  %119 = vmatprep.subr.mxu0 0.0
  %120 = vmatpush2.msra.mxu0 0.0
  %121 = vmatprep.subr.mxu0 0.0
  %122 = vmatpush2.msra.mxu0 0.0
  %123 = vmatprep.subr.mxu0 0.0
  %124 = vmatpush2.msra.mxu0 0.0
  %125 = vmatprep.subr.mxu0 0.0
  %126 = vmatpush2.msra.mxu0 0.0
  %127 = vmatprep.subr.mxu0 0.0
  %128 = vmatpush2.msra.mxu0 0.0
  %129 = vmatprep.subr.mxu0 0.0
  %130 = vmatpush2.msra.mxu0 0.0
  %131 = vmatprep.subr.mxu0 0.0
  %132 = vmatpush2.msra.mxu0 0.0
  %133 = vmatprep.subr.mxu0 0.0
  %134 = vmatpush2.msra.mxu0 0.0
  %135 = vmatprep.subr.mxu0 0.0
  %136 = vmatpush2.msra.mxu0 0.0
  %137 = vmatprep.subr.mxu0 0.0
  %138 = vmatpush2.msra.mxu0 0.0
  %139 = vmatprep.subr.mxu0 0.0
  %140 = vmatpush2.msra.mxu0 0.0
  %141 = vmatprep.subr.mxu0 0.0
  %142 = vmatpush2.msra.mxu0 0.0
  %143 = vmatprep.subr.mxu0 0.0
  %144 = vmatpush2.msra.mxu0 0.0
  %145 = vmatprep.mubr.f32.mxu0 0.0
  %146 = vmatmul.mubr.f32.gmra.mxu0 %v58
  %v147 = vpop.f32.mrf.mxu0
  %v148 = vadd.f32 %v54, %v147
  %v149 = vpop.f32.mrf.mxu0
  %150 = vmatprep.mubr.f32.mxu0 0.0
  %151 = vmatmul.mubr.f32.gmra.mxu0 %v61
  %v152 = vpop.f32.mrf.mxu0
  %v153 = vadd.f32 %v54, %v152
  %v154 = vpop.f32.mrf.mxu0
  %155 = vmatprep.mubr.f32.mxu0 0.0
  %156 = vmatmul.mubr.f32.gmra.mxu0 %v64
  %v157 = vpop.f32.mrf.mxu0
  %v158 = vadd.f32 %v54, %v157
  %v159 = vpop.f32.mrf.mxu0
  %160 = vmatprep.mubr.f32.mxu0 0.0
  %161 = vmatmul.mubr.f32.gmra.mxu0 %v67
  %v162 = vpop.f32.mrf.mxu0
  %v163 = vadd.f32 %v54, %v162
  %v164 = vpop.f32.mrf.mxu0
  %165 = vmatprep.mubr.f32.mxu0 0.0
  %166 = vmatmul.mubr.f32.gmra.mxu0 %v70
  %v167 = vpop.f32.mrf.mxu0
  %v168 = vadd.f32 %v54, %v167
  %v169 = vpop.f32.mrf.mxu0
  %170 = vmatprep.mubr.f32.mxu0 0.0
  %171 = vmatmul.mubr.f32.gmra.mxu0 %v73
  %v172 = vpop.f32.mrf.mxu0
  %v173 = vadd.f32 %v54, %v172
  %v174 = vpop.f32.mrf.mxu0
  %175 = vmatprep.mubr.f32.mxu0 0.0
  %176 = vmatmul.mubr.f32.gmra.mxu0 %v76
  %v177 = vpop.f32.mrf.mxu0
  %v178 = vadd.f32 %v54, %v177
  %v179 = vpop.f32.mrf.mxu0
  %180 = vmatprep.mubr.f32.mxu0 0.0
  %181 = vmatmul.mubr.f32.gmra.mxu0 %v79
  %v182 = vpop.f32.mrf.mxu0
  %v183 = vadd.f32 %v54, %v182
  %v184 = vpop.f32.mrf.mxu0
  %185 = vdwg.mxu0
  %vm186 = vcmask 523264
  %187 = vst.msk [vmem:[#allocation2] sm:$0xff] %vm186, %v148
  %188 = vst.msk [vmem:[#allocation2 + $0x8] sm:$0xff] %vm186, %v153
  %189 = vst.msk [vmem:[#allocation2 + $0x10] sm:$0xff] %vm186, %v158
  %190 = vst.msk [vmem:[#allocation2 + $0x18] sm:$0xff] %vm186, %v163
  %191 = vst.msk [vmem:[#allocation2 + $0x20] sm:$0xff] %vm186, %v168
  %192 = vst.msk [vmem:[#allocation2 + $0x28] sm:$0xff] %vm186, %v173
  %193 = vst.msk [vmem:[#allocation2 + $0x30] sm:$0xff] %vm186, %v178
  %194 = vst.msk [vmem:[#allocation2 + $0x38] sm:$0xff] %vm186, %v183
  %v195 = vld [vmem:[%s1] sm:$0xff]
  %v196 = vld [vmem:[%s1 + $0x8] sm:$0xff]
  %v197 = vld [vmem:[%s1 + $0x10] sm:$0xff]
  %v198 = vld [vmem:[%s1 + $0x18] sm:$0xff]
  %v199 = vld [vmem:[%s1 + $0x20] sm:$0xff]
  %v200 = vld [vmem:[%s1 + $0x28] sm:$0xff]
  %v201 = vld [vmem:[%s1 + $0x30] sm:$0xff]
  %v202 = vld [vmem:[%s1 + $0x38] sm:$0xff]
  %v203 = vld [vmem:[%s5] sm:$0xff]
  %v204 = vld [vmem:[%s5 + $0x8] sm:$0xff]
  %v205 = vld [vmem:[%s5 + $0x10] sm:$0xff]
  %v206 = vld [vmem:[%s5 + $0x18] sm:$0xff]
  %v207 = vld [vmem:[%s5 + $0x20] sm:$0xff]
  %v208 = vld [vmem:[%s5 + $0x28] sm:$0xff]
  %v209 = vld [vmem:[%s7] sm:$0x1]
  %v211 = vlaneseq
  %v212 = vshrl.u32 %v211, 7
  %v213 = vsub.s32 0, %v212
  %v214 = vrot.slane %v209, %v213
  %v217 = vsel %vm56, %v195, 0
  %v220 = vsel %vm56, %v196, 0
  %v223 = vsel %vm56, %v197, 0
  %v226 = vsel %vm56, %v198, 0
  %v229 = vsel %vm56, %v199, 0
  %v232 = vsel %vm56, %v200, 0
  %v235 = vsel %vm56, %v201, 0
  %v238 = vsel %vm56, %v202, 0
  %240 = vmatprep.subr.mxu0 0.0
  %241 = vmatpush1.msra.mxu0 0.0
  %242 = vmatprep.subr.mxu0 0.0
  %243 = vmatpush1.msra.mxu0 0.0
  %244 = vmatprep.subr.mxu0 0.0
  %245 = vmatpush1.msra.mxu0 0.0
  %246 = vmatprep.subr.mxu0 0.0
  %247 = vmatpush1.msra.mxu0 0.0
  %248 = vmatprep.subr.mxu0 0.0
  %249 = vmatpush1.msra.mxu0 0.0
  %250 = vmatprep.subr.mxu0 0.0
  %251 = vmatpush1.msra.mxu0 0.0
  %252 = vmatprep.subr.mxu0 0.0
  %253 = vmatpush1.msra.mxu0 0.0
  %254 = vmatprep.subr.mxu0 0.0
  %255 = vmatpush1.msra.mxu0 0.0
  %256 = vmatprep.subr.mxu0 0.0
  %257 = vmatpush1.msra.mxu0 0.0
  %258 = vmatprep.subr.mxu0 0.0
  %259 = vmatpush1.msra.mxu0 0.0
  %260 = vmatprep.subr.mxu0 0.0
  %261 = vmatpush1.msra.mxu0 %v208
  %262 = vmatprep.subr.mxu0 0.0
  %263 = vmatpush1.msra.mxu0 %v207
  %264 = vmatprep.subr.mxu0 0.0
  %265 = vmatpush1.msra.mxu0 %v206
  %266 = vmatprep.subr.mxu0 0.0
  %267 = vmatpush1.msra.mxu0 %v205
  %268 = vmatprep.subr.mxu0 0.0
  %269 = vmatpush1.msra.mxu0 %v204
  %270 = vmatprep.subr.mxu0 0.0
  %271 = vmatpush1.msra.mxu0 %v203
  %272 = vmatprep.subr.mxu0 0.0
  %273 = vmatpush2.msra.mxu0 0.0
  %274 = vmatprep.subr.mxu0 0.0
  %275 = vmatpush2.msra.mxu0 0.0
  %276 = vmatprep.subr.mxu0 0.0
  %277 = vmatpush2.msra.mxu0 0.0
  %278 = vmatprep.subr.mxu0 0.0
  %279 = vmatpush2.msra.mxu0 0.0
  %280 = vmatprep.subr.mxu0 0.0
  %281 = vmatpush2.msra.mxu0 0.0
  %282 = vmatprep.subr.mxu0 0.0
  %283 = vmatpush2.msra.mxu0 0.0
  %284 = vmatprep.subr.mxu0 0.0
  %285 = vmatpush2.msra.mxu0 0.0
  %286 = vmatprep.subr.mxu0 0.0
  %287 = vmatpush2.msra.mxu0 0.0
  %288 = vmatprep.subr.mxu0 0.0
  %289 = vmatpush2.msra.mxu0 0.0
  %290 = vmatprep.subr.mxu0 0.0
  %291 = vmatpush2.msra.mxu0 0.0
  %292 = vmatprep.subr.mxu0 0.0
  %293 = vmatpush2.msra.mxu0 0.0
  %294 = vmatprep.subr.mxu0 0.0
  %295 = vmatpush2.msra.mxu0 0.0
  %296 = vmatprep.subr.mxu0 0.0
  %297 = vmatpush2.msra.mxu0 0.0
  %298 = vmatprep.subr.mxu0 0.0
  %299 = vmatpush2.msra.mxu0 0.0
  %300 = vmatprep.subr.mxu0 0.0
  %301 = vmatpush2.msra.mxu0 0.0
  %302 = vmatprep.subr.mxu0 0.0
  %303 = vmatpush2.msra.mxu0 0.0
  %304 = vmatprep.mubr.f32.mxu0 0.0
  %305 = vmatmul.mubr.f32.gmra.mxu0 %v217
  %v306 = vpop.f32.mrf.mxu0
  %v307 = vadd.f32 %v214, %v306
  %v308 = vpop.f32.mrf.mxu0
  %309 = vmatprep.mubr.f32.mxu0 0.0
  %310 = vmatmul.mubr.f32.gmra.mxu0 %v220
  %v311 = vpop.f32.mrf.mxu0
  %v312 = vadd.f32 %v214, %v311
  %v313 = vpop.f32.mrf.mxu0
  %314 = vmatprep.mubr.f32.mxu0 0.0
  %315 = vmatmul.mubr.f32.gmra.mxu0 %v223
  %v316 = vpop.f32.mrf.mxu0
  %v317 = vadd.f32 %v214, %v316
  %v318 = vpop.f32.mrf.mxu0
  %319 = vmatprep.mubr.f32.mxu0 0.0
  %320 = vmatmul.mubr.f32.gmra.mxu0 %v226
  %v321 = vpop.f32.mrf.mxu0
  %v322 = vadd.f32 %v214, %v321
  %v323 = vpop.f32.mrf.mxu0
  %324 = vmatprep.mubr.f32.mxu0 0.0
  %325 = vmatmul.mubr.f32.gmra.mxu0 %v229
  %v326 = vpop.f32.mrf.mxu0
  %v327 = vadd.f32 %v214, %v326
  %v328 = vpop.f32.mrf.mxu0
  %329 = vmatprep.mubr.f32.mxu0 0.0
  %330 = vmatmul.mubr.f32.gmra.mxu0 %v232
  %v331 = vpop.f32.mrf.mxu0
  %v332 = vadd.f32 %v214, %v331
  %v333 = vpop.f32.mrf.mxu0
  %334 = vmatprep.mubr.f32.mxu0 0.0
  %335 = vmatmul.mubr.f32.gmra.mxu0 %v235
  %v336 = vpop.f32.mrf.mxu0
  %v337 = vadd.f32 %v214, %v336
  %v338 = vpop.f32.mrf.mxu0
  %339 = vmatprep.mubr.f32.mxu0 0.0
  %340 = vmatmul.mubr.f32.gmra.mxu0 %v238
  %v341 = vpop.f32.mrf.mxu0
  %v342 = vadd.f32 %v214, %v341
  %v343 = vpop.f32.mrf.mxu0
  %344 = vdwg.mxu0
  %345 = vst.msk [vmem:[#allocation3] sm:$0xff] %vm186, %v307
  %346 = vst.msk [vmem:[#allocation3 + $0x8] sm:$0xff] %vm186, %v312
  %347 = vst.msk [vmem:[#allocation3 + $0x10] sm:$0xff] %vm186, %v317
  %348 = vst.msk [vmem:[#allocation3 + $0x18] sm:$0xff] %vm186, %v322
  %349 = vst.msk [vmem:[#allocation3 + $0x20] sm:$0xff] %vm186, %v327
  %350 = vst.msk [vmem:[#allocation3 + $0x28] sm:$0xff] %vm186, %v332
  %351 = vst.msk [vmem:[#allocation3 + $0x30] sm:$0xff] %vm186, %v337
  %352 = vst.msk [vmem:[#allocation3 + $0x38] sm:$0xff] %vm186, %v342
  %v353 = vld [vmem:[%s3] sm:$0xff]
  %v354 = vld [vmem:[%s3 + $0x8] sm:$0xff]
  %v355 = vld [vmem:[%s6] sm:$0xff]
  %v356 = vld [vmem:[%s6 + $0x8] sm:$0xff]
  %v357 = vld [vmem:[#allocation2] sm:$0xff]
  %vm358 = vcmask 130048
  %v360 = vsel %vm358, 0.0, 0
  %362 = vmatprep.subr.mxu0 0.0
  %363 = vmatpush1.msra.mxu0 0.0
  %364 = vmatprep.subr.mxu0 0.0
  %365 = vmatpush1.msra.mxu0 0.0
  %366 = vmatprep.subr.mxu0 0.0
  %367 = vmatpush1.msra.mxu0 0.0
  %368 = vmatprep.subr.mxu0 0.0
  %369 = vmatpush1.msra.mxu0 0.0
  %370 = vmatprep.subr.mxu0 0.0
  %371 = vmatpush1.msra.mxu0 0.0
  %372 = vmatprep.subr.mxu0 0.0
  %373 = vmatpush1.msra.mxu0 0.0
  %374 = vmatprep.subr.mxu0 0.0
  %375 = vmatpush1.msra.mxu0 0.0
  %376 = vmatprep.subr.mxu0 0.0
  %377 = vmatpush1.msra.mxu0 0.0
  %378 = vmatprep.subr.mxu0 0.0
  %379 = vmatpush1.msra.mxu0 0.0
  %380 = vmatprep.subr.mxu0 0.0
  %381 = vmatpush1.msra.mxu0 0.0
  %382 = vmatprep.subr.mxu0 0.0
  %383 = vmatpush1.msra.mxu0 0.0
  %384 = vmatprep.subr.mxu0 0.0
  %385 = vmatpush1.msra.mxu0 0.0
  %386 = vmatprep.subr.mxu0 0.0
  %387 = vmatpush1.msra.mxu0 0.0
  %388 = vmatprep.subr.mxu0 0.0
  %389 = vmatpush1.msra.mxu0 0.0
  %390 = vmatprep.subr.mxu0 0.0
  %391 = vmatpush1.msra.mxu0 %v354
  %392 = vmatprep.subr.mxu0 0.0
  %393 = vmatpush1.msra.mxu0 %v353
  %394 = vmatprep.subr.mxu0 0.0
  %395 = vmatpush2.msra.mxu0 0.0
  %396 = vmatprep.subr.mxu0 0.0
  %397 = vmatpush2.msra.mxu0 0.0
  %398 = vmatprep.subr.mxu0 0.0
  %399 = vmatpush2.msra.mxu0 0.0
  %400 = vmatprep.subr.mxu0 0.0
  %401 = vmatpush2.msra.mxu0 0.0
  %402 = vmatprep.subr.mxu0 0.0
  %403 = vmatpush2.msra.mxu0 0.0
  %404 = vmatprep.subr.mxu0 0.0
  %405 = vmatpush2.msra.mxu0 0.0
  %406 = vmatprep.subr.mxu0 0.0
  %407 = vmatpush2.msra.mxu0 0.0
  %408 = vmatprep.subr.mxu0 0.0
  %409 = vmatpush2.msra.mxu0 0.0
  %410 = vmatprep.subr.mxu0 0.0
  %411 = vmatpush2.msra.mxu0 0.0
  %412 = vmatprep.subr.mxu0 0.0
  %413 = vmatpush2.msra.mxu0 0.0
  %414 = vmatprep.subr.mxu0 0.0
  %415 = vmatpush2.msra.mxu0 0.0
  %416 = vmatprep.subr.mxu0 0.0
  %417 = vmatpush2.msra.mxu0 0.0
  %418 = vmatprep.subr.mxu0 0.0
  %419 = vmatpush2.msra.mxu0 0.0
  %420 = vmatprep.subr.mxu0 0.0
  %421 = vmatpush2.msra.mxu0 0.0
  %422 = vmatprep.subr.mxu0 0.0
  %423 = vmatpush2.msra.mxu0 0.0
  %424 = vmatprep.subr.mxu0 0.0
  %425 = vmatpush2.msra.mxu0 0.0
  %426 = vmatprep.mubr.f32.mxu0 0.0
  %427 = vmatmul.mubr.f32.gmra.mxu0 %v360
  %v428 = vpop.f32.mrf.mxu0
  %v429 = vadd.f32 0.0, %v428
  %v430 = vpop.f32.mrf.mxu0
  %431 = vdwg.mxu0
  %v432 = vadd.f32 %v357, %v429
  %v433 = vxor.u32 %v432, 2147483648
  %v434 = vmul.f32 %v433, 1.442695
  %v435 = vpow.pop %v434
  %v436 = vadd.f32 %v435, 1.0
  %v437 = vrcp.pop %v436
  %v438 = vmul.f32 1.0, %v437
  %v439 = vtanh.pop %v432
  %v440 = vmul.f32 %v438, 0.0
  %442 = vrot.lane.b32.xlu0 %v439, 96
  %v443 = vpop.permute.xlu0 %442
  %v445 = vmul.f32 %v438, %v443
  %447 = vrot.lane.b32.xlu0 %v445, 16
  %v448 = vpop.permute.xlu0 %447
  %v450 = vadd.f32 %v440, %v448
  %v451 = vtanh.pop %v450
  %453 = vrot.lane.b32.xlu0 %v451, 32
  %v454 = vpop.permute.xlu0 %453
  %v456 = vmul.f32 %v438, %v454
  %v457 = vld [vmem:[#allocation3] sm:$0xff]
  %458 = vmatprep.subr.mxu0 0.0
  %459 = vmatpush1.msra.mxu0 0.0
  %460 = vmatprep.subr.mxu0 0.0
  %461 = vmatpush1.msra.mxu0 0.0
  %462 = vmatprep.subr.mxu0 0.0
  %463 = vmatpush1.msra.mxu0 0.0
  %464 = vmatprep.subr.mxu0 0.0
  %465 = vmatpush1.msra.mxu0 0.0
  %466 = vmatprep.subr.mxu0 0.0
  %467 = vmatpush1.msra.mxu0 0.0
  %468 = vmatprep.subr.mxu0 0.0
  %469 = vmatpush1.msra.mxu0 0.0
  %470 = vmatprep.subr.mxu0 0.0
  %471 = vmatpush1.msra.mxu0 0.0
  %472 = vmatprep.subr.mxu0 0.0
  %473 = vmatpush1.msra.mxu0 0.0
  %474 = vmatprep.subr.mxu0 0.0
  %475 = vmatpush1.msra.mxu0 0.0
  %476 = vmatprep.subr.mxu0 0.0
  %477 = vmatpush1.msra.mxu0 0.0
  %478 = vmatprep.subr.mxu0 0.0
  %479 = vmatpush1.msra.mxu0 0.0
  %480 = vmatprep.subr.mxu0 0.0
  %481 = vmatpush1.msra.mxu0 0.0
  %482 = vmatprep.subr.mxu0 0.0
  %483 = vmatpush1.msra.mxu0 0.0
  %484 = vmatprep.subr.mxu0 0.0
  %485 = vmatpush1.msra.mxu0 0.0
  %486 = vmatprep.subr.mxu0 0.0
  %487 = vmatpush1.msra.mxu0 %v356
  %488 = vmatprep.subr.mxu0 0.0
  %489 = vmatpush1.msra.mxu0 %v355
  %490 = vmatprep.subr.mxu0 0.0
  %491 = vmatpush2.msra.mxu0 0.0
  %492 = vmatprep.subr.mxu0 0.0
  %493 = vmatpush2.msra.mxu0 0.0
  %494 = vmatprep.subr.mxu0 0.0
  %495 = vmatpush2.msra.mxu0 0.0
  %496 = vmatprep.subr.mxu0 0.0
  %497 = vmatpush2.msra.mxu0 0.0
  %498 = vmatprep.subr.mxu0 0.0
  %499 = vmatpush2.msra.mxu0 0.0
  %500 = vmatprep.subr.mxu0 0.0
  %501 = vmatpush2.msra.mxu0 0.0
  %502 = vmatprep.subr.mxu0 0.0
  %503 = vmatpush2.msra.mxu0 0.0
  %504 = vmatprep.subr.mxu0 0.0
  %505 = vmatpush2.msra.mxu0 0.0
  %506 = vmatprep.subr.mxu0 0.0
  %507 = vmatpush2.msra.mxu0 0.0
  %508 = vmatprep.subr.mxu0 0.0
  %509 = vmatpush2.msra.mxu0 0.0
  %510 = vmatprep.subr.mxu0 0.0
  %511 = vmatpush2.msra.mxu0 0.0
  %512 = vmatprep.subr.mxu0 0.0
  %513 = vmatpush2.msra.mxu0 0.0
  %514 = vmatprep.subr.mxu0 0.0
  %515 = vmatpush2.msra.mxu0 0.0
  %516 = vmatprep.subr.mxu0 0.0
  %517 = vmatpush2.msra.mxu0 0.0
  %518 = vmatprep.subr.mxu0 0.0
  %519 = vmatpush2.msra.mxu0 0.0
  %520 = vmatprep.subr.mxu0 0.0
  %521 = vmatpush2.msra.mxu0 0.0
  %522 = vmatprep.mubr.f32.mxu0 0.0
  %523 = vmatmul.mubr.f32.gmra.mxu0 %v360
  %v524 = vpop.f32.mrf.mxu0
  %v525 = vadd.f32 0.0, %v524
  %v526 = vpop.f32.mrf.mxu0
  %527 = vdwg.mxu0
  %v528 = vadd.f32 %v457, %v525
  %v529 = vxor.u32 %v528, 2147483648
  %v530 = vmul.f32 %v529, 1.442695
  %v531 = vpow.pop %v530
  %v532 = vadd.f32 %v531, 1.0
  %v533 = vrcp.pop %v532
  %v534 = vmul.f32 1.0, %v533
  %v535 = vtanh.pop %v528
  %v536 = vmul.f32 %v534, 0.0
  %538 = vrot.lane.b32.xlu0 %v535, 96
  %v539 = vpop.permute.xlu0 %538
  %v541 = vmul.f32 %v534, %v539
  %543 = vrot.lane.b32.xlu0 %v541, 16
  %v544 = vpop.permute.xlu0 %543
  %v546 = vadd.f32 %v536, %v544
  %v547 = vtanh.pop %v546
  %549 = vrot.lane.b32.xlu0 %v547, 32
  %v550 = vpop.permute.xlu0 %549
  %v552 = vmul.f32 %v534, %v550
  %554 = vrot.lane.b32.xlu0 %v456, 80
  %v555 = vpop.permute.xlu0 %554
  %557 = vst.msk [vmem:[#allocation4] sm:$0xff] %vm358, %v555
  %559 = vrot.lane.b32.xlu0 %v552, 80
  %v560 = vpop.permute.xlu0 %559
  %562 = vst.msk [vmem:[#allocation5] sm:$0xff] %vm358, %v560
  %s563 = scalar_lea.vmem [#allocation2], 8
  %v564 = vld [vmem:[%s563] sm:$0xff]
  %v565 = vsel %vm358, %v555, 0
  %567 = vmatprep.subr.mxu0 0.0
  %568 = vmatpush1.msra.mxu0 0.0
  %569 = vmatprep.subr.mxu0 0.0
  %570 = vmatpush1.msra.mxu0 0.0
  %571 = vmatprep.subr.mxu0 0.0
  %572 = vmatpush1.msra.mxu0 0.0
  %573 = vmatprep.subr.mxu0 0.0
  %574 = vmatpush1.msra.mxu0 0.0
  %575 = vmatprep.subr.mxu0 0.0
  %576 = vmatpush1.msra.mxu0 0.0
  %577 = vmatprep.subr.mxu0 0.0
  %578 = vmatpush1.msra.mxu0 0.0
  %579 = vmatprep.subr.mxu0 0.0
  %580 = vmatpush1.msra.mxu0 0.0
  %581 = vmatprep.subr.mxu0 0.0
  %582 = vmatpush1.msra.mxu0 0.0
  %583 = vmatprep.subr.mxu0 0.0
  %584 = vmatpush1.msra.mxu0 0.0
  %585 = vmatprep.subr.mxu0 0.0
  %586 = vmatpush1.msra.mxu0 0.0
  %587 = vmatprep.subr.mxu0 0.0
  %588 = vmatpush1.msra.mxu0 0.0
  %589 = vmatprep.subr.mxu0 0.0
  %590 = vmatpush1.msra.mxu0 0.0
  %591 = vmatprep.subr.mxu0 0.0
  %592 = vmatpush1.msra.mxu0 0.0
  %593 = vmatprep.subr.mxu0 0.0
  %594 = vmatpush1.msra.mxu0 0.0
  %595 = vmatprep.subr.mxu0 0.0
  %596 = vmatpush1.msra.mxu0 %v354
  %597 = vmatprep.subr.mxu0 0.0
  %598 = vmatpush1.msra.mxu0 %v353
  %599 = vmatprep.subr.mxu0 0.0
  %600 = vmatpush2.msra.mxu0 0.0
  %601 = vmatprep.subr.mxu0 0.0
  %602 = vmatpush2.msra.mxu0 0.0
  %603 = vmatprep.subr.mxu0 0.0
  %604 = vmatpush2.msra.mxu0 0.0
  %605 = vmatprep.subr.mxu0 0.0
  %606 = vmatpush2.msra.mxu0 0.0
  %607 = vmatprep.subr.mxu0 0.0
  %608 = vmatpush2.msra.mxu0 0.0
  %609 = vmatprep.subr.mxu0 0.0
  %610 = vmatpush2.msra.mxu0 0.0
  %611 = vmatprep.subr.mxu0 0.0
  %612 = vmatpush2.msra.mxu0 0.0
  %613 = vmatprep.subr.mxu0 0.0
  %614 = vmatpush2.msra.mxu0 0.0
  %615 = vmatprep.subr.mxu0 0.0
  %616 = vmatpush2.msra.mxu0 0.0
  %617 = vmatprep.subr.mxu0 0.0
  %618 = vmatpush2.msra.mxu0 0.0
  %619 = vmatprep.subr.mxu0 0.0
  %620 = vmatpush2.msra.mxu0 0.0
  %621 = vmatprep.subr.mxu0 0.0
  %622 = vmatpush2.msra.mxu0 0.0
  %623 = vmatprep.subr.mxu0 0.0
  %624 = vmatpush2.msra.mxu0 0.0
  %625 = vmatprep.subr.mxu0 0.0
  %626 = vmatpush2.msra.mxu0 0.0
  %627 = vmatprep.subr.mxu0 0.0
  %628 = vmatpush2.msra.mxu0 0.0
  %629 = vmatprep.subr.mxu0 0.0
  %630 = vmatpush2.msra.mxu0 0.0
  %631 = vmatprep.mubr.f32.mxu0 0.0
  %632 = vmatmul.mubr.f32.gmra.mxu0 %v565
  %v633 = vpop.f32.mrf.mxu0
  %v634 = vadd.f32 0.0, %v633
  %v635 = vpop.f32.mrf.mxu0
  %636 = vdwg.mxu0
  %v637 = vadd.f32 %v564, %v634
  %v638 = vxor.u32 %v637, 2147483648
  %v639 = vmul.f32 %v638, 1.442695
  %v640 = vpow.pop %v639
  %v641 = vadd.f32 %v640, 1.0
  %v642 = vrcp.pop %v641
  %v643 = vmul.f32 1.0, %v642
  %v644 = vtanh.pop %v637
  %v645 = vmul.f32 %v643, %v450
  %647 = vrot.lane.b32.xlu0 %v644, 96
  %v648 = vpop.permute.xlu0 %647
  %v650 = vmul.f32 %v643, %v648
  %652 = vrot.lane.b32.xlu0 %v650, 16
  %v653 = vpop.permute.xlu0 %652
  %v655 = vadd.f32 %v645, %v653
  %v656 = vtanh.pop %v655
  %658 = vrot.lane.b32.xlu0 %v656, 32
  %v659 = vpop.permute.xlu0 %658
  %v661 = vmul.f32 %v643, %v659
  %s662 = scalar_lea.vmem [#allocation3], 8
  %v663 = vld [vmem:[%s662] sm:$0xff]
  %v664 = vsel %vm358, %v560, 0
  %666 = vmatprep.subr.mxu0 0.0
  %667 = vmatpush1.msra.mxu0 0.0
  %668 = vmatprep.subr.mxu0 0.0
  %669 = vmatpush1.msra.mxu0 0.0
  %670 = vmatprep.subr.mxu0 0.0
  %671 = vmatpush1.msra.mxu0 0.0
  %672 = vmatprep.subr.mxu0 0.0
  %673 = vmatpush1.msra.mxu0 0.0
  %674 = vmatprep.subr.mxu0 0.0
  %675 = vmatpush1.msra.mxu0 0.0
  %676 = vmatprep.subr.mxu0 0.0
  %677 = vmatpush1.msra.mxu0 0.0
  %678 = vmatprep.subr.mxu0 0.0
  %679 = vmatpush1.msra.mxu0 0.0
  %680 = vmatprep.subr.mxu0 0.0
  %681 = vmatpush1.msra.mxu0 0.0
  %682 = vmatprep.subr.mxu0 0.0
  %683 = vmatpush1.msra.mxu0 0.0
  %684 = vmatprep.subr.mxu0 0.0
  %685 = vmatpush1.msra.mxu0 0.0
  %686 = vmatprep.subr.mxu0 0.0
  %687 = vmatpush1.msra.mxu0 0.0
  %688 = vmatprep.subr.mxu0 0.0
  %689 = vmatpush1.msra.mxu0 0.0
  %690 = vmatprep.subr.mxu0 0.0
  %691 = vmatpush1.msra.mxu0 0.0
  %692 = vmatprep.subr.mxu0 0.0
  %693 = vmatpush1.msra.mxu0 0.0
  %694 = vmatprep.subr.mxu0 0.0
  %695 = vmatpush1.msra.mxu0 %v356
  %696 = vmatprep.subr.mxu0 0.0
  %697 = vmatpush1.msra.mxu0 %v355
  %698 = vmatprep.subr.mxu0 0.0
  %699 = vmatpush2.msra.mxu0 0.0
  %700 = vmatprep.subr.mxu0 0.0
  %701 = vmatpush2.msra.mxu0 0.0
  %702 = vmatprep.subr.mxu0 0.0
  %703 = vmatpush2.msra.mxu0 0.0
  %704 = vmatprep.subr.mxu0 0.0
  %705 = vmatpush2.msra.mxu0 0.0
  %706 = vmatprep.subr.mxu0 0.0
  %707 = vmatpush2.msra.mxu0 0.0
  %708 = vmatprep.subr.mxu0 0.0
  %709 = vmatpush2.msra.mxu0 0.0
  %710 = vmatprep.subr.mxu0 0.0
  %711 = vmatpush2.msra.mxu0 0.0
  %712 = vmatprep.subr.mxu0 0.0
  %713 = vmatpush2.msra.mxu0 0.0
  %714 = vmatprep.subr.mxu0 0.0
  %715 = vmatpush2.msra.mxu0 0.0
  %716 = vmatprep.subr.mxu0 0.0
  %717 = vmatpush2.msra.mxu0 0.0
  %718 = vmatprep.subr.mxu0 0.0
  %719 = vmatpush2.msra.mxu0 0.0
  %720 = vmatprep.subr.mxu0 0.0
  %721 = vmatpush2.msra.mxu0 0.0
  %722 = vmatprep.subr.mxu0 0.0
  %723 = vmatpush2.msra.mxu0 0.0
  %724 = vmatprep.subr.mxu0 0.0
  %725 = vmatpush2.msra.mxu0 0.0
  %726 = vmatprep.subr.mxu0 0.0
  %727 = vmatpush2.msra.mxu0 0.0
  %728 = vmatprep.subr.mxu0 0.0
  %729 = vmatpush2.msra.mxu0 0.0
  %730 = vmatprep.mubr.f32.mxu0 0.0
  %731 = vmatmul.mubr.f32.gmra.mxu0 %v664
  %v732 = vpop.f32.mrf.mxu0
  %v733 = vadd.f32 0.0, %v732
  %v734 = vpop.f32.mrf.mxu0
  %735 = vdwg.mxu0
  %v736 = vadd.f32 %v663, %v733
  %v737 = vxor.u32 %v736, 2147483648
  %v738 = vmul.f32 %v737, 1.442695
  %v739 = vpow.pop %v738
  %v740 = vadd.f32 %v739, 1.0
  %v741 = vrcp.pop %v740
  %v742 = vmul.f32 1.0, %v741
  %v743 = vtanh.pop %v736
  %v744 = vmul.f32 %v742, %v546
  %746 = vrot.lane.b32.xlu0 %v743, 96
  %v747 = vpop.permute.xlu0 %746
  %v749 = vmul.f32 %v742, %v747
  %751 = vrot.lane.b32.xlu0 %v749, 16
  %v752 = vpop.permute.xlu0 %751
  %v754 = vadd.f32 %v744, %v752
  %v755 = vtanh.pop %v754
  %757 = vrot.lane.b32.xlu0 %v755, 32
  %v758 = vpop.permute.xlu0 %757
  %v760 = vmul.f32 %v742, %v758
  %762 = vrot.lane.b32.xlu0 %v661, 80
  %v763 = vpop.permute.xlu0 %762
  %s765 = scalar_lea.vmem [#allocation4], 8
  %766 = vst.msk [vmem:[%s765] sm:$0xff] %vm358, %v763
  %768 = vrot.lane.b32.xlu0 %v760, 80
  %v769 = vpop.permute.xlu0 %768
  %s771 = scalar_lea.vmem [#allocation5], 8
  %772 = vst.msk [vmem:[%s771] sm:$0xff] %vm358, %v769
  %s773 = scalar_lea.vmem [#allocation2], 16
  %v774 = vld [vmem:[%s773] sm:$0xff]
  %v775 = vsel %vm358, %v763, 0
  %777 = vmatprep.subr.mxu0 0.0
  %778 = vmatpush1.msra.mxu0 0.0
  %779 = vmatprep.subr.mxu0 0.0
  %780 = vmatpush1.msra.mxu0 0.0
  %781 = vmatprep.subr.mxu0 0.0
  %782 = vmatpush1.msra.mxu0 0.0
  %783 = vmatprep.subr.mxu0 0.0
  %784 = vmatpush1.msra.mxu0 0.0
  %785 = vmatprep.subr.mxu0 0.0
  %786 = vmatpush1.msra.mxu0 0.0
  %787 = vmatprep.subr.mxu0 0.0
  %788 = vmatpush1.msra.mxu0 0.0
  %789 = vmatprep.subr.mxu0 0.0
  %790 = vmatpush1.msra.mxu0 0.0
  %791 = vmatprep.subr.mxu0 0.0
  %792 = vmatpush1.msra.mxu0 0.0
  %793 = vmatprep.subr.mxu0 0.0
  %794 = vmatpush1.msra.mxu0 0.0
  %795 = vmatprep.subr.mxu0 0.0
  %796 = vmatpush1.msra.mxu0 0.0
  %797 = vmatprep.subr.mxu0 0.0
  %798 = vmatpush1.msra.mxu0 0.0
  %799 = vmatprep.subr.mxu0 0.0
  %800 = vmatpush1.msra.mxu0 0.0
  %801 = vmatprep.subr.mxu0 0.0
  %802 = vmatpush1.msra.mxu0 0.0
  %803 = vmatprep.subr.mxu0 0.0
  %804 = vmatpush1.msra.mxu0 0.0
  %805 = vmatprep.subr.mxu0 0.0
  %806 = vmatpush1.msra.mxu0 %v354
  %807 = vmatprep.subr.mxu0 0.0
  %808 = vmatpush1.msra.mxu0 %v353
  %809 = vmatprep.subr.mxu0 0.0
  %810 = vmatpush2.msra.mxu0 0.0
  %811 = vmatprep.subr.mxu0 0.0
  %812 = vmatpush2.msra.mxu0 0.0
  %813 = vmatprep.subr.mxu0 0.0
  %814 = vmatpush2.msra.mxu0 0.0
  %815 = vmatprep.subr.mxu0 0.0
  %816 = vmatpush2.msra.mxu0 0.0
  %817 = vmatprep.subr.mxu0 0.0
  %818 = vmatpush2.msra.mxu0 0.0
  %819 = vmatprep.subr.mxu0 0.0
  %820 = vmatpush2.msra.mxu0 0.0
  %821 = vmatprep.subr.mxu0 0.0
  %822 = vmatpush2.msra.mxu0 0.0
  %823 = vmatprep.subr.mxu0 0.0
  %824 = vmatpush2.msra.mxu0 0.0
  %825 = vmatprep.subr.mxu0 0.0
  %826 = vmatpush2.msra.mxu0 0.0
  %827 = vmatprep.subr.mxu0 0.0
  %828 = vmatpush2.msra.mxu0 0.0
  %829 = vmatprep.subr.mxu0 0.0
  %830 = vmatpush2.msra.mxu0 0.0
  %831 = vmatprep.subr.mxu0 0.0
  %832 = vmatpush2.msra.mxu0 0.0
  %833 = vmatprep.subr.mxu0 0.0
  %834 = vmatpush2.msra.mxu0 0.0
  %835 = vmatprep.subr.mxu0 0.0
  %836 = vmatpush2.msra.mxu0 0.0
  %837 = vmatprep.subr.mxu0 0.0
  %838 = vmatpush2.msra.mxu0 0.0
  %839 = vmatprep.subr.mxu0 0.0
  %840 = vmatpush2.msra.mxu0 0.0
  %841 = vmatprep.mubr.f32.mxu0 0.0
  %842 = vmatmul.mubr.f32.gmra.mxu0 %v775
  %v843 = vpop.f32.mrf.mxu0
  %v844 = vadd.f32 0.0, %v843
  %v845 = vpop.f32.mrf.mxu0
  %846 = vdwg.mxu0
  %v847 = vadd.f32 %v774, %v844
  %v848 = vxor.u32 %v847, 2147483648
  %v849 = vmul.f32 %v848, 1.442695
  %v850 = vpow.pop %v849
  %v851 = vadd.f32 %v850, 1.0
  %v852 = vrcp.pop %v851
  %v853 = vmul.f32 1.0, %v852
  %v854 = vtanh.pop %v847
  %v855 = vmul.f32 %v853, %v655
  %857 = vrot.lane.b32.xlu0 %v854, 96
  %v858 = vpop.permute.xlu0 %857
  %v860 = vmul.f32 %v853, %v858
  %862 = vrot.lane.b32.xlu0 %v860, 16
  %v863 = vpop.permute.xlu0 %862
  %v865 = vadd.f32 %v855, %v863
  %v866 = vtanh.pop %v865
  %868 = vrot.lane.b32.xlu0 %v866, 32
  %v869 = vpop.permute.xlu0 %868
  %v871 = vmul.f32 %v853, %v869
  %s872 = scalar_lea.vmem [#allocation3], 16
  %v873 = vld [vmem:[%s872] sm:$0xff]
  %v874 = vsel %vm358, %v769, 0
  %876 = vmatprep.subr.mxu0 0.0
  %877 = vmatpush1.msra.mxu0 0.0
  %878 = vmatprep.subr.mxu0 0.0
  %879 = vmatpush1.msra.mxu0 0.0
  %880 = vmatprep.subr.mxu0 0.0
  %881 = vmatpush1.msra.mxu0 0.0
  %882 = vmatprep.subr.mxu0 0.0
  %883 = vmatpush1.msra.mxu0 0.0
  %884 = vmatprep.subr.mxu0 0.0
  %885 = vmatpush1.msra.mxu0 0.0
  %886 = vmatprep.subr.mxu0 0.0
  %887 = vmatpush1.msra.mxu0 0.0
  %888 = vmatprep.subr.mxu0 0.0
  %889 = vmatpush1.msra.mxu0 0.0
  %890 = vmatprep.subr.mxu0 0.0
  %891 = vmatpush1.msra.mxu0 0.0
  %892 = vmatprep.subr.mxu0 0.0
  %893 = vmatpush1.msra.mxu0 0.0
  %894 = vmatprep.subr.mxu0 0.0
  %895 = vmatpush1.msra.mxu0 0.0
  %896 = vmatprep.subr.mxu0 0.0
  %897 = vmatpush1.msra.mxu0 0.0
  %898 = vmatprep.subr.mxu0 0.0
  %899 = vmatpush1.msra.mxu0 0.0
  %900 = vmatprep.subr.mxu0 0.0
  %901 = vmatpush1.msra.mxu0 0.0
  %902 = vmatprep.subr.mxu0 0.0
  %903 = vmatpush1.msra.mxu0 0.0
  %904 = vmatprep.subr.mxu0 0.0
  %905 = vmatpush1.msra.mxu0 %v356
  %906 = vmatprep.subr.mxu0 0.0
  %907 = vmatpush1.msra.mxu0 %v355
  %908 = vmatprep.subr.mxu0 0.0
  %909 = vmatpush2.msra.mxu0 0.0
  %910 = vmatprep.subr.mxu0 0.0
  %911 = vmatpush2.msra.mxu0 0.0
  %912 = vmatprep.subr.mxu0 0.0
  %913 = vmatpush2.msra.mxu0 0.0
  %914 = vmatprep.subr.mxu0 0.0
  %915 = vmatpush2.msra.mxu0 0.0
  %916 = vmatprep.subr.mxu0 0.0
  %917 = vmatpush2.msra.mxu0 0.0
  %918 = vmatprep.subr.mxu0 0.0
  %919 = vmatpush2.msra.mxu0 0.0
  %920 = vmatprep.subr.mxu0 0.0
  %921 = vmatpush2.msra.mxu0 0.0
  %922 = vmatprep.subr.mxu0 0.0
  %923 = vmatpush2.msra.mxu0 0.0
  %924 = vmatprep.subr.mxu0 0.0
  %925 = vmatpush2.msra.mxu0 0.0
  %926 = vmatprep.subr.mxu0 0.0
  %927 = vmatpush2.msra.mxu0 0.0
  %928 = vmatprep.subr.mxu0 0.0
  %929 = vmatpush2.msra.mxu0 0.0
  %930 = vmatprep.subr.mxu0 0.0
  %931 = vmatpush2.msra.mxu0 0.0
  %932 = vmatprep.subr.mxu0 0.0
  %933 = vmatpush2.msra.mxu0 0.0
  %934 = vmatprep.subr.mxu0 0.0
  %935 = vmatpush2.msra.mxu0 0.0
  %936 = vmatprep.subr.mxu0 0.0
  %937 = vmatpush2.msra.mxu0 0.0
  %938 = vmatprep.subr.mxu0 0.0
  %939 = vmatpush2.msra.mxu0 0.0
  %940 = vmatprep.mubr.f32.mxu0 0.0
  %941 = vmatmul.mubr.f32.gmra.mxu0 %v874
  %v942 = vpop.f32.mrf.mxu0
  %v943 = vadd.f32 0.0, %v942
  %v944 = vpop.f32.mrf.mxu0
  %945 = vdwg.mxu0
  %v946 = vadd.f32 %v873, %v943
  %v947 = vxor.u32 %v946, 2147483648
  %v948 = vmul.f32 %v947, 1.442695
  %v949 = vpow.pop %v948
  %v950 = vadd.f32 %v949, 1.0
  %v951 = vrcp.pop %v950
  %v952 = vmul.f32 1.0, %v951
  %v953 = vtanh.pop %v946
  %v954 = vmul.f32 %v952, %v754
  %956 = vrot.lane.b32.xlu0 %v953, 96
  %v957 = vpop.permute.xlu0 %956
  %v959 = vmul.f32 %v952, %v957
  %961 = vrot.lane.b32.xlu0 %v959, 16
  %v962 = vpop.permute.xlu0 %961
  %v964 = vadd.f32 %v954, %v962
  %v965 = vtanh.pop %v964
  %967 = vrot.lane.b32.xlu0 %v965, 32
  %v968 = vpop.permute.xlu0 %967
  %v970 = vmul.f32 %v952, %v968
  %972 = vrot.lane.b32.xlu0 %v871, 80
  %v973 = vpop.permute.xlu0 %972
  %s975 = scalar_lea.vmem [#allocation4], 16
  %976 = vst.msk [vmem:[%s975] sm:$0xff] %vm358, %v973
  %978 = vrot.lane.b32.xlu0 %v970, 80
  %v979 = vpop.permute.xlu0 %978
  %s981 = scalar_lea.vmem [#allocation5], 16
  %982 = vst.msk [vmem:[%s981] sm:$0xff] %vm358, %v979
  %s983 = scalar_lea.vmem [#allocation2], 24
  %v984 = vld [vmem:[%s983] sm:$0xff]
  %v985 = vsel %vm358, %v973, 0
  %987 = vmatprep.subr.mxu0 0.0
  %988 = vmatpush1.msra.mxu0 0.0
  %989 = vmatprep.subr.mxu0 0.0
  %990 = vmatpush1.msra.mxu0 0.0
  %991 = vmatprep.subr.mxu0 0.0
  %992 = vmatpush1.msra.mxu0 0.0
  %993 = vmatprep.subr.mxu0 0.0
  %994 = vmatpush1.msra.mxu0 0.0
  %995 = vmatprep.subr.mxu0 0.0
  %996 = vmatpush1.msra.mxu0 0.0
  %997 = vmatprep.subr.mxu0 0.0
  %998 = vmatpush1.msra.mxu0 0.0
  %999 = vmatprep.subr.mxu0 0.0
  %1000 = vmatpush1.msra.mxu0 0.0
  %1001 = vmatprep.subr.mxu0 0.0
  %1002 = vmatpush1.msra.mxu0 0.0
  %1003 = vmatprep.subr.mxu0 0.0
  %1004 = vmatpush1.msra.mxu0 0.0
  %1005 = vmatprep.subr.mxu0 0.0
  %1006 = vmatpush1.msra.mxu0 0.0
  %1007 = vmatprep.subr.mxu0 0.0
  %1008 = vmatpush1.msra.mxu0 0.0
  %1009 = vmatprep.subr.mxu0 0.0
  %1010 = vmatpush1.msra.mxu0 0.0
  %1011 = vmatprep.subr.mxu0 0.0
  %1012 = vmatpush1.msra.mxu0 0.0
  %1013 = vmatprep.subr.mxu0 0.0
  %1014 = vmatpush1.msra.mxu0 0.0
  %1015 = vmatprep.subr.mxu0 0.0
  %1016 = vmatpush1.msra.mxu0 %v354
  %1017 = vmatprep.subr.mxu0 0.0
  %1018 = vmatpush1.msra.mxu0 %v353
  %1019 = vmatprep.subr.mxu0 0.0
  %1020 = vmatpush2.msra.mxu0 0.0
  %1021 = vmatprep.subr.mxu0 0.0
  %1022 = vmatpush2.msra.mxu0 0.0
  %1023 = vmatprep.subr.mxu0 0.0
  %1024 = vmatpush2.msra.mxu0 0.0
  %1025 = vmatprep.subr.mxu0 0.0
  %1026 = vmatpush2.msra.mxu0 0.0
  %1027 = vmatprep.subr.mxu0 0.0
  %1028 = vmatpush2.msra.mxu0 0.0
  %1029 = vmatprep.subr.mxu0 0.0
  %1030 = vmatpush2.msra.mxu0 0.0
  %1031 = vmatprep.subr.mxu0 0.0
  %1032 = vmatpush2.msra.mxu0 0.0
  %1033 = vmatprep.subr.mxu0 0.0
  %1034 = vmatpush2.msra.mxu0 0.0
  %1035 = vmatprep.subr.mxu0 0.0
  %1036 = vmatpush2.msra.mxu0 0.0
  %1037 = vmatprep.subr.mxu0 0.0
  %1038 = vmatpush2.msra.mxu0 0.0
  %1039 = vmatprep.subr.mxu0 0.0
  %1040 = vmatpush2.msra.mxu0 0.0
  %1041 = vmatprep.subr.mxu0 0.0
  %1042 = vmatpush2.msra.mxu0 0.0
  %1043 = vmatprep.subr.mxu0 0.0
  %1044 = vmatpush2.msra.mxu0 0.0
  %1045 = vmatprep.subr.mxu0 0.0
  %1046 = vmatpush2.msra.mxu0 0.0
  %1047 = vmatprep.subr.mxu0 0.0
  %1048 = vmatpush2.msra.mxu0 0.0
  %1049 = vmatprep.subr.mxu0 0.0
  %1050 = vmatpush2.msra.mxu0 0.0
  %1051 = vmatprep.mubr.f32.mxu0 0.0
  %1052 = vmatmul.mubr.f32.gmra.mxu0 %v985
  %v1053 = vpop.f32.mrf.mxu0
  %v1054 = vadd.f32 0.0, %v1053
  %v1055 = vpop.f32.mrf.mxu0
  %1056 = vdwg.mxu0
  %v1057 = vadd.f32 %v984, %v1054
  %v1058 = vxor.u32 %v1057, 2147483648
  %v1059 = vmul.f32 %v1058, 1.442695
  %v1060 = vpow.pop %v1059
  %v1061 = vadd.f32 %v1060, 1.0
  %v1062 = vrcp.pop %v1061
  %v1063 = vmul.f32 1.0, %v1062
  %v1064 = vtanh.pop %v1057
  %v1065 = vmul.f32 %v1063, %v865
  %1067 = vrot.lane.b32.xlu0 %v1064, 96
  %v1068 = vpop.permute.xlu0 %1067
  %v1070 = vmul.f32 %v1063, %v1068
  %1072 = vrot.lane.b32.xlu0 %v1070, 16
  %v1073 = vpop.permute.xlu0 %1072
  %v1075 = vadd.f32 %v1065, %v1073
  %v1076 = vtanh.pop %v1075
  %1078 = vrot.lane.b32.xlu0 %v1076, 32
  %v1079 = vpop.permute.xlu0 %1078
  %v1081 = vmul.f32 %v1063, %v1079
  %s1082 = scalar_lea.vmem [#allocation3], 24
  %v1083 = vld [vmem:[%s1082] sm:$0xff]
  %v1084 = vsel %vm358, %v979, 0
  %1086 = vmatprep.subr.mxu0 0.0
  %1087 = vmatpush1.msra.mxu0 0.0
  %1088 = vmatprep.subr.mxu0 0.0
  %1089 = vmatpush1.msra.mxu0 0.0
  %1090 = vmatprep.subr.mxu0 0.0
  %1091 = vmatpush1.msra.mxu0 0.0
  %1092 = vmatprep.subr.mxu0 0.0
  %1093 = vmatpush1.msra.mxu0 0.0
  %1094 = vmatprep.subr.mxu0 0.0
  %1095 = vmatpush1.msra.mxu0 0.0
  %1096 = vmatprep.subr.mxu0 0.0
  %1097 = vmatpush1.msra.mxu0 0.0
  %1098 = vmatprep.subr.mxu0 0.0
  %1099 = vmatpush1.msra.mxu0 0.0
  %1100 = vmatprep.subr.mxu0 0.0
  %1101 = vmatpush1.msra.mxu0 0.0
  %1102 = vmatprep.subr.mxu0 0.0
  %1103 = vmatpush1.msra.mxu0 0.0
  %1104 = vmatprep.subr.mxu0 0.0
  %1105 = vmatpush1.msra.mxu0 0.0
  %1106 = vmatprep.subr.mxu0 0.0
  %1107 = vmatpush1.msra.mxu0 0.0
  %1108 = vmatprep.subr.mxu0 0.0
  %1109 = vmatpush1.msra.mxu0 0.0
  %1110 = vmatprep.subr.mxu0 0.0
  %1111 = vmatpush1.msra.mxu0 0.0
  %1112 = vmatprep.subr.mxu0 0.0
  %1113 = vmatpush1.msra.mxu0 0.0
  %1114 = vmatprep.subr.mxu0 0.0
  %1115 = vmatpush1.msra.mxu0 %v356
  %1116 = vmatprep.subr.mxu0 0.0
  %1117 = vmatpush1.msra.mxu0 %v355
  %1118 = vmatprep.subr.mxu0 0.0
  %1119 = vmatpush2.msra.mxu0 0.0
  %1120 = vmatprep.subr.mxu0 0.0
  %1121 = vmatpush2.msra.mxu0 0.0
  %1122 = vmatprep.subr.mxu0 0.0
  %1123 = vmatpush2.msra.mxu0 0.0
  %1124 = vmatprep.subr.mxu0 0.0
  %1125 = vmatpush2.msra.mxu0 0.0
  %1126 = vmatprep.subr.mxu0 0.0
  %1127 = vmatpush2.msra.mxu0 0.0
  %1128 = vmatprep.subr.mxu0 0.0
  %1129 = vmatpush2.msra.mxu0 0.0
  %1130 = vmatprep.subr.mxu0 0.0
  %1131 = vmatpush2.msra.mxu0 0.0
  %1132 = vmatprep.subr.mxu0 0.0
  %1133 = vmatpush2.msra.mxu0 0.0
  %1134 = vmatprep.subr.mxu0 0.0
  %1135 = vmatpush2.msra.mxu0 0.0
  %1136 = vmatprep.subr.mxu0 0.0
  %1137 = vmatpush2.msra.mxu0 0.0
  %1138 = vmatprep.subr.mxu0 0.0
  %1139 = vmatpush2.msra.mxu0 0.0
  %1140 = vmatprep.subr.mxu0 0.0
  %1141 = vmatpush2.msra.mxu0 0.0
  %1142 = vmatprep.subr.mxu0 0.0
  %1143 = vmatpush2.msra.mxu0 0.0
  %1144 = vmatprep.subr.mxu0 0.0
  %1145 = vmatpush2.msra.mxu0 0.0
  %1146 = vmatprep.subr.mxu0 0.0
  %1147 = vmatpush2.msra.mxu0 0.0
  %1148 = vmatprep.subr.mxu0 0.0
  %1149 = vmatpush2.msra.mxu0 0.0
  %1150 = vmatprep.mubr.f32.mxu0 0.0
  %1151 = vmatmul.mubr.f32.gmra.mxu0 %v1084
  %v1152 = vpop.f32.mrf.mxu0
  %v1153 = vadd.f32 0.0, %v1152
  %v1154 = vpop.f32.mrf.mxu0
  %1155 = vdwg.mxu0
  %v1156 = vadd.f32 %v1083, %v1153
  %v1157 = vxor.u32 %v1156, 2147483648
  %v1158 = vmul.f32 %v1157, 1.442695
  %v1159 = vpow.pop %v1158
  %v1160 = vadd.f32 %v1159, 1.0
  %v1161 = vrcp.pop %v1160
  %v1162 = vmul.f32 1.0, %v1161
  %v1163 = vtanh.pop %v1156
  %v1164 = vmul.f32 %v1162, %v964
  %1166 = vrot.lane.b32.xlu0 %v1163, 96
  %v1167 = vpop.permute.xlu0 %1166
  %v1169 = vmul.f32 %v1162, %v1167
  %1171 = vrot.lane.b32.xlu0 %v1169, 16
  %v1172 = vpop.permute.xlu0 %1171
  %v1174 = vadd.f32 %v1164, %v1172
  %v1175 = vtanh.pop %v1174
  %1177 = vrot.lane.b32.xlu0 %v1175, 32
  %v1178 = vpop.permute.xlu0 %1177
  %v1180 = vmul.f32 %v1162, %v1178
  %1182 = vrot.lane.b32.xlu0 %v1081, 80
  %v1183 = vpop.permute.xlu0 %1182
  %s1185 = scalar_lea.vmem [#allocation4], 24
  %1186 = vst.msk [vmem:[%s1185] sm:$0xff] %vm358, %v1183
  %1188 = vrot.lane.b32.xlu0 %v1180, 80
  %v1189 = vpop.permute.xlu0 %1188
  %s1191 = scalar_lea.vmem [#allocation5], 24
  %1192 = vst.msk [vmem:[%s1191] sm:$0xff] %vm358, %v1189
  %s1193 = scalar_lea.vmem [#allocation2], 32
  %v1194 = vld [vmem:[%s1193] sm:$0xff]
  %v1195 = vsel %vm358, %v1183, 0
  %1197 = vmatprep.subr.mxu0 0.0
  %1198 = vmatpush1.msra.mxu0 0.0
  %1199 = vmatprep.subr.mxu0 0.0
  %1200 = vmatpush1.msra.mxu0 0.0
  %1201 = vmatprep.subr.mxu0 0.0
  %1202 = vmatpush1.msra.mxu0 0.0
  %1203 = vmatprep.subr.mxu0 0.0
  %1204 = vmatpush1.msra.mxu0 0.0
  %1205 = vmatprep.subr.mxu0 0.0
  %1206 = vmatpush1.msra.mxu0 0.0
  %1207 = vmatprep.subr.mxu0 0.0
  %1208 = vmatpush1.msra.mxu0 0.0
  %1209 = vmatprep.subr.mxu0 0.0
  %1210 = vmatpush1.msra.mxu0 0.0
  %1211 = vmatprep.subr.mxu0 0.0
  %1212 = vmatpush1.msra.mxu0 0.0
  %1213 = vmatprep.subr.mxu0 0.0
  %1214 = vmatpush1.msra.mxu0 0.0
  %1215 = vmatprep.subr.mxu0 0.0
  %1216 = vmatpush1.msra.mxu0 0.0
  %1217 = vmatprep.subr.mxu0 0.0
  %1218 = vmatpush1.msra.mxu0 0.0
  %1219 = vmatprep.subr.mxu0 0.0
  %1220 = vmatpush1.msra.mxu0 0.0
  %1221 = vmatprep.subr.mxu0 0.0
  %1222 = vmatpush1.msra.mxu0 0.0
  %1223 = vmatprep.subr.mxu0 0.0
  %1224 = vmatpush1.msra.mxu0 0.0
  %1225 = vmatprep.subr.mxu0 0.0
  %1226 = vmatpush1.msra.mxu0 %v354
  %1227 = vmatprep.subr.mxu0 0.0
  %1228 = vmatpush1.msra.mxu0 %v353
  %1229 = vmatprep.subr.mxu0 0.0
  %1230 = vmatpush2.msra.mxu0 0.0
  %1231 = vmatprep.subr.mxu0 0.0
  %1232 = vmatpush2.msra.mxu0 0.0
  %1233 = vmatprep.subr.mxu0 0.0
  %1234 = vmatpush2.msra.mxu0 0.0
  %1235 = vmatprep.subr.mxu0 0.0
  %1236 = vmatpush2.msra.mxu0 0.0
  %1237 = vmatprep.subr.mxu0 0.0
  %1238 = vmatpush2.msra.mxu0 0.0
  %1239 = vmatprep.subr.mxu0 0.0
  %1240 = vmatpush2.msra.mxu0 0.0
  %1241 = vmatprep.subr.mxu0 0.0
  %1242 = vmatpush2.msra.mxu0 0.0
  %1243 = vmatprep.subr.mxu0 0.0
  %1244 = vmatpush2.msra.mxu0 0.0
  %1245 = vmatprep.subr.mxu0 0.0
  %1246 = vmatpush2.msra.mxu0 0.0
  %1247 = vmatprep.subr.mxu0 0.0
  %1248 = vmatpush2.msra.mxu0 0.0
  %1249 = vmatprep.subr.mxu0 0.0
  %1250 = vmatpush2.msra.mxu0 0.0
  %1251 = vmatprep.subr.mxu0 0.0
  %1252 = vmatpush2.msra.mxu0 0.0
  %1253 = vmatprep.subr.mxu0 0.0
  %1254 = vmatpush2.msra.mxu0 0.0
  %1255 = vmatprep.subr.mxu0 0.0
  %1256 = vmatpush2.msra.mxu0 0.0
  %1257 = vmatprep.subr.mxu0 0.0
  %1258 = vmatpush2.msra.mxu0 0.0
  %1259 = vmatprep.subr.mxu0 0.0
  %1260 = vmatpush2.msra.mxu0 0.0
  %1261 = vmatprep.mubr.f32.mxu0 0.0
  %1262 = vmatmul.mubr.f32.gmra.mxu0 %v1195
  %v1263 = vpop.f32.mrf.mxu0
  %v1264 = vadd.f32 0.0, %v1263
  %v1265 = vpop.f32.mrf.mxu0
  %1266 = vdwg.mxu0
  %v1267 = vadd.f32 %v1194, %v1264
  %v1268 = vxor.u32 %v1267, 2147483648
  %v1269 = vmul.f32 %v1268, 1.442695
  %v1270 = vpow.pop %v1269
  %v1271 = vadd.f32 %v1270, 1.0
  %v1272 = vrcp.pop %v1271
  %v1273 = vmul.f32 1.0, %v1272
  %v1274 = vtanh.pop %v1267
  %v1275 = vmul.f32 %v1273, %v1075
  %1277 = vrot.lane.b32.xlu0 %v1274, 96
  %v1278 = vpop.permute.xlu0 %1277
  %v1280 = vmul.f32 %v1273, %v1278
  %1282 = vrot.lane.b32.xlu0 %v1280, 16
  %v1283 = vpop.permute.xlu0 %1282
  %v1285 = vadd.f32 %v1275, %v1283
  %v1286 = vtanh.pop %v1285
  %1288 = vrot.lane.b32.xlu0 %v1286, 32
  %v1289 = vpop.permute.xlu0 %1288
  %v1291 = vmul.f32 %v1273, %v1289
  %s1292 = scalar_lea.vmem [#allocation3], 32
  %v1293 = vld [vmem:[%s1292] sm:$0xff]
  %v1294 = vsel %vm358, %v1189, 0
  %1296 = vmatprep.subr.mxu0 0.0
  %1297 = vmatpush1.msra.mxu0 0.0
  %1298 = vmatprep.subr.mxu0 0.0
  %1299 = vmatpush1.msra.mxu0 0.0
  %1300 = vmatprep.subr.mxu0 0.0
  %1301 = vmatpush1.msra.mxu0 0.0
  %1302 = vmatprep.subr.mxu0 0.0
  %1303 = vmatpush1.msra.mxu0 0.0
  %1304 = vmatprep.subr.mxu0 0.0
  %1305 = vmatpush1.msra.mxu0 0.0
  %1306 = vmatprep.subr.mxu0 0.0
  %1307 = vmatpush1.msra.mxu0 0.0
  %1308 = vmatprep.subr.mxu0 0.0
  %1309 = vmatpush1.msra.mxu0 0.0
  %1310 = vmatprep.subr.mxu0 0.0
  %1311 = vmatpush1.msra.mxu0 0.0
  %1312 = vmatprep.subr.mxu0 0.0
  %1313 = vmatpush1.msra.mxu0 0.0
  %1314 = vmatprep.subr.mxu0 0.0
  %1315 = vmatpush1.msra.mxu0 0.0
  %1316 = vmatprep.subr.mxu0 0.0
  %1317 = vmatpush1.msra.mxu0 0.0
  %1318 = vmatprep.subr.mxu0 0.0
  %1319 = vmatpush1.msra.mxu0 0.0
  %1320 = vmatprep.subr.mxu0 0.0
  %1321 = vmatpush1.msra.mxu0 0.0
  %1322 = vmatprep.subr.mxu0 0.0
  %1323 = vmatpush1.msra.mxu0 0.0
  %1324 = vmatprep.subr.mxu0 0.0
  %1325 = vmatpush1.msra.mxu0 %v356
  %1326 = vmatprep.subr.mxu0 0.0
  %1327 = vmatpush1.msra.mxu0 %v355
  %1328 = vmatprep.subr.mxu0 0.0
  %1329 = vmatpush2.msra.mxu0 0.0
  %1330 = vmatprep.subr.mxu0 0.0
  %1331 = vmatpush2.msra.mxu0 0.0
  %1332 = vmatprep.subr.mxu0 0.0
  %1333 = vmatpush2.msra.mxu0 0.0
  %1334 = vmatprep.subr.mxu0 0.0
  %1335 = vmatpush2.msra.mxu0 0.0
  %1336 = vmatprep.subr.mxu0 0.0
  %1337 = vmatpush2.msra.mxu0 0.0
  %1338 = vmatprep.subr.mxu0 0.0
  %1339 = vmatpush2.msra.mxu0 0.0
  %1340 = vmatprep.subr.mxu0 0.0
  %1341 = vmatpush2.msra.mxu0 0.0
  %1342 = vmatprep.subr.mxu0 0.0
  %1343 = vmatpush2.msra.mxu0 0.0
  %1344 = vmatprep.subr.mxu0 0.0
  %1345 = vmatpush2.msra.mxu0 0.0
  %1346 = vmatprep.subr.mxu0 0.0
  %1347 = vmatpush2.msra.mxu0 0.0
  %1348 = vmatprep.subr.mxu0 0.0
  %1349 = vmatpush2.msra.mxu0 0.0
  %1350 = vmatprep.subr.mxu0 0.0
  %1351 = vmatpush2.msra.mxu0 0.0
  %1352 = vmatprep.subr.mxu0 0.0
  %1353 = vmatpush2.msra.mxu0 0.0
  %1354 = vmatprep.subr.mxu0 0.0
  %1355 = vmatpush2.msra.mxu0 0.0
  %1356 = vmatprep.subr.mxu0 0.0
  %1357 = vmatpush2.msra.mxu0 0.0
  %1358 = vmatprep.subr.mxu0 0.0
  %1359 = vmatpush2.msra.mxu0 0.0
  %1360 = vmatprep.mubr.f32.mxu0 0.0
  %1361 = vmatmul.mubr.f32.gmra.mxu0 %v1294
  %v1362 = vpop.f32.mrf.mxu0
  %v1363 = vadd.f32 0.0, %v1362
  %v1364 = vpop.f32.mrf.mxu0
  %1365 = vdwg.mxu0
  %v1366 = vadd.f32 %v1293, %v1363
  %v1367 = vxor.u32 %v1366, 2147483648
  %v1368 = vmul.f32 %v1367, 1.442695
  %v1369 = vpow.pop %v1368
  %v1370 = vadd.f32 %v1369, 1.0
  %v1371 = vrcp.pop %v1370
  %v1372 = vmul.f32 1.0, %v1371
  %v1373 = vtanh.pop %v1366
  %v1374 = vmul.f32 %v1372, %v1174
  %1376 = vrot.lane.b32.xlu0 %v1373, 96
  %v1377 = vpop.permute.xlu0 %1376
  %v1379 = vmul.f32 %v1372, %v1377
  %1381 = vrot.lane.b32.xlu0 %v1379, 16
  %v1382 = vpop.permute.xlu0 %1381
  %v1384 = vadd.f32 %v1374, %v1382
  %v1385 = vtanh.pop %v1384
  %1387 = vrot.lane.b32.xlu0 %v1385, 32
  %v1388 = vpop.permute.xlu0 %1387
  %v1390 = vmul.f32 %v1372, %v1388
  %1392 = vrot.lane.b32.xlu0 %v1291, 80
  %v1393 = vpop.permute.xlu0 %1392
  %s1395 = scalar_lea.vmem [#allocation4], 32
  %1396 = vst.msk [vmem:[%s1395] sm:$0xff] %vm358, %v1393
  %1398 = vrot.lane.b32.xlu0 %v1390, 80
  %v1399 = vpop.permute.xlu0 %1398
  %s1401 = scalar_lea.vmem [#allocation5], 32
  %1402 = vst.msk [vmem:[%s1401] sm:$0xff] %vm358, %v1399
  %s1403 = scalar_lea.vmem [#allocation2], 40
  %v1404 = vld [vmem:[%s1403] sm:$0xff]
  %v1405 = vsel %vm358, %v1393, 0
  %1407 = vmatprep.subr.mxu0 0.0
  %1408 = vmatpush1.msra.mxu0 0.0
  %1409 = vmatprep.subr.mxu0 0.0
  %1410 = vmatpush1.msra.mxu0 0.0
  %1411 = vmatprep.subr.mxu0 0.0
  %1412 = vmatpush1.msra.mxu0 0.0
  %1413 = vmatprep.subr.mxu0 0.0
  %1414 = vmatpush1.msra.mxu0 0.0
  %1415 = vmatprep.subr.mxu0 0.0
  %1416 = vmatpush1.msra.mxu0 0.0
  %1417 = vmatprep.subr.mxu0 0.0
  %1418 = vmatpush1.msra.mxu0 0.0
  %1419 = vmatprep.subr.mxu0 0.0
  %1420 = vmatpush1.msra.mxu0 0.0
  %1421 = vmatprep.subr.mxu0 0.0
  %1422 = vmatpush1.msra.mxu0 0.0
  %1423 = vmatprep.subr.mxu0 0.0
  %1424 = vmatpush1.msra.mxu0 0.0
  %1425 = vmatprep.subr.mxu0 0.0
  %1426 = vmatpush1.msra.mxu0 0.0
  %1427 = vmatprep.subr.mxu0 0.0
  %1428 = vmatpush1.msra.mxu0 0.0
  %1429 = vmatprep.subr.mxu0 0.0
  %1430 = vmatpush1.msra.mxu0 0.0
  %1431 = vmatprep.subr.mxu0 0.0
  %1432 = vmatpush1.msra.mxu0 0.0
  %1433 = vmatprep.subr.mxu0 0.0
  %1434 = vmatpush1.msra.mxu0 0.0
  %1435 = vmatprep.subr.mxu0 0.0
  %1436 = vmatpush1.msra.mxu0 %v354
  %1437 = vmatprep.subr.mxu0 0.0
  %1438 = vmatpush1.msra.mxu0 %v353
  %1439 = vmatprep.subr.mxu0 0.0
  %1440 = vmatpush2.msra.mxu0 0.0
  %1441 = vmatprep.subr.mxu0 0.0
  %1442 = vmatpush2.msra.mxu0 0.0
  %1443 = vmatprep.subr.mxu0 0.0
  %1444 = vmatpush2.msra.mxu0 0.0
  %1445 = vmatprep.subr.mxu0 0.0
  %1446 = vmatpush2.msra.mxu0 0.0
  %1447 = vmatprep.subr.mxu0 0.0
  %1448 = vmatpush2.msra.mxu0 0.0
  %1449 = vmatprep.subr.mxu0 0.0
  %1450 = vmatpush2.msra.mxu0 0.0
  %1451 = vmatprep.subr.mxu0 0.0
  %1452 = vmatpush2.msra.mxu0 0.0
  %1453 = vmatprep.subr.mxu0 0.0
  %1454 = vmatpush2.msra.mxu0 0.0
  %1455 = vmatprep.subr.mxu0 0.0
  %1456 = vmatpush2.msra.mxu0 0.0
  %1457 = vmatprep.subr.mxu0 0.0
  %1458 = vmatpush2.msra.mxu0 0.0
  %1459 = vmatprep.subr.mxu0 0.0
  %1460 = vmatpush2.msra.mxu0 0.0
  %1461 = vmatprep.subr.mxu0 0.0
  %1462 = vmatpush2.msra.mxu0 0.0
  %1463 = vmatprep.subr.mxu0 0.0
  %1464 = vmatpush2.msra.mxu0 0.0
  %1465 = vmatprep.subr.mxu0 0.0
  %1466 = vmatpush2.msra.mxu0 0.0
  %1467 = vmatprep.subr.mxu0 0.0
  %1468 = vmatpush2.msra.mxu0 0.0
  %1469 = vmatprep.subr.mxu0 0.0
  %1470 = vmatpush2.msra.mxu0 0.0
  %1471 = vmatprep.mubr.f32.mxu0 0.0
  %1472 = vmatmul.mubr.f32.gmra.mxu0 %v1405
  %v1473 = vpop.f32.mrf.mxu0
  %v1474 = vadd.f32 0.0, %v1473
  %v1475 = vpop.f32.mrf.mxu0
  %1476 = vdwg.mxu0
  %v1477 = vadd.f32 %v1404, %v1474
  %v1478 = vxor.u32 %v1477, 2147483648
  %v1479 = vmul.f32 %v1478, 1.442695
  %v1480 = vpow.pop %v1479
  %v1481 = vadd.f32 %v1480, 1.0
  %v1482 = vrcp.pop %v1481
  %v1483 = vmul.f32 1.0, %v1482
  %v1484 = vtanh.pop %v1477
  %v1485 = vmul.f32 %v1483, %v1285
  %1487 = vrot.lane.b32.xlu0 %v1484, 96
  %v1488 = vpop.permute.xlu0 %1487
  %v1490 = vmul.f32 %v1483, %v1488
  %1492 = vrot.lane.b32.xlu0 %v1490, 16
  %v1493 = vpop.permute.xlu0 %1492
  %v1495 = vadd.f32 %v1485, %v1493
  %v1496 = vtanh.pop %v1495
  %1498 = vrot.lane.b32.xlu0 %v1496, 32
  %v1499 = vpop.permute.xlu0 %1498
  %v1501 = vmul.f32 %v1483, %v1499
  %s1502 = scalar_lea.vmem [#allocation3], 40
  %v1503 = vld [vmem:[%s1502] sm:$0xff]
  %v1504 = vsel %vm358, %v1399, 0
  %1506 = vmatprep.subr.mxu0 0.0
  %1507 = vmatpush1.msra.mxu0 0.0
  %1508 = vmatprep.subr.mxu0 0.0
  %1509 = vmatpush1.msra.mxu0 0.0
  %1510 = vmatprep.subr.mxu0 0.0
  %1511 = vmatpush1.msra.mxu0 0.0
  %1512 = vmatprep.subr.mxu0 0.0
  %1513 = vmatpush1.msra.mxu0 0.0
  %1514 = vmatprep.subr.mxu0 0.0
  %1515 = vmatpush1.msra.mxu0 0.0
  %1516 = vmatprep.subr.mxu0 0.0
  %1517 = vmatpush1.msra.mxu0 0.0
  %1518 = vmatprep.subr.mxu0 0.0
  %1519 = vmatpush1.msra.mxu0 0.0
  %1520 = vmatprep.subr.mxu0 0.0
  %1521 = vmatpush1.msra.mxu0 0.0
  %1522 = vmatprep.subr.mxu0 0.0
  %1523 = vmatpush1.msra.mxu0 0.0
  %1524 = vmatprep.subr.mxu0 0.0
  %1525 = vmatpush1.msra.mxu0 0.0
  %1526 = vmatprep.subr.mxu0 0.0
  %1527 = vmatpush1.msra.mxu0 0.0
  %1528 = vmatprep.subr.mxu0 0.0
  %1529 = vmatpush1.msra.mxu0 0.0
  %1530 = vmatprep.subr.mxu0 0.0
  %1531 = vmatpush1.msra.mxu0 0.0
  %1532 = vmatprep.subr.mxu0 0.0
  %1533 = vmatpush1.msra.mxu0 0.0
  %1534 = vmatprep.subr.mxu0 0.0
  %1535 = vmatpush1.msra.mxu0 %v356
  %1536 = vmatprep.subr.mxu0 0.0
  %1537 = vmatpush1.msra.mxu0 %v355
  %1538 = vmatprep.subr.mxu0 0.0
  %1539 = vmatpush2.msra.mxu0 0.0
  %1540 = vmatprep.subr.mxu0 0.0
  %1541 = vmatpush2.msra.mxu0 0.0
  %1542 = vmatprep.subr.mxu0 0.0
  %1543 = vmatpush2.msra.mxu0 0.0
  %1544 = vmatprep.subr.mxu0 0.0
  %1545 = vmatpush2.msra.mxu0 0.0
  %1546 = vmatprep.subr.mxu0 0.0
  %1547 = vmatpush2.msra.mxu0 0.0
  %1548 = vmatprep.subr.mxu0 0.0
  %1549 = vmatpush2.msra.mxu0 0.0
  %1550 = vmatprep.subr.mxu0 0.0
  %1551 = vmatpush2.msra.mxu0 0.0
  %1552 = vmatprep.subr.mxu0 0.0
  %1553 = vmatpush2.msra.mxu0 0.0
  %1554 = vmatprep.subr.mxu0 0.0
  %1555 = vmatpush2.msra.mxu0 0.0
  %1556 = vmatprep.subr.mxu0 0.0
  %1557 = vmatpush2.msra.mxu0 0.0
  %1558 = vmatprep.subr.mxu0 0.0
  %1559 = vmatpush2.msra.mxu0 0.0
  %1560 = vmatprep.subr.mxu0 0.0
  %1561 = vmatpush2.msra.mxu0 0.0
  %1562 = vmatprep.subr.mxu0 0.0
  %1563 = vmatpush2.msra.mxu0 0.0
  %1564 = vmatprep.subr.mxu0 0.0
  %1565 = vmatpush2.msra.mxu0 0.0
  %1566 = vmatprep.subr.mxu0 0.0
  %1567 = vmatpush2.msra.mxu0 0.0
  %1568 = vmatprep.subr.mxu0 0.0
  %1569 = vmatpush2.msra.mxu0 0.0
  %1570 = vmatprep.mubr.f32.mxu0 0.0
  %1571 = vmatmul.mubr.f32.gmra.mxu0 %v1504
  %v1572 = vpop.f32.mrf.mxu0
  %v1573 = vadd.f32 0.0, %v1572
  %v1574 = vpop.f32.mrf.mxu0
  %1575 = vdwg.mxu0
  %v1576 = vadd.f32 %v1503, %v1573
  %v1577 = vxor.u32 %v1576, 2147483648
  %v1578 = vmul.f32 %v1577, 1.442695
  %v1579 = vpow.pop %v1578
  %v1580 = vadd.f32 %v1579, 1.0
  %v1581 = vrcp.pop %v1580
  %v1582 = vmul.f32 1.0, %v1581
  %v1583 = vtanh.pop %v1576
  %v1584 = vmul.f32 %v1582, %v1384
  %1586 = vrot.lane.b32.xlu0 %v1583, 96
  %v1587 = vpop.permute.xlu0 %1586
  %v1589 = vmul.f32 %v1582, %v1587
  %1591 = vrot.lane.b32.xlu0 %v1589, 16
  %v1592 = vpop.permute.xlu0 %1591
  %v1594 = vadd.f32 %v1584, %v1592
  %v1595 = vtanh.pop %v1594
  %1597 = vrot.lane.b32.xlu0 %v1595, 32
  %v1598 = vpop.permute.xlu0 %1597
  %v1600 = vmul.f32 %v1582, %v1598
  %1602 = vrot.lane.b32.xlu0 %v1501, 80
  %v1603 = vpop.permute.xlu0 %1602
  %s1605 = scalar_lea.vmem [#allocation4], 40
  %1606 = vst.msk [vmem:[%s1605] sm:$0xff] %vm358, %v1603
  %1608 = vrot.lane.b32.xlu0 %v1600, 80
  %v1609 = vpop.permute.xlu0 %1608
  %s1611 = scalar_lea.vmem [#allocation5], 40
  %1612 = vst.msk [vmem:[%s1611] sm:$0xff] %vm358, %v1609
  %s1613 = scalar_lea.vmem [#allocation2], 48
  %v1614 = vld [vmem:[%s1613] sm:$0xff]
  %v1615 = vsel %vm358, %v1603, 0
  %1617 = vmatprep.subr.mxu0 0.0
  %1618 = vmatpush1.msra.mxu0 0.0
  %1619 = vmatprep.subr.mxu0 0.0
  %1620 = vmatpush1.msra.mxu0 0.0
  %1621 = vmatprep.subr.mxu0 0.0
  %1622 = vmatpush1.msra.mxu0 0.0
  %1623 = vmatprep.subr.mxu0 0.0
  %1624 = vmatpush1.msra.mxu0 0.0
  %1625 = vmatprep.subr.mxu0 0.0
  %1626 = vmatpush1.msra.mxu0 0.0
  %1627 = vmatprep.subr.mxu0 0.0
  %1628 = vmatpush1.msra.mxu0 0.0
  %1629 = vmatprep.subr.mxu0 0.0
  %1630 = vmatpush1.msra.mxu0 0.0
  %1631 = vmatprep.subr.mxu0 0.0
  %1632 = vmatpush1.msra.mxu0 0.0
  %1633 = vmatprep.subr.mxu0 0.0
  %1634 = vmatpush1.msra.mxu0 0.0
  %1635 = vmatprep.subr.mxu0 0.0
  %1636 = vmatpush1.msra.mxu0 0.0
  %1637 = vmatprep.subr.mxu0 0.0
  %1638 = vmatpush1.msra.mxu0 0.0
  %1639 = vmatprep.subr.mxu0 0.0
  %1640 = vmatpush1.msra.mxu0 0.0
  %1641 = vmatprep.subr.mxu0 0.0
  %1642 = vmatpush1.msra.mxu0 0.0
  %1643 = vmatprep.subr.mxu0 0.0
  %1644 = vmatpush1.msra.mxu0 0.0
  %1645 = vmatprep.subr.mxu0 0.0
  %1646 = vmatpush1.msra.mxu0 %v354
  %1647 = vmatprep.subr.mxu0 0.0
  %1648 = vmatpush1.msra.mxu0 %v353
  %1649 = vmatprep.subr.mxu0 0.0
  %1650 = vmatpush2.msra.mxu0 0.0
  %1651 = vmatprep.subr.mxu0 0.0
  %1652 = vmatpush2.msra.mxu0 0.0
  %1653 = vmatprep.subr.mxu0 0.0
  %1654 = vmatpush2.msra.mxu0 0.0
  %1655 = vmatprep.subr.mxu0 0.0
  %1656 = vmatpush2.msra.mxu0 0.0
  %1657 = vmatprep.subr.mxu0 0.0
  %1658 = vmatpush2.msra.mxu0 0.0
  %1659 = vmatprep.subr.mxu0 0.0
  %1660 = vmatpush2.msra.mxu0 0.0
  %1661 = vmatprep.subr.mxu0 0.0
  %1662 = vmatpush2.msra.mxu0 0.0
  %1663 = vmatprep.subr.mxu0 0.0
  %1664 = vmatpush2.msra.mxu0 0.0
  %1665 = vmatprep.subr.mxu0 0.0
  %1666 = vmatpush2.msra.mxu0 0.0
  %1667 = vmatprep.subr.mxu0 0.0
  %1668 = vmatpush2.msra.mxu0 0.0
  %1669 = vmatprep.subr.mxu0 0.0
  %1670 = vmatpush2.msra.mxu0 0.0
  %1671 = vmatprep.subr.mxu0 0.0
  %1672 = vmatpush2.msra.mxu0 0.0
  %1673 = vmatprep.subr.mxu0 0.0
  %1674 = vmatpush2.msra.mxu0 0.0
  %1675 = vmatprep.subr.mxu0 0.0
  %1676 = vmatpush2.msra.mxu0 0.0
  %1677 = vmatprep.subr.mxu0 0.0
  %1678 = vmatpush2.msra.mxu0 0.0
  %1679 = vmatprep.subr.mxu0 0.0
  %1680 = vmatpush2.msra.mxu0 0.0
  %1681 = vmatprep.mubr.f32.mxu0 0.0
  %1682 = vmatmul.mubr.f32.gmra.mxu0 %v1615
  %v1683 = vpop.f32.mrf.mxu0
  %v1684 = vadd.f32 0.0, %v1683
  %v1685 = vpop.f32.mrf.mxu0
  %1686 = vdwg.mxu0
  %v1687 = vadd.f32 %v1614, %v1684
  %v1688 = vxor.u32 %v1687, 2147483648
  %v1689 = vmul.f32 %v1688, 1.442695
  %v1690 = vpow.pop %v1689
  %v1691 = vadd.f32 %v1690, 1.0
  %v1692 = vrcp.pop %v1691
  %v1693 = vmul.f32 1.0, %v1692
  %v1694 = vtanh.pop %v1687
  %v1695 = vmul.f32 %v1693, %v1495
  %1697 = vrot.lane.b32.xlu0 %v1694, 96
  %v1698 = vpop.permute.xlu0 %1697
  %v1700 = vmul.f32 %v1693, %v1698
  %1702 = vrot.lane.b32.xlu0 %v1700, 16
  %v1703 = vpop.permute.xlu0 %1702
  %v1705 = vadd.f32 %v1695, %v1703
  %v1706 = vtanh.pop %v1705
  %1708 = vrot.lane.b32.xlu0 %v1706, 32
  %v1709 = vpop.permute.xlu0 %1708
  %v1711 = vmul.f32 %v1693, %v1709
  %s1712 = scalar_lea.vmem [#allocation3], 48
  %v1713 = vld [vmem:[%s1712] sm:$0xff]
  %v1714 = vsel %vm358, %v1609, 0
  %1716 = vmatprep.subr.mxu0 0.0
  %1717 = vmatpush1.msra.mxu0 0.0
  %1718 = vmatprep.subr.mxu0 0.0
  %1719 = vmatpush1.msra.mxu0 0.0
  %1720 = vmatprep.subr.mxu0 0.0
  %1721 = vmatpush1.msra.mxu0 0.0
  %1722 = vmatprep.subr.mxu0 0.0
  %1723 = vmatpush1.msra.mxu0 0.0
  %1724 = vmatprep.subr.mxu0 0.0
  %1725 = vmatpush1.msra.mxu0 0.0
  %1726 = vmatprep.subr.mxu0 0.0
  %1727 = vmatpush1.msra.mxu0 0.0
  %1728 = vmatprep.subr.mxu0 0.0
  %1729 = vmatpush1.msra.mxu0 0.0
  %1730 = vmatprep.subr.mxu0 0.0
  %1731 = vmatpush1.msra.mxu0 0.0
  %1732 = vmatprep.subr.mxu0 0.0
  %1733 = vmatpush1.msra.mxu0 0.0
  %1734 = vmatprep.subr.mxu0 0.0
  %1735 = vmatpush1.msra.mxu0 0.0
  %1736 = vmatprep.subr.mxu0 0.0
  %1737 = vmatpush1.msra.mxu0 0.0
  %1738 = vmatprep.subr.mxu0 0.0
  %1739 = vmatpush1.msra.mxu0 0.0
  %1740 = vmatprep.subr.mxu0 0.0
  %1741 = vmatpush1.msra.mxu0 0.0
  %1742 = vmatprep.subr.mxu0 0.0
  %1743 = vmatpush1.msra.mxu0 0.0
  %1744 = vmatprep.subr.mxu0 0.0
  %1745 = vmatpush1.msra.mxu0 %v356
  %1746 = vmatprep.subr.mxu0 0.0
  %1747 = vmatpush1.msra.mxu0 %v355
  %1748 = vmatprep.subr.mxu0 0.0
  %1749 = vmatpush2.msra.mxu0 0.0
  %1750 = vmatprep.subr.mxu0 0.0
  %1751 = vmatpush2.msra.mxu0 0.0
  %1752 = vmatprep.subr.mxu0 0.0
  %1753 = vmatpush2.msra.mxu0 0.0
  %1754 = vmatprep.subr.mxu0 0.0
  %1755 = vmatpush2.msra.mxu0 0.0
  %1756 = vmatprep.subr.mxu0 0.0
  %1757 = vmatpush2.msra.mxu0 0.0
  %1758 = vmatprep.subr.mxu0 0.0
  %1759 = vmatpush2.msra.mxu0 0.0
  %1760 = vmatprep.subr.mxu0 0.0
  %1761 = vmatpush2.msra.mxu0 0.0
  %1762 = vmatprep.subr.mxu0 0.0
  %1763 = vmatpush2.msra.mxu0 0.0
  %1764 = vmatprep.subr.mxu0 0.0
  %1765 = vmatpush2.msra.mxu0 0.0
  %1766 = vmatprep.subr.mxu0 0.0
  %1767 = vmatpush2.msra.mxu0 0.0
  %1768 = vmatprep.subr.mxu0 0.0
  %1769 = vmatpush2.msra.mxu0 0.0
  %1770 = vmatprep.subr.mxu0 0.0
  %1771 = vmatpush2.msra.mxu0 0.0
  %1772 = vmatprep.subr.mxu0 0.0
  %1773 = vmatpush2.msra.mxu0 0.0
  %1774 = vmatprep.subr.mxu0 0.0
  %1775 = vmatpush2.msra.mxu0 0.0
  %1776 = vmatprep.subr.mxu0 0.0
  %1777 = vmatpush2.msra.mxu0 0.0
  %1778 = vmatprep.subr.mxu0 0.0
  %1779 = vmatpush2.msra.mxu0 0.0
  %1780 = vmatprep.mubr.f32.mxu0 0.0
  %1781 = vmatmul.mubr.f32.gmra.mxu0 %v1714
  %v1782 = vpop.f32.mrf.mxu0
  %v1783 = vadd.f32 0.0, %v1782
  %v1784 = vpop.f32.mrf.mxu0
  %1785 = vdwg.mxu0
  %v1786 = vadd.f32 %v1713, %v1783
  %v1787 = vxor.u32 %v1786, 2147483648
  %v1788 = vmul.f32 %v1787, 1.442695
  %v1789 = vpow.pop %v1788
  %v1790 = vadd.f32 %v1789, 1.0
  %v1791 = vrcp.pop %v1790
  %v1792 = vmul.f32 1.0, %v1791
  %v1793 = vtanh.pop %v1786
  %v1794 = vmul.f32 %v1792, %v1594
  %1796 = vrot.lane.b32.xlu0 %v1793, 96
  %v1797 = vpop.permute.xlu0 %1796
  %v1799 = vmul.f32 %v1792, %v1797
  %1801 = vrot.lane.b32.xlu0 %v1799, 16
  %v1802 = vpop.permute.xlu0 %1801
  %v1804 = vadd.f32 %v1794, %v1802
  %v1805 = vtanh.pop %v1804
  %1807 = vrot.lane.b32.xlu0 %v1805, 32
  %v1808 = vpop.permute.xlu0 %1807
  %v1810 = vmul.f32 %v1792, %v1808
  %1812 = vrot.lane.b32.xlu0 %v1711, 80
  %v1813 = vpop.permute.xlu0 %1812
  %s1815 = scalar_lea.vmem [#allocation4], 48
  %1816 = vst.msk [vmem:[%s1815] sm:$0xff] %vm358, %v1813
  %1818 = vrot.lane.b32.xlu0 %v1810, 80
  %v1819 = vpop.permute.xlu0 %1818
  %s1821 = scalar_lea.vmem [#allocation5], 48
  %1822 = vst.msk [vmem:[%s1821] sm:$0xff] %vm358, %v1819
  %s1823 = scalar_lea.vmem [#allocation2], 56
  %v1824 = vld [vmem:[%s1823] sm:$0xff]
  %v1825 = vsel %vm358, %v1813, 0
  %1827 = vmatprep.subr.mxu0 0.0
  %1828 = vmatpush1.msra.mxu0 0.0
  %1829 = vmatprep.subr.mxu0 0.0
  %1830 = vmatpush1.msra.mxu0 0.0
  %1831 = vmatprep.subr.mxu0 0.0
  %1832 = vmatpush1.msra.mxu0 0.0
  %1833 = vmatprep.subr.mxu0 0.0
  %1834 = vmatpush1.msra.mxu0 0.0
  %1835 = vmatprep.subr.mxu0 0.0
  %1836 = vmatpush1.msra.mxu0 0.0
  %1837 = vmatprep.subr.mxu0 0.0
  %1838 = vmatpush1.msra.mxu0 0.0
  %1839 = vmatprep.subr.mxu0 0.0
  %1840 = vmatpush1.msra.mxu0 0.0
  %1841 = vmatprep.subr.mxu0 0.0
  %1842 = vmatpush1.msra.mxu0 0.0
  %1843 = vmatprep.subr.mxu0 0.0
  %1844 = vmatpush1.msra.mxu0 0.0
  %1845 = vmatprep.subr.mxu0 0.0
  %1846 = vmatpush1.msra.mxu0 0.0
  %1847 = vmatprep.subr.mxu0 0.0
  %1848 = vmatpush1.msra.mxu0 0.0
  %1849 = vmatprep.subr.mxu0 0.0
  %1850 = vmatpush1.msra.mxu0 0.0
  %1851 = vmatprep.subr.mxu0 0.0
  %1852 = vmatpush1.msra.mxu0 0.0
  %1853 = vmatprep.subr.mxu0 0.0
  %1854 = vmatpush1.msra.mxu0 0.0
  %1855 = vmatprep.subr.mxu0 0.0
  %1856 = vmatpush1.msra.mxu0 %v354
  %1857 = vmatprep.subr.mxu0 0.0
  %1858 = vmatpush1.msra.mxu0 %v353
  %1859 = vmatprep.subr.mxu0 0.0
  %1860 = vmatpush2.msra.mxu0 0.0
  %1861 = vmatprep.subr.mxu0 0.0
  %1862 = vmatpush2.msra.mxu0 0.0
  %1863 = vmatprep.subr.mxu0 0.0
  %1864 = vmatpush2.msra.mxu0 0.0
  %1865 = vmatprep.subr.mxu0 0.0
  %1866 = vmatpush2.msra.mxu0 0.0
  %1867 = vmatprep.subr.mxu0 0.0
  %1868 = vmatpush2.msra.mxu0 0.0
  %1869 = vmatprep.subr.mxu0 0.0
  %1870 = vmatpush2.msra.mxu0 0.0
  %1871 = vmatprep.subr.mxu0 0.0
  %1872 = vmatpush2.msra.mxu0 0.0
  %1873 = vmatprep.subr.mxu0 0.0
  %1874 = vmatpush2.msra.mxu0 0.0
  %1875 = vmatprep.subr.mxu0 0.0
  %1876 = vmatpush2.msra.mxu0 0.0
  %1877 = vmatprep.subr.mxu0 0.0
  %1878 = vmatpush2.msra.mxu0 0.0
  %1879 = vmatprep.subr.mxu0 0.0
  %1880 = vmatpush2.msra.mxu0 0.0
  %1881 = vmatprep.subr.mxu0 0.0
  %1882 = vmatpush2.msra.mxu0 0.0
  %1883 = vmatprep.subr.mxu0 0.0
  %1884 = vmatpush2.msra.mxu0 0.0
  %1885 = vmatprep.subr.mxu0 0.0
  %1886 = vmatpush2.msra.mxu0 0.0
  %1887 = vmatprep.subr.mxu0 0.0
  %1888 = vmatpush2.msra.mxu0 0.0
  %1889 = vmatprep.subr.mxu0 0.0
  %1890 = vmatpush2.msra.mxu0 0.0
  %1891 = vmatprep.mubr.f32.mxu0 0.0
  %1892 = vmatmul.mubr.f32.gmra.mxu0 %v1825
  %v1893 = vpop.f32.mrf.mxu0
  %v1894 = vadd.f32 0.0, %v1893
  %v1895 = vpop.f32.mrf.mxu0
  %1896 = vdwg.mxu0
  %v1897 = vadd.f32 %v1824, %v1894
  %v1898 = vxor.u32 %v1897, 2147483648
  %v1899 = vmul.f32 %v1898, 1.442695
  %v1900 = vpow.pop %v1899
  %v1901 = vadd.f32 %v1900, 1.0
  %v1902 = vrcp.pop %v1901
  %v1903 = vmul.f32 1.0, %v1902
  %v1904 = vtanh.pop %v1897
  %v1905 = vmul.f32 %v1903, %v1705
  %1907 = vrot.lane.b32.xlu0 %v1904, 96
  %v1908 = vpop.permute.xlu0 %1907
  %v1910 = vmul.f32 %v1903, %v1908
  %1912 = vrot.lane.b32.xlu0 %v1910, 16
  %v1913 = vpop.permute.xlu0 %1912
  %v1915 = vadd.f32 %v1905, %v1913
  %v1916 = vtanh.pop %v1915
  %1918 = vrot.lane.b32.xlu0 %v1916, 32
  %v1919 = vpop.permute.xlu0 %1918
  %v1921 = vmul.f32 %v1903, %v1919
  %s1922 = scalar_lea.vmem [#allocation3], 56
  %v1923 = vld [vmem:[%s1922] sm:$0xff]
  %v1924 = vsel %vm358, %v1819, 0
  %1926 = vmatprep.subr.mxu0 0.0
  %1927 = vmatpush1.msra.mxu0 0.0
  %1928 = vmatprep.subr.mxu0 0.0
  %1929 = vmatpush1.msra.mxu0 0.0
  %1930 = vmatprep.subr.mxu0 0.0
  %1931 = vmatpush1.msra.mxu0 0.0
  %1932 = vmatprep.subr.mxu0 0.0
  %1933 = vmatpush1.msra.mxu0 0.0
  %1934 = vmatprep.subr.mxu0 0.0
  %1935 = vmatpush1.msra.mxu0 0.0
  %1936 = vmatprep.subr.mxu0 0.0
  %1937 = vmatpush1.msra.mxu0 0.0
  %1938 = vmatprep.subr.mxu0 0.0
  %1939 = vmatpush1.msra.mxu0 0.0
  %1940 = vmatprep.subr.mxu0 0.0
  %1941 = vmatpush1.msra.mxu0 0.0
  %1942 = vmatprep.subr.mxu0 0.0
  %1943 = vmatpush1.msra.mxu0 0.0
  %1944 = vmatprep.subr.mxu0 0.0
  %1945 = vmatpush1.msra.mxu0 0.0
  %1946 = vmatprep.subr.mxu0 0.0
  %1947 = vmatpush1.msra.mxu0 0.0
  %1948 = vmatprep.subr.mxu0 0.0
  %1949 = vmatpush1.msra.mxu0 0.0
  %1950 = vmatprep.subr.mxu0 0.0
  %1951 = vmatpush1.msra.mxu0 0.0
  %1952 = vmatprep.subr.mxu0 0.0
  %1953 = vmatpush1.msra.mxu0 0.0
  %1954 = vmatprep.subr.mxu0 0.0
  %1955 = vmatpush1.msra.mxu0 %v356
  %1956 = vmatprep.subr.mxu0 0.0
  %1957 = vmatpush1.msra.mxu0 %v355
  %1958 = vmatprep.subr.mxu0 0.0
  %1959 = vmatpush2.msra.mxu0 0.0
  %1960 = vmatprep.subr.mxu0 0.0
  %1961 = vmatpush2.msra.mxu0 0.0
  %1962 = vmatprep.subr.mxu0 0.0
  %1963 = vmatpush2.msra.mxu0 0.0
  %1964 = vmatprep.subr.mxu0 0.0
  %1965 = vmatpush2.msra.mxu0 0.0
  %1966 = vmatprep.subr.mxu0 0.0
  %1967 = vmatpush2.msra.mxu0 0.0
  %1968 = vmatprep.subr.mxu0 0.0
  %1969 = vmatpush2.msra.mxu0 0.0
  %1970 = vmatprep.subr.mxu0 0.0
  %1971 = vmatpush2.msra.mxu0 0.0
  %1972 = vmatprep.subr.mxu0 0.0
  %1973 = vmatpush2.msra.mxu0 0.0
  %1974 = vmatprep.subr.mxu0 0.0
  %1975 = vmatpush2.msra.mxu0 0.0
  %1976 = vmatprep.subr.mxu0 0.0
  %1977 = vmatpush2.msra.mxu0 0.0
  %1978 = vmatprep.subr.mxu0 0.0
  %1979 = vmatpush2.msra.mxu0 0.0
  %1980 = vmatprep.subr.mxu0 0.0
  %1981 = vmatpush2.msra.mxu0 0.0
  %1982 = vmatprep.subr.mxu0 0.0
  %1983 = vmatpush2.msra.mxu0 0.0
  %1984 = vmatprep.subr.mxu0 0.0
  %1985 = vmatpush2.msra.mxu0 0.0
  %1986 = vmatprep.subr.mxu0 0.0
  %1987 = vmatpush2.msra.mxu0 0.0
  %1988 = vmatprep.subr.mxu0 0.0
  %1989 = vmatpush2.msra.mxu0 0.0
  %1990 = vmatprep.mubr.f32.mxu0 0.0
  %1991 = vmatmul.mubr.f32.gmra.mxu0 %v1924
  %v1992 = vpop.f32.mrf.mxu0
  %v1993 = vadd.f32 0.0, %v1992
  %v1994 = vpop.f32.mrf.mxu0
  %1995 = vdwg.mxu0
  %v1996 = vadd.f32 %v1923, %v1993
  %v1997 = vxor.u32 %v1996, 2147483648
  %v1998 = vmul.f32 %v1997, 1.442695
  %v1999 = vpow.pop %v1998
  %v2000 = vadd.f32 %v1999, 1.0
  %v2001 = vrcp.pop %v2000
  %v2002 = vmul.f32 1.0, %v2001
  %v2003 = vtanh.pop %v1996
  %v2004 = vmul.f32 %v2002, %v1804
  %2006 = vrot.lane.b32.xlu0 %v2003, 96
  %v2007 = vpop.permute.xlu0 %2006
  %v2009 = vmul.f32 %v2002, %v2007
  %2011 = vrot.lane.b32.xlu0 %v2009, 16
  %v2012 = vpop.permute.xlu0 %2011
  %v2014 = vadd.f32 %v2004, %v2012
  %v2015 = vtanh.pop %v2014
  %2017 = vrot.lane.b32.xlu0 %v2015, 32
  %v2018 = vpop.permute.xlu0 %2017
  %v2020 = vmul.f32 %v2002, %v2018
  %2022 = vrot.lane.b32.xlu0 %v1921, 80
  %v2023 = vpop.permute.xlu0 %2022
  %s2025 = scalar_lea.vmem [#allocation4], 56
  %2026 = vst.msk [vmem:[%s2025] sm:$0xff] %vm358, %v2023
  %2028 = vrot.lane.b32.xlu0 %v2020, 80
  %v2029 = vpop.permute.xlu0 %2028
  %s2031 = scalar_lea.vmem [#allocation5], 56
  %2032 = vst.msk [vmem:[%s2031] sm:$0xff] %vm358, %v2029
  %v2033 = vld [vmem:[%s8] sm:$0xff]
  %v2034 = vld [vmem:[%s8 + $0x8] sm:$0xff]
  %v2035 = vld [vmem:[%s9] sm:$0x1]
  %v2036 = vld [vmem:[#allocation4] sm:$0xff]
  %v2037 = vld [vmem:[#allocation4 + $0x8] sm:$0xff]
  %v2038 = vld [vmem:[#allocation4 + $0x10] sm:$0xff]
  %v2039 = vld [vmem:[#allocation4 + $0x18] sm:$0xff]
  %v2040 = vld [vmem:[#allocation4 + $0x20] sm:$0xff]
  %v2041 = vld [vmem:[#allocation4 + $0x28] sm:$0xff]
  %v2042 = vld [vmem:[#allocation4 + $0x30] sm:$0xff]
  %v2043 = vld [vmem:[#allocation4 + $0x38] sm:$0xff]
  %v2045 = vlaneseq
  %v2046 = vshrl.u32 %v2045, 7
  %v2047 = vsub.s32 0, %v2046
  %v2048 = vrot.slane %v2035, %v2047
  %v2051 = vsel %vm358, %v2036, 0
  %v2054 = vsel %vm358, %v2037, 0
  %v2057 = vsel %vm358, %v2038, 0
  %v2060 = vsel %vm358, %v2039, 0
  %v2063 = vsel %vm358, %v2040, 0
  %v2066 = vsel %vm358, %v2041, 0
  %v2069 = vsel %vm358, %v2042, 0
  %v2072 = vsel %vm358, %v2043, 0
  %2074 = vmatprep.subr.mxu0 0.0
  %2075 = vmatpush1.msra.mxu0 0.0
  %2076 = vmatprep.subr.mxu0 0.0
  %2077 = vmatpush1.msra.mxu0 0.0
  %2078 = vmatprep.subr.mxu0 0.0
  %2079 = vmatpush1.msra.mxu0 0.0
  %2080 = vmatprep.subr.mxu0 0.0
  %2081 = vmatpush1.msra.mxu0 0.0
  %2082 = vmatprep.subr.mxu0 0.0
  %2083 = vmatpush1.msra.mxu0 0.0
  %2084 = vmatprep.subr.mxu0 0.0
  %2085 = vmatpush1.msra.mxu0 0.0
  %2086 = vmatprep.subr.mxu0 0.0
  %2087 = vmatpush1.msra.mxu0 0.0
  %2088 = vmatprep.subr.mxu0 0.0
  %2089 = vmatpush1.msra.mxu0 0.0
  %2090 = vmatprep.subr.mxu0 0.0
  %2091 = vmatpush1.msra.mxu0 0.0
  %2092 = vmatprep.subr.mxu0 0.0
  %2093 = vmatpush1.msra.mxu0 0.0
  %2094 = vmatprep.subr.mxu0 0.0
  %2095 = vmatpush1.msra.mxu0 0.0
  %2096 = vmatprep.subr.mxu0 0.0
  %2097 = vmatpush1.msra.mxu0 0.0
  %2098 = vmatprep.subr.mxu0 0.0
  %2099 = vmatpush1.msra.mxu0 0.0
  %2100 = vmatprep.subr.mxu0 0.0
  %2101 = vmatpush1.msra.mxu0 0.0
  %2102 = vmatprep.subr.mxu0 0.0
  %2103 = vmatpush1.msra.mxu0 %v2034
  %2104 = vmatprep.subr.mxu0 0.0
  %2105 = vmatpush1.msra.mxu0 %v2033
  %2106 = vmatprep.subr.mxu0 0.0
  %2107 = vmatpush2.msra.mxu0 0.0
  %2108 = vmatprep.subr.mxu0 0.0
  %2109 = vmatpush2.msra.mxu0 0.0
  %2110 = vmatprep.subr.mxu0 0.0
  %2111 = vmatpush2.msra.mxu0 0.0
  %2112 = vmatprep.subr.mxu0 0.0
  %2113 = vmatpush2.msra.mxu0 0.0
  %2114 = vmatprep.subr.mxu0 0.0
  %2115 = vmatpush2.msra.mxu0 0.0
  %2116 = vmatprep.subr.mxu0 0.0
  %2117 = vmatpush2.msra.mxu0 0.0
  %2118 = vmatprep.subr.mxu0 0.0
  %2119 = vmatpush2.msra.mxu0 0.0
  %2120 = vmatprep.subr.mxu0 0.0
  %2121 = vmatpush2.msra.mxu0 0.0
  %2122 = vmatprep.subr.mxu0 0.0
  %2123 = vmatpush2.msra.mxu0 0.0
  %2124 = vmatprep.subr.mxu0 0.0
  %2125 = vmatpush2.msra.mxu0 0.0
  %2126 = vmatprep.subr.mxu0 0.0
  %2127 = vmatpush2.msra.mxu0 0.0
  %2128 = vmatprep.subr.mxu0 0.0
  %2129 = vmatpush2.msra.mxu0 0.0
  %2130 = vmatprep.subr.mxu0 0.0
  %2131 = vmatpush2.msra.mxu0 0.0
  %2132 = vmatprep.subr.mxu0 0.0
  %2133 = vmatpush2.msra.mxu0 0.0
  %2134 = vmatprep.subr.mxu0 0.0
  %2135 = vmatpush2.msra.mxu0 0.0
  %2136 = vmatprep.subr.mxu0 0.0
  %2137 = vmatpush2.msra.mxu0 0.0
  %2138 = vmatprep.mubr.f32.mxu0 0.0
  %2139 = vmatmul.mubr.f32.gmra.mxu0 %v2051
  %v2140 = vpop.f32.mrf.mxu0
  %v2141 = vadd.f32 %v2048, %v2140
  %v2142 = vpop.f32.mrf.mxu0
  %2143 = vmatprep.mubr.f32.mxu0 0.0
  %2144 = vmatmul.mubr.f32.gmra.mxu0 %v2054
  %v2145 = vpop.f32.mrf.mxu0
  %v2146 = vadd.f32 %v2048, %v2145
  %v2147 = vpop.f32.mrf.mxu0
  %2148 = vmatprep.mubr.f32.mxu0 0.0
  %2149 = vmatmul.mubr.f32.gmra.mxu0 %v2057
  %v2150 = vpop.f32.mrf.mxu0
  %v2151 = vadd.f32 %v2048, %v2150
  %v2152 = vpop.f32.mrf.mxu0
  %2153 = vmatprep.mubr.f32.mxu0 0.0
  %2154 = vmatmul.mubr.f32.gmra.mxu0 %v2060
  %v2155 = vpop.f32.mrf.mxu0
  %v2156 = vadd.f32 %v2048, %v2155
  %v2157 = vpop.f32.mrf.mxu0
  %2158 = vmatprep.mubr.f32.mxu0 0.0
  %2159 = vmatmul.mubr.f32.gmra.mxu0 %v2063
  %v2160 = vpop.f32.mrf.mxu0
  %v2161 = vadd.f32 %v2048, %v2160
  %v2162 = vpop.f32.mrf.mxu0
  %2163 = vmatprep.mubr.f32.mxu0 0.0
  %2164 = vmatmul.mubr.f32.gmra.mxu0 %v2066
  %v2165 = vpop.f32.mrf.mxu0
  %v2166 = vadd.f32 %v2048, %v2165
  %v2167 = vpop.f32.mrf.mxu0
  %2168 = vmatprep.mubr.f32.mxu0 0.0
  %2169 = vmatmul.mubr.f32.gmra.mxu0 %v2069
  %v2170 = vpop.f32.mrf.mxu0
  %v2171 = vadd.f32 %v2048, %v2170
  %v2172 = vpop.f32.mrf.mxu0
  %2173 = vmatprep.mubr.f32.mxu0 0.0
  %2174 = vmatmul.mubr.f32.gmra.mxu0 %v2072
  %v2175 = vpop.f32.mrf.mxu0
  %v2176 = vadd.f32 %v2048, %v2175
  %v2177 = vpop.f32.mrf.mxu0
  %2178 = vdwg.mxu0
  %2179 = vst.msk [vmem:[%s10] sm:$0xff] %vm186, %v2141
  %2180 = vst.msk [vmem:[%s10 + $0x8] sm:$0xff] %vm186, %v2146
  %2181 = vst.msk [vmem:[%s10 + $0x10] sm:$0xff] %vm186, %v2151
  %2182 = vst.msk [vmem:[%s10 + $0x18] sm:$0xff] %vm186, %v2156
  %2183 = vst.msk [vmem:[%s10 + $0x20] sm:$0xff] %vm186, %v2161
  %2184 = vst.msk [vmem:[%s10 + $0x28] sm:$0xff] %vm186, %v2166
  %2185 = vst.msk [vmem:[%s10 + $0x30] sm:$0xff] %vm186, %v2171
  %2186 = vst.msk [vmem:[%s10 + $0x38] sm:$0xff] %vm186, %v2176
  %v2187 = vld [vmem:[#allocation5] sm:$0xff]
  %v2188 = vld [vmem:[#allocation5 + $0x8] sm:$0xff]
  %v2189 = vld [vmem:[#allocation5 + $0x10] sm:$0xff]
  %v2190 = vld [vmem:[#allocation5 + $0x18] sm:$0xff]
  %v2191 = vld [vmem:[#allocation5 + $0x20] sm:$0xff]
  %v2192 = vld [vmem:[#allocation5 + $0x28] sm:$0xff]
  %v2193 = vld [vmem:[#allocation5 + $0x30] sm:$0xff]
  %v2194 = vld [vmem:[#allocation5 + $0x38] sm:$0xff]
  %v2196 = vsel %vm358, %v2187, 0
  %v2199 = vsel %vm358, %v2188, 0
  %v2202 = vsel %vm358, %v2189, 0
  %v2205 = vsel %vm358, %v2190, 0
  %v2208 = vsel %vm358, %v2191, 0
  %v2211 = vsel %vm358, %v2192, 0
  %v2214 = vsel %vm358, %v2193, 0
  %v2217 = vsel %vm358, %v2194, 0
  %2219 = vmatprep.subr.mxu0 0.0
  %2220 = vmatpush1.msra.mxu0 0.0
  %2221 = vmatprep.subr.mxu0 0.0
  %2222 = vmatpush1.msra.mxu0 0.0
  %2223 = vmatprep.subr.mxu0 0.0
  %2224 = vmatpush1.msra.mxu0 0.0
  %2225 = vmatprep.subr.mxu0 0.0
  %2226 = vmatpush1.msra.mxu0 0.0
  %2227 = vmatprep.subr.mxu0 0.0
  %2228 = vmatpush1.msra.mxu0 0.0
  %2229 = vmatprep.subr.mxu0 0.0
  %2230 = vmatpush1.msra.mxu0 0.0
  %2231 = vmatprep.subr.mxu0 0.0
  %2232 = vmatpush1.msra.mxu0 0.0
  %2233 = vmatprep.subr.mxu0 0.0
  %2234 = vmatpush1.msra.mxu0 0.0
  %2235 = vmatprep.subr.mxu0 0.0
  %2236 = vmatpush1.msra.mxu0 0.0
  %2237 = vmatprep.subr.mxu0 0.0
  %2238 = vmatpush1.msra.mxu0 0.0
  %2239 = vmatprep.subr.mxu0 0.0
  %2240 = vmatpush1.msra.mxu0 0.0
  %2241 = vmatprep.subr.mxu0 0.0
  %2242 = vmatpush1.msra.mxu0 0.0
  %2243 = vmatprep.subr.mxu0 0.0
  %2244 = vmatpush1.msra.mxu0 0.0
  %2245 = vmatprep.subr.mxu0 0.0
  %2246 = vmatpush1.msra.mxu0 0.0
  %2247 = vmatprep.subr.mxu0 0.0
  %2248 = vmatpush1.msra.mxu0 %v2034
  %2249 = vmatprep.subr.mxu0 0.0
  %2250 = vmatpush1.msra.mxu0 %v2033
  %2251 = vmatprep.subr.mxu0 0.0
  %2252 = vmatpush2.msra.mxu0 0.0
  %2253 = vmatprep.subr.mxu0 0.0
  %2254 = vmatpush2.msra.mxu0 0.0
  %2255 = vmatprep.subr.mxu0 0.0
  %2256 = vmatpush2.msra.mxu0 0.0
  %2257 = vmatprep.subr.mxu0 0.0
  %2258 = vmatpush2.msra.mxu0 0.0
  %2259 = vmatprep.subr.mxu0 0.0
  %2260 = vmatpush2.msra.mxu0 0.0
  %2261 = vmatprep.subr.mxu0 0.0
  %2262 = vmatpush2.msra.mxu0 0.0
  %2263 = vmatprep.subr.mxu0 0.0
  %2264 = vmatpush2.msra.mxu0 0.0
  %2265 = vmatprep.subr.mxu0 0.0
  %2266 = vmatpush2.msra.mxu0 0.0
  %2267 = vmatprep.subr.mxu0 0.0
  %2268 = vmatpush2.msra.mxu0 0.0
  %2269 = vmatprep.subr.mxu0 0.0
  %2270 = vmatpush2.msra.mxu0 0.0
  %2271 = vmatprep.subr.mxu0 0.0
  %2272 = vmatpush2.msra.mxu0 0.0
  %2273 = vmatprep.subr.mxu0 0.0
  %2274 = vmatpush2.msra.mxu0 0.0
  %2275 = vmatprep.subr.mxu0 0.0
  %2276 = vmatpush2.msra.mxu0 0.0
  %2277 = vmatprep.subr.mxu0 0.0
  %2278 = vmatpush2.msra.mxu0 0.0
  %2279 = vmatprep.subr.mxu0 0.0
  %2280 = vmatpush2.msra.mxu0 0.0
  %2281 = vmatprep.subr.mxu0 0.0
  %2282 = vmatpush2.msra.mxu0 0.0
  %2283 = vmatprep.mubr.f32.mxu0 0.0
  %2284 = vmatmul.mubr.f32.gmra.mxu0 %v2196
  %v2285 = vpop.f32.mrf.mxu0
  %v2286 = vadd.f32 %v2048, %v2285
  %v2287 = vpop.f32.mrf.mxu0
  %2288 = vmatprep.mubr.f32.mxu0 0.0
  %2289 = vmatmul.mubr.f32.gmra.mxu0 %v2199
  %v2290 = vpop.f32.mrf.mxu0
  %v2291 = vadd.f32 %v2048, %v2290
  %v2292 = vpop.f32.mrf.mxu0
  %2293 = vmatprep.mubr.f32.mxu0 0.0
  %2294 = vmatmul.mubr.f32.gmra.mxu0 %v2202
  %v2295 = vpop.f32.mrf.mxu0
  %v2296 = vadd.f32 %v2048, %v2295
  %v2297 = vpop.f32.mrf.mxu0
  %2298 = vmatprep.mubr.f32.mxu0 0.0
  %2299 = vmatmul.mubr.f32.gmra.mxu0 %v2205
  %v2300 = vpop.f32.mrf.mxu0
  %v2301 = vadd.f32 %v2048, %v2300
  %v2302 = vpop.f32.mrf.mxu0
  %2303 = vmatprep.mubr.f32.mxu0 0.0
  %2304 = vmatmul.mubr.f32.gmra.mxu0 %v2208
  %v2305 = vpop.f32.mrf.mxu0
  %v2306 = vadd.f32 %v2048, %v2305
  %v2307 = vpop.f32.mrf.mxu0
  %2308 = vmatprep.mubr.f32.mxu0 0.0
  %2309 = vmatmul.mubr.f32.gmra.mxu0 %v2211
  %v2310 = vpop.f32.mrf.mxu0
  %v2311 = vadd.f32 %v2048, %v2310
  %v2312 = vpop.f32.mrf.mxu0
  %2313 = vmatprep.mubr.f32.mxu0 0.0
  %2314 = vmatmul.mubr.f32.gmra.mxu0 %v2214
  %v2315 = vpop.f32.mrf.mxu0
  %v2316 = vadd.f32 %v2048, %v2315
  %v2317 = vpop.f32.mrf.mxu0
  %2318 = vmatprep.mubr.f32.mxu0 0.0
  %2319 = vmatmul.mubr.f32.gmra.mxu0 %v2217
  %v2320 = vpop.f32.mrf.mxu0
  %v2321 = vadd.f32 %v2048, %v2320
  %v2322 = vpop.f32.mrf.mxu0
  %2323 = vdwg.mxu0
  %2332 = vrot.lane.b32.xlu0 %v2286, 64
  %v2333 = vpop.permute.xlu0 %2332
  %2334 = vrot.lane.b32.xlu0 %v2291, 64
  %v2335 = vpop.permute.xlu0 %2334
  %2336 = vrot.lane.b32.xlu0 %v2296, 64
  %v2337 = vpop.permute.xlu0 %2336
  %2338 = vrot.lane.b32.xlu0 %v2301, 64
  %v2339 = vpop.permute.xlu0 %2338
  %2340 = vrot.lane.b32.xlu0 %v2306, 64
  %v2341 = vpop.permute.xlu0 %2340
  %2342 = vrot.lane.b32.xlu0 %v2311, 64
  %v2343 = vpop.permute.xlu0 %2342
  %2344 = vrot.lane.b32.xlu0 %v2316, 64
  %v2345 = vpop.permute.xlu0 %2344
  %2346 = vrot.lane.b32.xlu0 %v2321, 64
  %v2347 = vpop.permute.xlu0 %2346
  %vm2356 = vcmask 1048064
  %2357 = vst.msk [vmem:[%s10] sm:$0xff] %vm2356, %v2333
  %2358 = vst.msk [vmem:[%s10 + $0x8] sm:$0xff] %vm2356, %v2335
  %2359 = vst.msk [vmem:[%s10 + $0x10] sm:$0xff] %vm2356, %v2337
  %2360 = vst.msk [vmem:[%s10 + $0x18] sm:$0xff] %vm2356, %v2339
  %2361 = vst.msk [vmem:[%s10 + $0x20] sm:$0xff] %vm2356, %v2341
  %2362 = vst.msk [vmem:[%s10 + $0x28] sm:$0xff] %vm2356, %v2343
  %2363 = vst.msk [vmem:[%s10 + $0x30] sm:$0xff] %vm2356, %v2345
  %2364 = vst.msk [vmem:[%s10 + $0x38] sm:$0xff] %vm2356, %v2347
  // Predicated region
  $region42: #{duo_decoder_forward.1} parent=0 // pred_check
    _
  $region43: #{duo_decoder_forward.1} parent=0 // pred_check_branch
    %2366 = sbr.rel (0) target = $region45
  $region44: #{duo_decoder_forward.1} parent=0 // pred_region
    _
  $region45: #{duo_decoder_forward.1} parent=0 // pred_fallthru
    _
  // Predicated region
  $region46: #{duo_decoder_forward.1} parent=0 // pred_check
    _
  $region47: #{duo_decoder_forward.1} parent=0 // pred_check_branch
    %2368 = sbr.rel (0) target = $region49
  $region48: #{duo_decoder_forward.1} parent=0 // pred_region
    _
  $region49: #{duo_decoder_forward.1} parent=0 // pred_fallthru
    _

</llo_original>
